<compile_context>
chip_gen: v7x
topology: tpu7x:2x2x1
jax: 0.10.0
libtpu: 0.0.40
codegen_flags: <defaults>
</compile_context>

<pallas_src>
import functools
import math

import jax
import jax.numpy as jnp
from jax import lax
from jax.experimental import pallas as pl
from jax.experimental.pallas import tpu as pltpu

KSIZE = 15
PAD = 7


def _round_up(x, m):
    return (x + m - 1) // m * m


def _conv_from_taps(w_ref, tap, c, l_out, im_ref):
    """One 1-D conv expressed over its 15 taps.

    w_ref : (c_out, KSIZE*c) weight ref, column index = k*c + channel.
    tap(k): the (c, l_out) slice of the padded input for tap k (a contiguous
            lane-slice read of a VMEM scratch).
    im_ref: optional (KSIZE*c, l_out) scratch.  If given, the taps are copied
            into it (contiguous reads, row-aligned stores) and the conv is a
            single deep matmul -- used when c is below the MXU tile depth.
            Otherwise 15 accumulating matmuls are used (no 15x duplication).
    Returns the f32 (c_out, l_out) conv result (bias not added).
    """
    if im_ref is not None:
        for k in range(KSIZE):
            im_ref[k * c:(k + 1) * c, :] = tap(k)
        return jnp.dot(w_ref[...], im_ref[...],
                       preferred_element_type=jnp.float32)
    acc = jnp.dot(w_ref[:, 0:c], tap(0), preferred_element_type=jnp.float32)
    for k in range(1, KSIZE):
        acc = acc + jnp.dot(w_ref[:, k * c:(k + 1) * c], tap(k),
                            preferred_element_type=jnp.float32)
    return acc


def _convresnet_kernel(*refs, subsample, has_wup, use_im2col1, use_im2col2,
                       conv_dtype):
    # ---- unpack positional refs (inputs..., output, scratch...) -------------
    i = 0
    if subsample:
        xe_ref, xo_ref = refs[0], refs[1]          # (1, Cin, L/2) each
        i = 2
    else:
        x_ref = refs[0]                            # (1, Cin, L)
        i = 1
    par_ref, w1_ref, w2_ref = refs[i:i + 3]        # (Cmax,4),(Co,K*Ci),(Co,K*Co)
    i += 3
    wup_ref = None
    if has_wup:
        wup_ref = refs[i]                          # (Co, Ci)
        i += 1
    out_ref = refs[i]                              # (1, Co, L_out)
    i += 1
    scratch = list(refs[i:])
    if subsample:
        xpe_ref = scratch.pop(0)                   # (Ci, L_out + 7)
        xpo_ref = scratch.pop(0)                   # (Ci, L_out + 7)
    else:
        xpad_ref = scratch.pop(0)                  # (Ci, L_out + 14)
    h2pad_ref = scratch.pop(0)                     # (Co, L_out + 14)
    im1_ref = scratch.pop(0) if use_im2col1 else None
    im2_ref = scratch.pop(0) if use_im2col2 else None

    c_out, l_out = out_ref.shape[1], out_ref.shape[2]
    dt = conv_dtype

    # ---- BatchNorm1 (eval, folded) + ReLU; Dropout == identity in eval ------
    # The activated conv1 input is written ONCE into padded VMEM scratch with
    # only the halo lanes zeroed; all taps then read contiguous lane slices.
    if subsample:
        c_in = xe_ref.shape[1]
        scale1 = par_ref[0:c_in, 0:1]
        shift1 = par_ref[0:c_in, 1:2]
        he = jnp.maximum(xe_ref[0] * scale1 + shift1, 0.0)   # BN+ReLU(x[..,0::2])
        ho = jnp.maximum(xo_ref[0] * scale1 + shift1, 0.0)   # BN+ReLU(x[..,1::2])
        # conv1 has stride 2, so the zero-padded input xpad (pad=7) is only
        # read at even / odd positions:
        #   xpad[:, 2i]   = ho[:, i-4]   (zero for i < 4 or i >= L_out+4)
        #   xpad[:, 2i+1] = he[:, i-3]   (zero for i < 3 or i >= L_out+3)
        xpe_ref[:, 0:4] = jnp.zeros((c_in, 4), dt)
        xpe_ref[:, 4:4 + l_out] = ho.astype(dt)
        xpe_ref[:, 4 + l_out:7 + l_out] = jnp.zeros((c_in, 3), dt)
        xpo_ref[:, 0:3] = jnp.zeros((c_in, 3), dt)
        xpo_ref[:, 3:3 + l_out] = he.astype(dt)
        xpo_ref[:, 3 + l_out:7 + l_out] = jnp.zeros((c_in, 4), dt)

        def tap1(k):   # tap k reads xpad[:, 2j+k] == phase[k%2][:, k//2 + j]
            src = xpe_ref if k % 2 == 0 else xpo_ref
            t = k // 2
            return src[:, t:t + l_out]
    else:
        c_in = x_ref.shape[1]
        scale1 = par_ref[0:c_in, 0:1]
        shift1 = par_ref[0:c_in, 1:2]
        h = jnp.maximum(x_ref[0] * scale1 + shift1, 0.0)
        xpad_ref[:, 0:PAD] = jnp.zeros((c_in, PAD), dt)
        xpad_ref[:, PAD:PAD + l_out] = h.astype(dt)
        xpad_ref[:, PAD + l_out:2 * PAD + l_out] = jnp.zeros((c_in, PAD), dt)

        def tap1(k):
            return xpad_ref[:, k:k + l_out]

    # ---- Conv1 (BN2 pre-folded into w1/b1) + ReLU ----------------------------
    h2 = _conv_from_taps(w1_ref, tap1, c_in, l_out, im1_ref)
    h2 = jnp.maximum(h2 + par_ref[0:c_out, 2:3], 0.0)        # (Co, L_out) f32

    # Conv2's padded input: written once (halos zeroed), h2 not kept in vregs.
    h2pad_ref[:, 0:PAD] = jnp.zeros((c_out, PAD), dt)
    h2pad_ref[:, PAD:PAD + l_out] = h2.astype(dt)
    h2pad_ref[:, PAD + l_out:2 * PAD + l_out] = jnp.zeros((c_out, PAD), dt)

    def tap2(k):
        return h2pad_ref[:, k:k + l_out]

    # ---- Conv2 (stride 1) ----------------------------------------------------
    y = _conv_from_taps(w2_ref, tap2, c_out, l_out, im2_ref)
    y = y + par_ref[0:c_out, 3:4]                  # conv2 bias (+ folded 1x1 bias)

    # ---- Residual: loaded late from the still-VMEM-resident input block -----
    if subsample:
        res = jnp.maximum(xe_ref[0], xo_ref[0])    # factor-2 adaptive max pool
    else:
        res = x_ref[0]
    if has_wup:                                    # 1x1-conv channel upsample
        res = jnp.dot(wup_ref[...], res, preferred_element_type=jnp.float32)
    out_ref[0] = (y + res).astype(out_ref.dtype)


def _tile_padded_bytes(shape, dtype):
    """Bytes of `shape` once padded to the TPU (sublane, lane) tile."""
    itemsize = jnp.dtype(dtype).itemsize
    dims = list(shape)
    if dims:
        dims[-1] = _round_up(dims[-1], 128)
    if len(dims) >= 2:
        dims[-2] = _round_up(dims[-2], 8 * max(1, 4 // itemsize))
    return int(math.prod(dims)) * itemsize


def convresnet_block(x, params, *, subsample, eps=1e-5,
                     conv_dtype=jnp.float32, im2col_max_channels=128):
    """Eval-mode forward of ConvResNetBlock as one Pallas TPU kernel.

    x          : (N, C_in, L) float32, PyTorch NCL convention (kept end-to-end).
    conv_dtype : dtype of the conv weights / padded-activation scratch.
                 jnp.bfloat16 gives native-MXU throughput and halves scratch
                 residency on v6e/v7x (accumulation stays f32) but does not
                 meet the 1e-4 reference tolerance; f32 is the default.
    im2col_max_channels : below this (padded) channel count the conv runs as a
                 single deep im2col matmul (the shallow per-tap contraction
                 would starve the MXU); at/above it, 15 accumulating per-tap
                 matmuls avoid the 15x slab duplication entirely.
    """
    n, c_in, l_in = x.shape
    c_out = params["w1"].shape[0]
    stride = 2 if subsample else 1
    l_out = (l_in + 2 * PAD - KSIZE) // stride + 1
    has_wup = c_in != c_out
    if subsample:
        assert l_in % 2 == 0, "subsample path assumes an even input length"

    # Channel counts padded to sublane multiples -> aligned in-kernel stores.
    c_in_p, c_out_p = _round_up(c_in, 8), _round_up(c_out, 8)
    c_max_p = max(c_in_p, c_out_p)
    use_im2col1 = c_in_p < im2col_max_channels
    use_im2col2 = c_out_p < im2col_max_channels

    # ---- fold BatchNorm1/2 (eval, running stats) -----------------------------
    scale1 = params["gamma1"] / jnp.sqrt(params["var1"] + eps)
    shift1 = params["beta1"] - params["mean1"] * scale1
    scale2 = params["gamma2"] / jnp.sqrt(params["var2"] + eps)
    shift2 = params["beta2"] - params["mean2"] * scale2

    # BN2(conv1(h)) == conv1 with w1*scale2 (per out-channel), b1*scale2+shift2.
    w1f = params["w1"] * scale2[:, None, None]                 # (Co, Ci, K)
    b1f = params["b1"] * scale2 + shift2
    b2f = params["b2"]
    if has_wup:
        b2f = b2f + params["bup"]                              # fold 1x1 bias

    # Zero-pad channels; reshape weights tap-major: column index = k*C + c.
    w1p = jnp.pad(w1f, ((0, c_out_p - c_out), (0, c_in_p - c_in), (0, 0)))
    w2p = jnp.pad(params["w2"],
                  ((0, c_out_p - c_out), (0, c_out_p - c_out), (0, 0)))
    w1r = jnp.transpose(w1p, (0, 2, 1)).reshape(c_out_p, KSIZE * c_in_p)
    w2r = jnp.transpose(w2p, (0, 2, 1)).reshape(c_out_p, KSIZE * c_out_p)
    w1r = w1r.astype(conv_dtype)
    w2r = w2r.astype(conv_dtype)

    # Per-channel params packed into a single (Cmax, 4) f32 block:
    # col 0 = BN1 scale, 1 = BN1 shift, 2 = conv1 bias (BN2 folded), 3 = conv2 bias.
    par = jnp.zeros((c_max_p, 4), jnp.float32)
    par = par.at[:c_in, 0].set(scale1)
    par = par.at[:c_in, 1].set(shift1)
    par = par.at[:c_out, 2].set(b1f)
    par = par.at[:c_out, 3].set(b2f)

    xp = x if c_in_p == c_in else jnp.pad(
        x, ((0, 0), (0, c_in_p - c_in), (0, 0)))

    kernel = functools.partial(
        _convresnet_kernel, subsample=subsample, has_wup=has_wup,
        use_im2col1=use_im2col1, use_im2col2=use_im2col2, conv_dtype=conv_dtype)

    block_defs = []                                # (block_shape, dtype)
    if subsample:
        # De-interleave once in the wrapper so every conv1 tap is contiguous.
        x_in = [xp[:, :, 0::2], xp[:, :, 1::2]]                # (N, Ci, L/2) x2
        x_specs = [pl.BlockSpec((1, c_in_p, l_out), lambda b: (b, 0, 0)),
                   pl.BlockSpec((1, c_in_p, l_out), lambda b: (b, 0, 0))]
        block_defs += [((1, c_in_p, l_out), x.dtype)] * 2
    else:
        x_in = [xp]
        x_specs = [pl.BlockSpec((1, c_in_p, l_in), lambda b: (b, 0, 0))]
        block_defs += [((1, c_in_p, l_in), x.dtype)]

    param_in = [par, w1r, w2r]
    param_specs = [pl.BlockSpec((c_max_p, 4), lambda b: (0, 0)),
                   pl.BlockSpec((c_out_p, KSIZE * c_in_p), lambda b: (0, 0)),
                   pl.BlockSpec((c_out_p, KSIZE * c_out_p), lambda b: (0, 0))]
    block_defs += [((c_max_p, 4), jnp.float32),
                   ((c_out_p, KSIZE * c_in_p), conv_dtype),
                   ((c_out_p, KSIZE * c_out_p), conv_dtype)]
    if has_wup:
        wup = jnp.pad(params["wup"][:, :, 0],
                      ((0, c_out_p - c_out), (0, c_in_p - c_in)))
        param_in.append(wup)
        param_specs.append(pl.BlockSpec((c_out_p, c_in_p), lambda b: (0, 0)))
        block_defs += [((c_out_p, c_in_p), jnp.float32)]
    block_defs += [((1, c_out_p, l_out), x.dtype)]             # output block

    # Padded-activation scratch (+ small-C im2col slabs).
    scratch_defs = []
    if subsample:
        scratch_defs += [((c_in_p, l_out + PAD), conv_dtype),
                         ((c_in_p, l_out + PAD), conv_dtype)]
    else:
        scratch_defs += [((c_in_p, l_out + 2 * PAD), conv_dtype)]
    scratch_defs += [((c_out_p, l_out + 2 * PAD), conv_dtype)]
    if use_im2col1:
        scratch_defs += [((KSIZE * c_in_p, l_out), conv_dtype)]
    if use_im2col2:
        scratch_defs += [((KSIZE * c_out_p, l_out), conv_dtype)]
    scratch_shapes = [pltpu.VMEM(s, d) for s, d in scratch_defs]

    # vmem_limit_bytes from the actual footprint: double-buffered blocks + scratch.
    need = (2 * sum(_tile_padded_bytes(s, d) for s, d in block_defs)
            + sum(_tile_padded_bytes(s, d) for s, d in scratch_defs))
    vmem_limit = min(max(int(need * 1.5) + (2 << 20), 16 << 20), 128 << 20)

    out = pl.pallas_call(
        kernel,
        out_shape=jax.ShapeDtypeStruct((n, c_out_p, l_out), x.dtype),
        grid_spec=pltpu.PrefetchScalarGridSpec(
            num_scalar_prefetch=0,
            grid=(n,),
            in_specs=x_specs + param_specs,
            out_specs=pl.BlockSpec((1, c_out_p, l_out), lambda b: (b, 0, 0)),
            scratch_shapes=scratch_shapes),
        compiler_params=pltpu.CompilerParams(
            # batch elements are independent -> shard across TensorCores (v7x)
            dimension_semantics=("parallel",),
            vmem_limit_bytes=vmem_limit),
    )(*x_in, *param_in)

    return out[:, :c_out, :] if c_out_p != c_out else out      # (N, Cout, L_out)


def reference_block(x, params, *, subsample, eps=1e-5):
    """Pure-JAX reference (eval mode), NCL layout, mirrors the PyTorch forward."""
    stride = 2 if subsample else 1
    c_in = x.shape[1]
    c_out = params["w1"].shape[0]

    def bn(h, g, b, m, v):
        return ((h - m[None, :, None]) / jnp.sqrt(v[None, :, None] + eps)
                * g[None, :, None] + b[None, :, None])

    def conv1d(h, w, b, s, p):
        y = lax.conv_general_dilated(h, w, (s,), [(p, p)],
                                     dimension_numbers=("NCH", "OIH", "NCH"))
        return y + b[None, :, None]

    res = x
    h = jnp.maximum(bn(x, params["gamma1"], params["beta1"],
                       params["mean1"], params["var1"]), 0.0)
    h = conv1d(h, params["w1"], params["b1"], stride, PAD)
    h = jnp.maximum(bn(h, params["gamma2"], params["beta2"],
                       params["mean2"], params["var2"]), 0.0)
    h = conv1d(h, params["w2"], params["b2"], 1, PAD)
    if h.shape[-1] != res.shape[-1]:
        f = res.shape[-1] // h.shape[-1]
        res = res.reshape(res.shape[0], res.shape[1], h.shape[-1], f).max(-1)
    if c_in != c_out:
        res = conv1d(res, params["wup"], params["bup"], 1, 0)
    return h + res


def init_params(key, c_in, c_out, dtype=jnp.float32):
    ks = jax.random.split(key, 14)
    p = {
        "gamma1": jax.random.uniform(ks[0], (c_in,), dtype, 0.5, 1.5),
        "beta1": jax.random.normal(ks[1], (c_in,), dtype) * 0.1,
        "mean1": jax.random.normal(ks[2], (c_in,), dtype) * 0.1,
        "var1": jax.random.uniform(ks[3], (c_in,), dtype, 0.5, 1.5),
        "w1": jax.random.normal(ks[4], (c_out, c_in, KSIZE), dtype) * 0.1,
        "b1": jax.random.normal(ks[5], (c_out,), dtype) * 0.1,
        "gamma2": jax.random.uniform(ks[6], (c_out,), dtype, 0.5, 1.5),
        "beta2": jax.random.normal(ks[7], (c_out,), dtype) * 0.1,
        "mean2": jax.random.normal(ks[8], (c_out,), dtype) * 0.1,
        "var2": jax.random.uniform(ks[9], (c_out,), dtype, 0.5, 1.5),
        "w2": jax.random.normal(ks[10], (c_out, c_out, KSIZE), dtype) * 0.1,
        "b2": jax.random.normal(ks[11], (c_out,), dtype) * 0.1,
    }
    if c_in != c_out:
        p["wup"] = jax.random.normal(ks[12], (c_out, c_in, 1), dtype) * 0.1
        p["bup"] = jax.random.normal(ks[13], (c_out,), dtype) * 0.1
    return p


if __name__ == "__main__":
    # Full-f32 matmul precision so the f32 kernel configs and the XLA reference
    # agree to 1e-4 on real MXUs.  (Production bf16 use should not force this.)
    jax.config.update("jax_default_matmul_precision", "highest")

    key = jax.random.PRNGKey(0)
    kx1, kp1, kx2, kp2, kx3, kp3, kx4, kp4 = jax.random.split(key, 8)

    def check(name, x, p, *, subsample, atol, **kw):
        out = jax.block_until_ready(
            convresnet_block(x, p, subsample=subsample, **kw))
        ref = reference_block(x, p, subsample=subsample)
        assert out.shape == ref.shape, (name, out.shape, ref.shape)
        o32 = out.astype(jnp.float32)
        err = float(jnp.max(jnp.abs(o32 - ref)))
        assert jnp.allclose(o32, ref, atol=atol, rtol=atol), (name, err)

    # 1) subsample + channel upsampling, small C -> deep im2col-matmul path.
    x1 = jax.random.normal(kx1, (2, 8, 32), jnp.float32)
    p1 = init_params(kp1, 8, 16)
    check("subsample+wup/im2col", x1, p1, subsample=True, atol=1e-4)

    # 2) no subsample, identity residual, forced per-tap accumulating-matmul path.
    x2 = jax.random.normal(kx2, (2, 16, 64), jnp.float32)
    p2 = init_params(kp2, 16, 16)
    check("identity/tap-accum", x2, p2, subsample=False, atol=1e-4,
          im2col_max_channels=0)

    # 3) channel counts not a multiple of 8 -> exercises the zero-padding path.
    x3 = jax.random.normal(kx3, (2, 6, 32), jnp.float32)
    p3 = init_params(kp3, 6, 12)
    check("subsample+chan-pad", x3, p3, subsample=True, atol=1e-4)

    # 4) bf16 MXU inputs with f32 accumulation (v6e/v7x fast path), looser tol.
    x4 = jax.random.normal(kx4, (2, 16, 64), jnp.float32)
    p4 = init_params(kp4, 16, 16)
    check("subsample/bf16", x4, p4, subsample=True, atol=5e-2,
          conv_dtype=jnp.bfloat16)

    print("KERNEL_OK")
</pallas_src>

<mosaic_0001>
module attributes {stable_mosaic.version = 11 : i64} {
  func.func @_convresnet_kernel(%arg0: i32, %arg1: memref<1x8x16xf32, #tpu.memory_space<vmem>>, %arg2: memref<1x8x16xf32, #tpu.memory_space<vmem>>, %arg3: memref<16x4xf32, #tpu.memory_space<vmem>>, %arg4: memref<16x120xf32, #tpu.memory_space<vmem>>, %arg5: memref<16x240xf32, #tpu.memory_space<vmem>>, %arg6: memref<16x8xf32, #tpu.memory_space<vmem>>, %arg7: memref<1x16x16xf32, #tpu.memory_space<vmem>>, %arg8: memref<8x23xf32, #tpu.memory_space<vmem>>, %arg9: memref<8x23xf32, #tpu.memory_space<vmem>>, %arg10: memref<16x30xf32, #tpu.memory_space<vmem>>, %arg11: memref<120x16xf32, #tpu.memory_space<vmem>>, %arg12: memref<240x16xf32, #tpu.memory_space<vmem>>) attributes {dimension_semantics = [#tpu.dimension_semantics<parallel>], iteration_bounds = array<i64: 2>, scalar_prefetch = 0 : i64, scratch_operands = 5 : i64, tpu.core_type = #tpu.core_type<tc>, window_params = [{transform_indices = @transform_0, window_bounds = array<i64: 1, 8, 16>}, {transform_indices = @transform_1, window_bounds = array<i64: 1, 8, 16>}, {pipeline_mode = #tpu.pipeline_mode<synchronous>, transform_indices = @transform_2, window_bounds = array<i64: 16, 4>}, {pipeline_mode = #tpu.pipeline_mode<synchronous>, transform_indices = @transform_3, window_bounds = array<i64: 16, 120>}, {pipeline_mode = #tpu.pipeline_mode<synchronous>, transform_indices = @transform_4, window_bounds = array<i64: 16, 240>}, {pipeline_mode = #tpu.pipeline_mode<synchronous>, transform_indices = @transform_5, window_bounds = array<i64: 16, 8>}, {transform_indices = @transform_6, window_bounds = array<i64: 1, 16, 16>}]} {
    %c0 = arith.constant 0 : index
    %c0_0 = arith.constant 0 : index
    %0 = vector.load %arg3[%c0, %c0_0] : memref<16x4xf32, #tpu.memory_space<vmem>>, vector<8x1xf32>
    %c0_1 = arith.constant 0 : index
    %c1 = arith.constant 1 : index
    %1 = vector.load %arg3[%c0_1, %c1] : memref<16x4xf32, #tpu.memory_space<vmem>>, vector<8x1xf32>
    %c0_2 = arith.constant 0 : index
    %c0_3 = arith.constant 0 : index
    %c0_4 = arith.constant 0 : index
    %2 = vector.load %arg1[%c0_2, %c0_3, %c0_4] : memref<1x8x16xf32, #tpu.memory_space<vmem>>, vector<1x8x16xf32>
    %3 = vector.shape_cast %2 : vector<1x8x16xf32> to vector<8x16xf32>
    %4 = vector.broadcast %0 : vector<8x1xf32> to vector<8x16xf32>
    %5 = arith.mulf %3, %4 : vector<8x16xf32>
    %6 = vector.broadcast %1 : vector<8x1xf32> to vector<8x16xf32>
    %7 = arith.addf %5, %6 : vector<8x16xf32>
    %cst = arith.constant 0.000000e+00 : f32
    %8 = vector.broadcast %cst : f32 to vector<8x16xf32>
    %9 = arith.maximumf %7, %8 : vector<8x16xf32>
    %c0_5 = arith.constant 0 : index
    %c0_6 = arith.constant 0 : index
    %c0_7 = arith.constant 0 : index
    %10 = vector.load %arg2[%c0_5, %c0_6, %c0_7] : memref<1x8x16xf32, #tpu.memory_space<vmem>>, vector<1x8x16xf32>
    %11 = vector.shape_cast %10 : vector<1x8x16xf32> to vector<8x16xf32>
    %12 = vector.broadcast %0 : vector<8x1xf32> to vector<8x16xf32>
    %13 = arith.mulf %11, %12 : vector<8x16xf32>
    %14 = vector.broadcast %1 : vector<8x1xf32> to vector<8x16xf32>
    %15 = arith.addf %13, %14 : vector<8x16xf32>
    %cst_8 = arith.constant 0.000000e+00 : f32
    %16 = vector.broadcast %cst_8 : f32 to vector<8x16xf32>
    %17 = arith.maximumf %15, %16 : vector<8x16xf32>
    %cst_9 = arith.constant 0.000000e+00 : f32
    %18 = vector.broadcast %cst_9 : f32 to vector<8x4xf32>
    %c0_10 = arith.constant 0 : index
    %c0_11 = arith.constant 0 : index
    %19 = vector.load %arg8[%c0_10, %c0_11] : memref<8x23xf32, #tpu.memory_space<vmem>>, vector<8x4xf32>
    tpu.vector_store %arg8[%c0_10, %c0_11], %18 {strides = array<i32>} : memref<8x23xf32, #tpu.memory_space<vmem>>, vector<8x4xf32>,
    %c0_12 = arith.constant 0 : index
    %c4 = arith.constant 4 : index
    %20 = vector.load %arg8[%c0_12, %c4] : memref<8x23xf32, #tpu.memory_space<vmem>>, vector<8x16xf32>
    tpu.vector_store %arg8[%c0_12, %c4], %17 {strides = array<i32>} : memref<8x23xf32, #tpu.memory_space<vmem>>, vector<8x16xf32>,
    %cst_13 = arith.constant 0.000000e+00 : f32
    %21 = vector.broadcast %cst_13 : f32 to vector<8x3xf32>
    %c0_14 = arith.constant 0 : index
    %c20 = arith.constant 20 : index
    %22 = vector.load %arg8[%c0_14, %c20] : memref<8x23xf32, #tpu.memory_space<vmem>>, vector<8x3xf32>
    tpu.vector_store %arg8[%c0_14, %c20], %21 {strides = array<i32>} : memref<8x23xf32, #tpu.memory_space<vmem>>, vector<8x3xf32>,
    %cst_15 = arith.constant 0.000000e+00 : f32
    %23 = vector.broadcast %cst_15 : f32 to vector<8x3xf32>
    %c0_16 = arith.constant 0 : index
    %c0_17 = arith.constant 0 : index
    %24 = vector.load %arg9[%c0_16, %c0_17] : memref<8x23xf32, #tpu.memory_space<vmem>>, vector<8x3xf32>
    tpu.vector_store %arg9[%c0_16, %c0_17], %23 {strides = array<i32>} : memref<8x23xf32, #tpu.memory_space<vmem>>, vector<8x3xf32>,
    %c0_18 = arith.constant 0 : index
    %c3 = arith.constant 3 : index
    %25 = vector.load %arg9[%c0_18, %c3] : memref<8x23xf32, #tpu.memory_space<vmem>>, vector<8x16xf32>
    tpu.vector_store %arg9[%c0_18, %c3], %9 {strides = array<i32>} : memref<8x23xf32, #tpu.memory_space<vmem>>, vector<8x16xf32>,
    %cst_19 = arith.constant 0.000000e+00 : f32
    %26 = vector.broadcast %cst_19 : f32 to vector<8x4xf32>
    %c0_20 = arith.constant 0 : index
    %c19 = arith.constant 19 : index
    %27 = vector.load %arg9[%c0_20, %c19] : memref<8x23xf32, #tpu.memory_space<vmem>>, vector<8x4xf32>
    tpu.vector_store %arg9[%c0_20, %c19], %26 {strides = array<i32>} : memref<8x23xf32, #tpu.memory_space<vmem>>, vector<8x4xf32>,
    %c0_21 = arith.constant 0 : index
    %c0_22 = arith.constant 0 : index
    %28 = vector.load %arg8[%c0_21, %c0_22] : memref<8x23xf32, #tpu.memory_space<vmem>>, vector<8x16xf32>
    %c0_23 = arith.constant 0 : index
    %c0_24 = arith.constant 0 : index
    %29 = vector.load %arg11[%c0_23, %c0_24] : memref<120x16xf32, #tpu.memory_space<vmem>>, vector<8x16xf32>
    tpu.vector_store %arg11[%c0_23, %c0_24], %28 {strides = array<i32>} : memref<120x16xf32, #tpu.memory_space<vmem>>, vector<8x16xf32>,
    %c0_25 = arith.constant 0 : index
    %c0_26 = arith.constant 0 : index
    %30 = vector.load %arg9[%c0_25, %c0_26] : memref<8x23xf32, #tpu.memory_space<vmem>>, vector<8x16xf32>
    %c8 = arith.constant 8 : index
    %c0_27 = arith.constant 0 : index
    %31 = vector.load %arg11[%c8, %c0_27] : memref<120x16xf32, #tpu.memory_space<vmem>>, vector<8x16xf32>
    tpu.vector_store %arg11[%c8, %c0_27], %30 {strides = array<i32>} : memref<120x16xf32, #tpu.memory_space<vmem>>, vector<8x16xf32>,
    %c0_28 = arith.constant 0 : index
    %c1_29 = arith.constant 1 : index
    %32 = vector.load %arg8[%c0_28, %c1_29] : memref<8x23xf32, #tpu.memory_space<vmem>>, vector<8x16xf32>
    %c16 = arith.constant 16 : index
    %c0_30 = arith.constant 0 : index
    %33 = vector.load %arg11[%c16, %c0_30] : memref<120x16xf32, #tpu.memory_space<vmem>>, vector<8x16xf32>
    tpu.vector_store %arg11[%c16, %c0_30], %32 {strides = array<i32>} : memref<120x16xf32, #tpu.memory_space<vmem>>, vector<8x16xf32>,
    %c0_31 = arith.constant 0 : index
    %c1_32 = arith.constant 1 : index
    %34 = vector.load %arg9[%c0_31, %c1_32] : memref<8x23xf32, #tpu.memory_space<vmem>>, vector<8x16xf32>
    %c24 = arith.constant 24 : index
    %c0_33 = arith.constant 0 : index
    %35 = vector.load %arg11[%c24, %c0_33] : memref<120x16xf32, #tpu.memory_space<vmem>>, vector<8x16xf32>
    tpu.vector_store %arg11[%c24, %c0_33], %34 {strides = array<i32>} : memref<120x16xf32, #tpu.memory_space<vmem>>, vector<8x16xf32>,
    %c0_34 = arith.constant 0 : index
    %c2 = arith.constant 2 : index
    %36 = vector.load %arg8[%c0_34, %c2] : memref<8x23xf32, #tpu.memory_space<vmem>>, vector<8x16xf32>
    %c32 = arith.constant 32 : index
    %c0_35 = arith.constant 0 : index
    %37 = vector.load %arg11[%c32, %c0_35] : memref<120x16xf32, #tpu.memory_space<vmem>>, vector<8x16xf32>
    tpu.vector_store %arg11[%c32, %c0_35], %36 {strides = array<i32>} : memref<120x16xf32, #tpu.memory_space<vmem>>, vector<8x16xf32>,
    %c0_36 = arith.constant 0 : index
    %c2_37 = arith.constant 2 : index
    %38 = vector.load %arg9[%c0_36, %c2_37] : memref<8x23xf32, #tpu.memory_space<vmem>>, vector<8x16xf32>
    %c40 = arith.constant 40 : index
    %c0_38 = arith.constant 0 : index
    %39 = vector.load %arg11[%c40, %c0_38] : memref<120x16xf32, #tpu.memory_space<vmem>>, vector<8x16xf32>
    tpu.vector_store %arg11[%c40, %c0_38], %38 {strides = array<i32>} : memref<120x16xf32, #tpu.memory_space<vmem>>, vector<8x16xf32>,
    %c0_39 = arith.constant 0 : index
    %c3_40 = arith.constant 3 : index
    %40 = vector.load %arg8[%c0_39, %c3_40] : memref<8x23xf32, #tpu.memory_space<vmem>>, vector<8x16xf32>
    %c48 = arith.constant 48 : index
    %c0_41 = arith.constant 0 : index
    %41 = vector.load %arg11[%c48, %c0_41] : memref<120x16xf32, #tpu.memory_space<vmem>>, vector<8x16xf32>
    tpu.vector_store %arg11[%c48, %c0_41], %40 {strides = array<i32>} : memref<120x16xf32, #tpu.memory_space<vmem>>, vector<8x16xf32>,
    %c0_42 = arith.constant 0 : index
    %c3_43 = arith.constant 3 : index
    %42 = vector.load %arg9[%c0_42, %c3_43] : memref<8x23xf32, #tpu.memory_space<vmem>>, vector<8x16xf32>
    %c56 = arith.constant 56 : index
    %c0_44 = arith.constant 0 : index
    %43 = vector.load %arg11[%c56, %c0_44] : memref<120x16xf32, #tpu.memory_space<vmem>>, vector<8x16xf32>
    tpu.vector_store %arg11[%c56, %c0_44], %42 {strides = array<i32>} : memref<120x16xf32, #tpu.memory_space<vmem>>, vector<8x16xf32>,
    %c0_45 = arith.constant 0 : index
    %c4_46 = arith.constant 4 : index
    %44 = vector.load %arg8[%c0_45, %c4_46] : memref<8x23xf32, #tpu.memory_space<vmem>>, vector<8x16xf32>
    %c64 = arith.constant 64 : index
    %c0_47 = arith.constant 0 : index
    %45 = vector.load %arg11[%c64, %c0_47] : memref<120x16xf32, #tpu.memory_space<vmem>>, vector<8x16xf32>
    tpu.vector_store %arg11[%c64, %c0_47], %44 {strides = array<i32>} : memref<120x16xf32, #tpu.memory_space<vmem>>, vector<8x16xf32>,
    %c0_48 = arith.constant 0 : index
    %c4_49 = arith.constant 4 : index
    %46 = vector.load %arg9[%c0_48, %c4_49] : memref<8x23xf32, #tpu.memory_space<vmem>>, vector<8x16xf32>
    %c72 = arith.constant 72 : index
    %c0_50 = arith.constant 0 : index
    %47 = vector.load %arg11[%c72, %c0_50] : memref<120x16xf32, #tpu.memory_space<vmem>>, vector<8x16xf32>
    tpu.vector_store %arg11[%c72, %c0_50], %46 {strides = array<i32>} : memref<120x16xf32, #tpu.memory_space<vmem>>, vector<8x16xf32>,
    %c0_51 = arith.constant 0 : index
    %c5 = arith.constant 5 : index
    %48 = vector.load %arg8[%c0_51, %c5] : memref<8x23xf32, #tpu.memory_space<vmem>>, vector<8x16xf32>
    %c80 = arith.constant 80 : index
    %c0_52 = arith.constant 0 : index
    %49 = vector.load %arg11[%c80, %c0_52] : memref<120x16xf32, #tpu.memory_space<vmem>>, vector<8x16xf32>
    tpu.vector_store %arg11[%c80, %c0_52], %48 {strides = array<i32>} : memref<120x16xf32, #tpu.memory_space<vmem>>, vector<8x16xf32>,
    %c0_53 = arith.constant 0 : index
    %c5_54 = arith.constant 5 : index
    %50 = vector.load %arg9[%c0_53, %c5_54] : memref<8x23xf32, #tpu.memory_space<vmem>>, vector<8x16xf32>
    %c88 = arith.constant 88 : index
    %c0_55 = arith.constant 0 : index
    %51 = vector.load %arg11[%c88, %c0_55] : memref<120x16xf32, #tpu.memory_space<vmem>>, vector<8x16xf32>
    tpu.vector_store %arg11[%c88, %c0_55], %50 {strides = array<i32>} : memref<120x16xf32, #tpu.memory_space<vmem>>, vector<8x16xf32>,
    %c0_56 = arith.constant 0 : index
    %c6 = arith.constant 6 : index
    %52 = vector.load %arg8[%c0_56, %c6] : memref<8x23xf32, #tpu.memory_space<vmem>>, vector<8x16xf32>
    %c96 = arith.constant 96 : index
    %c0_57 = arith.constant 0 : index
    %53 = vector.load %arg11[%c96, %c0_57] : memref<120x16xf32, #tpu.memory_space<vmem>>, vector<8x16xf32>
    tpu.vector_store %arg11[%c96, %c0_57], %52 {strides = array<i32>} : memref<120x16xf32, #tpu.memory_space<vmem>>, vector<8x16xf32>,
    %c0_58 = arith.constant 0 : index
    %c6_59 = arith.constant 6 : index
    %54 = vector.load %arg9[%c0_58, %c6_59] : memref<8x23xf32, #tpu.memory_space<vmem>>, vector<8x16xf32>
    %c104 = arith.constant 104 : index
    %c0_60 = arith.constant 0 : index
    %55 = vector.load %arg11[%c104, %c0_60] : memref<120x16xf32, #tpu.memory_space<vmem>>, vector<8x16xf32>
    tpu.vector_store %arg11[%c104, %c0_60], %54 {strides = array<i32>} : memref<120x16xf32, #tpu.memory_space<vmem>>, vector<8x16xf32>,
    %c0_61 = arith.constant 0 : index
    %c7 = arith.constant 7 : index
    %56 = vector.load %arg8[%c0_61, %c7] : memref<8x23xf32, #tpu.memory_space<vmem>>, vector<8x16xf32>
    %c112 = arith.constant 112 : index
    %c0_62 = arith.constant 0 : index
    %57 = vector.load %arg11[%c112, %c0_62] : memref<120x16xf32, #tpu.memory_space<vmem>>, vector<8x16xf32>
    tpu.vector_store %arg11[%c112, %c0_62], %56 {strides = array<i32>} : memref<120x16xf32, #tpu.memory_space<vmem>>, vector<8x16xf32>,
    %c0_63 = arith.constant 0 : index
    %c0_64 = arith.constant 0 : index
    %58 = vector.load %arg4[%c0_63, %c0_64] : memref<16x120xf32, #tpu.memory_space<vmem>>, vector<16x120xf32>
    %c0_65 = arith.constant 0 : index
    %c0_66 = arith.constant 0 : index
    %59 = vector.load %arg11[%c0_65, %c0_66] : memref<120x16xf32, #tpu.memory_space<vmem>>, vector<120x16xf32>
    %cst_67 = arith.constant dense<0.000000e+00> : vector<16x16xf32>
    %60 = tpu.matmul %58, %59, %cst_67 {dimension_numbers = #tpu.dot_dimension_numbers<[1], [0], [0], [1], [0, 0, 1, 1], [], []>, precision = #tpu.contract_precision<fp32>} : vector<16x120xf32>, vector<120x16xf32>, vector<16x16xf32> -> vector<16x16xf32>
    %c0_68 = arith.constant 0 : index
    %c2_69 = arith.constant 2 : index
    %61 = vector.load %arg3[%c0_68, %c2_69] : memref<16x4xf32, #tpu.memory_space<vmem>>, vector<16x1xf32>
    %62 = vector.broadcast %61 : vector<16x1xf32> to vector<16x16xf32>
    %63 = arith.addf %60, %62 : vector<16x16xf32>
    %cst_70 = arith.constant 0.000000e+00 : f32
    %64 = vector.broadcast %cst_70 : f32 to vector<16x16xf32>
    %65 = arith.maximumf %63, %64 : vector<16x16xf32>
    %cst_71 = arith.constant 0.000000e+00 : f32
    %66 = vector.broadcast %cst_71 : f32 to vector<16x7xf32>
    %c0_72 = arith.constant 0 : index
    %c0_73 = arith.constant 0 : index
    %67 = vector.load %arg10[%c0_72, %c0_73] : memref<16x30xf32, #tpu.memory_space<vmem>>, vector<16x7xf32>
    tpu.vector_store %arg10[%c0_72, %c0_73], %66 {strides = array<i32>} : memref<16x30xf32, #tpu.memory_space<vmem>>, vector<16x7xf32>,
    %c0_74 = arith.constant 0 : index
    %c7_75 = arith.constant 7 : index
    %68 = vector.load %arg10[%c0_74, %c7_75] : memref<16x30xf32, #tpu.memory_space<vmem>>, vector<16x16xf32>
    tpu.vector_store %arg10[%c0_74, %c7_75], %65 {strides = array<i32>} : memref<16x30xf32, #tpu.memory_space<vmem>>, vector<16x16xf32>,
    %cst_76 = arith.constant 0.000000e+00 : f32
    %69 = vector.broadcast %cst_76 : f32 to vector<16x7xf32>
    %c0_77 = arith.constant 0 : index
    %c23 = arith.constant 23 : index
    %70 = vector.load %arg10[%c0_77, %c23] : memref<16x30xf32, #tpu.memory_space<vmem>>, vector<16x7xf32>
    tpu.vector_store %arg10[%c0_77, %c23], %69 {strides = array<i32>} : memref<16x30xf32, #tpu.memory_space<vmem>>, vector<16x7xf32>,
    %c0_78 = arith.constant 0 : index
    %c0_79 = arith.constant 0 : index
    %71 = vector.load %arg10[%c0_78, %c0_79] : memref<16x30xf32, #tpu.memory_space<vmem>>, vector<16x16xf32>
    %c0_80 = arith.constant 0 : index
    %c0_81 = arith.constant 0 : index
    %72 = vector.load %arg12[%c0_80, %c0_81] : memref<240x16xf32, #tpu.memory_space<vmem>>, vector<16x16xf32>
    tpu.vector_store %arg12[%c0_80, %c0_81], %71 {strides = array<i32>} : memref<240x16xf32, #tpu.memory_space<vmem>>, vector<16x16xf32>,
    %c0_82 = arith.constant 0 : index
    %c1_83 = arith.constant 1 : index
    %73 = vector.load %arg10[%c0_82, %c1_83] : memref<16x30xf32, #tpu.memory_space<vmem>>, vector<16x16xf32>
    %c16_84 = arith.constant 16 : index
    %c0_85 = arith.constant 0 : index
    %74 = vector.load %arg12[%c16_84, %c0_85] : memref<240x16xf32, #tpu.memory_space<vmem>>, vector<16x16xf32>
    tpu.vector_store %arg12[%c16_84, %c0_85], %73 {strides = array<i32>} : memref<240x16xf32, #tpu.memory_space<vmem>>, vector<16x16xf32>,
    %c0_86 = arith.constant 0 : index
    %c2_87 = arith.constant 2 : index
    %75 = vector.load %arg10[%c0_86, %c2_87] : memref<16x30xf32, #tpu.memory_space<vmem>>, vector<16x16xf32>
    %c32_88 = arith.constant 32 : index
    %c0_89 = arith.constant 0 : index
    %76 = vector.load %arg12[%c32_88, %c0_89] : memref<240x16xf32, #tpu.memory_space<vmem>>, vector<16x16xf32>
    tpu.vector_store %arg12[%c32_88, %c0_89], %75 {strides = array<i32>} : memref<240x16xf32, #tpu.memory_space<vmem>>, vector<16x16xf32>,
    %c0_90 = arith.constant 0 : index
    %c3_91 = arith.constant 3 : index
    %77 = vector.load %arg10[%c0_90, %c3_91] : memref<16x30xf32, #tpu.memory_space<vmem>>, vector<16x16xf32>
    %c48_92 = arith.constant 48 : index
    %c0_93 = arith.constant 0 : index
    %78 = vector.load %arg12[%c48_92, %c0_93] : memref<240x16xf32, #tpu.memory_space<vmem>>, vector<16x16xf32>
    tpu.vector_store %arg12[%c48_92, %c0_93], %77 {strides = array<i32>} : memref<240x16xf32, #tpu.memory_space<vmem>>, vector<16x16xf32>,
    %c0_94 = arith.constant 0 : index
    %c4_95 = arith.constant 4 : index
    %79 = vector.load %arg10[%c0_94, %c4_95] : memref<16x30xf32, #tpu.memory_space<vmem>>, vector<16x16xf32>
    %c64_96 = arith.constant 64 : index
    %c0_97 = arith.constant 0 : index
    %80 = vector.load %arg12[%c64_96, %c0_97] : memref<240x16xf32, #tpu.memory_space<vmem>>, vector<16x16xf32>
    tpu.vector_store %arg12[%c64_96, %c0_97], %79 {strides = array<i32>} : memref<240x16xf32, #tpu.memory_space<vmem>>, vector<16x16xf32>,
    %c0_98 = arith.constant 0 : index
    %c5_99 = arith.constant 5 : index
    %81 = vector.load %arg10[%c0_98, %c5_99] : memref<16x30xf32, #tpu.memory_space<vmem>>, vector<16x16xf32>
    %c80_100 = arith.constant 80 : index
    %c0_101 = arith.constant 0 : index
    %82 = vector.load %arg12[%c80_100, %c0_101] : memref<240x16xf32, #tpu.memory_space<vmem>>, vector<16x16xf32>
    tpu.vector_store %arg12[%c80_100, %c0_101], %81 {strides = array<i32>} : memref<240x16xf32, #tpu.memory_space<vmem>>, vector<16x16xf32>,
    %c0_102 = arith.constant 0 : index
    %c6_103 = arith.constant 6 : index
    %83 = vector.load %arg10[%c0_102, %c6_103] : memref<16x30xf32, #tpu.memory_space<vmem>>, vector<16x16xf32>
    %c96_104 = arith.constant 96 : index
    %c0_105 = arith.constant 0 : index
    %84 = vector.load %arg12[%c96_104, %c0_105] : memref<240x16xf32, #tpu.memory_space<vmem>>, vector<16x16xf32>
    tpu.vector_store %arg12[%c96_104, %c0_105], %83 {strides = array<i32>} : memref<240x16xf32, #tpu.memory_space<vmem>>, vector<16x16xf32>,
    %c0_106 = arith.constant 0 : index
    %c7_107 = arith.constant 7 : index
    %85 = vector.load %arg10[%c0_106, %c7_107] : memref<16x30xf32, #tpu.memory_space<vmem>>, vector<16x16xf32>
    %c112_108 = arith.constant 112 : index
    %c0_109 = arith.constant 0 : index
    %86 = vector.load %arg12[%c112_108, %c0_109] : memref<240x16xf32, #tpu.memory_space<vmem>>, vector<16x16xf32>
    tpu.vector_store %arg12[%c112_108, %c0_109], %85 {strides = array<i32>} : memref<240x16xf32, #tpu.memory_space<vmem>>, vector<16x16xf32>,
    %c0_110 = arith.constant 0 : index
    %c8_111 = arith.constant 8 : index
    %87 = vector.load %arg10[%c0_110, %c8_111] : memref<16x30xf32, #tpu.memory_space<vmem>>, vector<16x16xf32>
    %c128 = arith.constant 128 : index
    %c0_112 = arith.constant 0 : index
    %88 = vector.load %arg12[%c128, %c0_112] : memref<240x16xf32, #tpu.memory_space<vmem>>, vector<16x16xf32>
    tpu.vector_store %arg12[%c128, %c0_112], %87 {strides = array<i32>} : memref<240x16xf32, #tpu.memory_space<vmem>>, vector<16x16xf32>,
    %c0_113 = arith.constant 0 : index
    %c9 = arith.constant 9 : index
    %89 = vector.load %arg10[%c0_113, %c9] : memref<16x30xf32, #tpu.memory_space<vmem>>, vector<16x16xf32>
    %c144 = arith.constant 144 : index
    %c0_114 = arith.constant 0 : index
    %90 = vector.load %arg12[%c144, %c0_114] : memref<240x16xf32, #tpu.memory_space<vmem>>, vector<16x16xf32>
    tpu.vector_store %arg12[%c144, %c0_114], %89 {strides = array<i32>} : memref<240x16xf32, #tpu.memory_space<vmem>>, vector<16x16xf32>,
    %c0_115 = arith.constant 0 : index
    %c10 = arith.constant 10 : index
    %91 = vector.load %arg10[%c0_115, %c10] : memref<16x30xf32, #tpu.memory_space<vmem>>, vector<16x16xf32>
    %c160 = arith.constant 160 : index
    %c0_116 = arith.constant 0 : index
    %92 = vector.load %arg12[%c160, %c0_116] : memref<240x16xf32, #tpu.memory_space<vmem>>, vector<16x16xf32>
    tpu.vector_store %arg12[%c160, %c0_116], %91 {strides = array<i32>} : memref<240x16xf32, #tpu.memory_space<vmem>>, vector<16x16xf32>,
    %c0_117 = arith.constant 0 : index
    %c11 = arith.constant 11 : index
    %93 = vector.load %arg10[%c0_117, %c11] : memref<16x30xf32, #tpu.memory_space<vmem>>, vector<16x16xf32>
    %c176 = arith.constant 176 : index
    %c0_118 = arith.constant 0 : index
    %94 = vector.load %arg12[%c176, %c0_118] : memref<240x16xf32, #tpu.memory_space<vmem>>, vector<16x16xf32>
    tpu.vector_store %arg12[%c176, %c0_118], %93 {strides = array<i32>} : memref<240x16xf32, #tpu.memory_space<vmem>>, vector<16x16xf32>,
    %c0_119 = arith.constant 0 : index
    %c12 = arith.constant 12 : index
    %95 = vector.load %arg10[%c0_119, %c12] : memref<16x30xf32, #tpu.memory_space<vmem>>, vector<16x16xf32>
    %c192 = arith.constant 192 : index
    %c0_120 = arith.constant 0 : index
    %96 = vector.load %arg12[%c192, %c0_120] : memref<240x16xf32, #tpu.memory_space<vmem>>, vector<16x16xf32>
    tpu.vector_store %arg12[%c192, %c0_120], %95 {strides = array<i32>} : memref<240x16xf32, #tpu.memory_space<vmem>>, vector<16x16xf32>,
    %c0_121 = arith.constant 0 : index
    %c13 = arith.constant 13 : index
    %97 = vector.load %arg10[%c0_121, %c13] : memref<16x30xf32, #tpu.memory_space<vmem>>, vector<16x16xf32>
    %c208 = arith.constant 208 : index
    %c0_122 = arith.constant 0 : index
    %98 = vector.load %arg12[%c208, %c0_122] : memref<240x16xf32, #tpu.memory_space<vmem>>, vector<16x16xf32>
    tpu.vector_store %arg12[%c208, %c0_122], %97 {strides = array<i32>} : memref<240x16xf32, #tpu.memory_space<vmem>>, vector<16x16xf32>,
    %c0_123 = arith.constant 0 : index
    %c14 = arith.constant 14 : index
    %99 = vector.load %arg10[%c0_123, %c14] : memref<16x30xf32, #tpu.memory_space<vmem>>, vector<16x16xf32>
    %c224 = arith.constant 224 : index
    %c0_124 = arith.constant 0 : index
    %100 = vector.load %arg12[%c224, %c0_124] : memref<240x16xf32, #tpu.memory_space<vmem>>, vector<16x16xf32>
    tpu.vector_store %arg12[%c224, %c0_124], %99 {strides = array<i32>} : memref<240x16xf32, #tpu.memory_space<vmem>>, vector<16x16xf32>,
    %c0_125 = arith.constant 0 : index
    %c0_126 = arith.constant 0 : index
    %101 = vector.load %arg5[%c0_125, %c0_126] : memref<16x240xf32, #tpu.memory_space<vmem>>, vector<16x240xf32>
    %c0_127 = arith.constant 0 : index
    %c0_128 = arith.constant 0 : index
    %102 = vector.load %arg12[%c0_127, %c0_128] : memref<240x16xf32, #tpu.memory_space<vmem>>, vector<240x16xf32>
    %cst_129 = arith.constant dense<0.000000e+00> : vector<16x16xf32>
    %103 = tpu.matmul %101, %102, %cst_129 {dimension_numbers = #tpu.dot_dimension_numbers<[1], [0], [0], [1], [0, 0, 1, 1], [], []>, precision = #tpu.contract_precision<fp32>} : vector<16x240xf32>, vector<240x16xf32>, vector<16x16xf32> -> vector<16x16xf32>
    %c0_130 = arith.constant 0 : index
    %c3_131 = arith.constant 3 : index
    %104 = vector.load %arg3[%c0_130, %c3_131] : memref<16x4xf32, #tpu.memory_space<vmem>>, vector<16x1xf32>
    %105 = vector.broadcast %104 : vector<16x1xf32> to vector<16x16xf32>
    %106 = arith.addf %103, %105 : vector<16x16xf32>
    %c0_132 = arith.constant 0 : index
    %c0_133 = arith.constant 0 : index
    %c0_134 = arith.constant 0 : index
    %107 = vector.load %arg1[%c0_132, %c0_133, %c0_134] : memref<1x8x16xf32, #tpu.memory_space<vmem>>, vector<1x8x16xf32>
    %108 = vector.shape_cast %107 : vector<1x8x16xf32> to vector<8x16xf32>
    %c0_135 = arith.constant 0 : index
    %c0_136 = arith.constant 0 : index
    %c0_137 = arith.constant 0 : index
    %109 = vector.load %arg2[%c0_135, %c0_136, %c0_137] : memref<1x8x16xf32, #tpu.memory_space<vmem>>, vector<1x8x16xf32>
    %110 = vector.shape_cast %109 : vector<1x8x16xf32> to vector<8x16xf32>
    %111 = arith.maximumf %108, %110 : vector<8x16xf32>
    %c0_138 = arith.constant 0 : index
    %c0_139 = arith.constant 0 : index
    %112 = vector.load %arg6[%c0_138, %c0_139] : memref<16x8xf32, #tpu.memory_space<vmem>>, vector<16x8xf32>
    %cst_140 = arith.constant dense<0.000000e+00> : vector<16x16xf32>
    %113 = tpu.matmul %112, %111, %cst_140 {dimension_numbers = #tpu.dot_dimension_numbers<[1], [0], [0], [1], [0, 0, 1, 1], [], []>, precision = #tpu.contract_precision<fp32>} : vector<16x8xf32>, vector<8x16xf32>, vector<16x16xf32> -> vector<16x16xf32>
    %114 = arith.addf %106, %113 : vector<16x16xf32>
    %c0_141 = arith.constant 0 : index
    %c0_142 = arith.constant 0 : index
    %c0_143 = arith.constant 0 : index
    %115 = vector.load %arg7[%c0_141, %c0_142, %c0_143] : memref<1x16x16xf32, #tpu.memory_space<vmem>>, vector<1x16x16xf32>
    %116 = vector.shape_cast %115 : vector<1x16x16xf32> to vector<16x16xf32>
    %117 = vector.shape_cast %114 : vector<16x16xf32> to vector<1x16x16xf32>
    tpu.vector_store %arg7[%c0_141, %c0_142, %c0_143], %117 {strides = array<i32>} : memref<1x16x16xf32, #tpu.memory_space<vmem>>, vector<1x16x16xf32>,
    return
  }
  func.func @transform_0(%arg0: i32) -> (i32, i32, i32) {
    %c0_i32 = arith.constant 0 : i32
    %c0_i32_0 = arith.constant 0 : i32
    %c0_i32_1 = arith.constant 0 : i32
    return %arg0, %c0_i32, %c0_i32_0 : i32, i32, i32
  }
  func.func @transform_1(%arg0: i32) -> (i32, i32, i32) {
    %c0_i32 = arith.constant 0 : i32
    %c0_i32_0 = arith.constant 0 : i32
    %c0_i32_1 = arith.constant 0 : i32
    return %arg0, %c0_i32, %c0_i32_0 : i32, i32, i32
  }
  func.func @transform_2(%arg0: i32) -> (i32, i32) {
    %c0_i32 = arith.constant 0 : i32
    %c0_i32_0 = arith.constant 0 : i32
    %c0_i32_1 = arith.constant 0 : i32
    return %c0_i32, %c0_i32_0 : i32, i32
  }
  func.func @transform_3(%arg0: i32) -> (i32, i32) {
    %c0_i32 = arith.constant 0 : i32
    %c0_i32_0 = arith.constant 0 : i32
    %c0_i32_1 = arith.constant 0 : i32
    return %c0_i32, %c0_i32_0 : i32, i32
  }
  func.func @transform_4(%arg0: i32) -> (i32, i32) {
    %c0_i32 = arith.constant 0 : i32
    %c0_i32_0 = arith.constant 0 : i32
    %c0_i32_1 = arith.constant 0 : i32
    return %c0_i32, %c0_i32_0 : i32, i32
  }
  func.func @transform_5(%arg0: i32) -> (i32, i32) {
    %c0_i32 = arith.constant 0 : i32
    %c0_i32_0 = arith.constant 0 : i32
    %c0_i32_1 = arith.constant 0 : i32
    return %c0_i32, %c0_i32_0 : i32, i32
  }
  func.func @transform_6(%arg0: i32) -> (i32, i32, i32) {
    %c0_i32 = arith.constant 0 : i32
    %c0_i32_0 = arith.constant 0 : i32
    %c0_i32_1 = arith.constant 0 : i32
    return %arg0, %c0_i32, %c0_i32_0 : i32, i32, i32
  }
}

</mosaic_0001>

<llo_original>
// kernel: tpu_custom_call.1
$region0: #{tpu_custom_call.1}
  #allocation0 [shape = 'u32[]', space=smem, size = 0x4, offset = 0x4, fixed_abs, tag = 'smem constant byte address 0x4 - core index']
  #allocation1 [shape = 'u32[144,128]{1,0:T(1,128)}', space=vmem, size = 0x12000, scoped, tag = 'internal scratch']
  #allocation2 [shape = 'f32[8,23]{1,0:T(8,128)}', space=vmem, size = 0x1000, scoped, tag = 'scratch operand']
  #allocation3 [shape = 'f32[8,23]{1,0:T(8,128)}', space=vmem, size = 0x1000, scoped, tag = 'scratch operand']
  #allocation4 [shape = 'f32[16,30]{1,0:T(8,128)}', space=vmem, size = 0x2000, scoped, tag = 'scratch operand']
  #allocation5 [shape = 'f32[120,16]{1,0:T(8,128)}', space=vmem, size = 0xf000, scoped, tag = 'scratch operand']
  #allocation6 [shape = 'f32[240,16]{1,0:T(8,128)}', space=vmem, size = 0x1e000, scoped, tag = 'scratch operand']
  %s0 = inlined_call_operand.vmem [shape: f32[2,8,16], index: 0, kind: input, shape index: {}]
  %s1 = inlined_call_operand.hbm [shape: f32[2,8,16], index: 1, kind: input, shape index: {}]
  %s2 = inlined_call_operand.vmem [shape: f32[16,4], index: 2, kind: input, shape index: {}]
  %s3 = inlined_call_operand.hbm [shape: f32[16,120], index: 3, kind: input, shape index: {}]
  %s4 = inlined_call_operand.vmem [shape: f32[16,240], index: 4, kind: input, shape index: {}]
  %s5 = inlined_call_operand.vmem [shape: f32[16,8], index: 5, kind: input, shape index: {}]
  %s6 = inlined_call_operand.hbm [shape: f32[2,16,16], index: 6, kind: output, shape index: {}]
  %s7 = sld [smem:[#allocation0]]
  $region65: #{tpu_custom_call.1} parent=0
    _
  %s9 = ssub.s32 1, %s7
  %s10 = scalar_select 0, %s9, %s7
  $region1: #{tpu_custom_call.1} parent=0
    #allocation7 [shape = 'u8[8192]{0}', space=vmem, size = 0x2000, scoped, tag = 'input window, operand 1']
    #allocation8 [shape = 's32[2]{0}', space=sflag, size = 0x8, scoped, tag = 'scoped memory for tpu_custom_call.1']
    #allocation9 [shape = 's32[2]{0}', space=sflag, size = 0x8, scoped, tag = 'scoped memory for tpu_custom_call.1']
    #allocation10 [shape = 'u8[8192]{0}', space=vmem, size = 0x2000, scoped, tag = 'input window, operand 3, single buffered']
    #allocation11 [shape = 's32[1]{0}', space=sflag, size = 0x4, scoped, tag = 'scoped memory for tpu_custom_call.1']
    #allocation12 [shape = 'u8[16384]{0}', space=vmem, size = 0x4000, scoped, tag = 'output window, operand 0']
    %11 = vsyncpa [#allocation8], 0
    %s12 = scalar_lea.sflag [#allocation8], 1
    %13 = vsyncpa %s12, 0
    %14 = vsyncpa [#allocation11], 0
    %15 = vsyncpa [#allocation9], 0
    %s16 = scalar_lea.sflag [#allocation9], 1
    %17 = vsyncpa %s16, 0
    loop: start=0, step=1, limit=4
    $region2: #{tpu_custom_call.1} parent=1 // loop_pre_header
      _
    $region3: #{tpu_custom_call.1} parent=1 // loop_header
      %s19 = sphi 0, %s23
      %p20 = scmp.ge.s32.totalorder %s19, 4
      %s29 = sphi 0, %s31
      %s32 = sphi 0, %s29
      %s33 = sphi 0, %s32
      %s49 = sphi 0, %s33
      %s55 = sphi 0, %s57
      %s58 = sphi 0, %s55
      %s59 = sphi 0, %s58
      %s75 = sphi 0, %s59
      %s79 = sphi 0, %s79
      %s81 = sphi 0, %s79
      %s82 = sphi 0, %s81
      %s96 = sphi 0, %s82
      %s100 = sphi 0, %s100
      %s102 = sphi 0, %s100
      %s103 = sphi 0, %s102
      %s117 = sphi 0, %s103
      %s121 = sphi 0, %s121
      %s123 = sphi 0, %s121
      %s124 = sphi 0, %s123
      %s138 = sphi 0, %s124
      %s142 = sphi 0, %s142
      %s144 = sphi 0, %s142
      %s145 = sphi 0, %s144
      %s159 = sphi 0, %s145
      %s165 = sphi 0, %s167
      %s168 = sphi 0, %s165
      %s169 = sphi 0, %s168
      %s185 = sphi 0, %s169
    $region4: #{tpu_custom_call.1} parent=1 // loop_header_branch
      %22 = sbr.rel (%p20) target = $region8
    $region5: #{tpu_custom_call.1} parent=1 // loop_body
      %s24 = ssub.s32 %s19, 1
      %s25 = ssub.s32 %s19, 2
      %s26 = sadd.s32 %s19, 1
      %s27 = ssub.s32 %s19, %s26
      %p28 = scmp.eq.s32.totalorder %s27, 0
      %s30 = sadd.s32 %s29, 1
      %s31 = scalar_select %p28, %s29, %s30
      %p34 = pneg %p28
      %p35 = scmp.eq.s32.totalorder %s19, 1
      %p36 = por %p34, %p35
      %p37 = scmp.ne.s32.totalorder %s29, %s32
      %p38 = scmp.eq.s32.totalorder %s19, 0
      %p39 = por %p37, %p38
      %p40 = scmp.ne.s32.totalorder %s29, %s32
      %p41 = scmp.eq.s32.totalorder %s24, 1
      %p42 = por %p40, %p41
      %p43 = scmp.ne.s32.totalorder %s32, %s33
      %p44 = scmp.eq.s32.totalorder %s24, 0
      %p45 = por %p43, %p44
      %p46 = scmp.ne.s32.totalorder %s32, %s33
      %p47 = scmp.eq.s32.totalorder %s25, 1
      %p48 = por %p46, %p47
      %p50 = scmp.ne.s32.totalorder %s33, %s49
      %p51 = scmp.eq.s32.totalorder %s25, 0
      %p52 = por %p50, %p51
      %s53 = ssub.s32 %s19, %s26
      %p54 = scmp.eq.s32.totalorder %s53, 0
      %s56 = sadd.s32 %s55, 1
      %s57 = scalar_select %p54, %s55, %s56
      %p60 = pneg %p54
      %p61 = scmp.eq.s32.totalorder %s19, 1
      %p62 = por %p60, %p61
      %p63 = scmp.ne.s32.totalorder %s55, %s58
      %p64 = scmp.eq.s32.totalorder %s19, 0
      %p65 = por %p63, %p64
      %p66 = scmp.ne.s32.totalorder %s55, %s58
      %p67 = scmp.eq.s32.totalorder %s24, 1
      %p68 = por %p66, %p67
      %p69 = scmp.ne.s32.totalorder %s58, %s59
      %p70 = scmp.eq.s32.totalorder %s24, 0
      %p71 = por %p69, %p70
      %p72 = scmp.ne.s32.totalorder %s58, %s59
      %p73 = scmp.eq.s32.totalorder %s25, 1
      %p74 = por %p72, %p73
      %p76 = scmp.ne.s32.totalorder %s59, %s75
      %p77 = scmp.eq.s32.totalorder %s25, 0
      %p78 = por %p76, %p77
      %s80 = sadd.s32 %s79, 1
      %p83 = scmp.eq.s32.totalorder %s19, 1
      %p84 = scmp.ne.s32.totalorder %s79, %s81
      %p85 = scmp.eq.s32.totalorder %s19, 0
      %p86 = por %p84, %p85
      %p87 = scmp.ne.s32.totalorder %s79, %s81
      %p88 = scmp.eq.s32.totalorder %s24, 1
      %p89 = por %p87, %p88
      %p90 = scmp.ne.s32.totalorder %s81, %s82
      %p91 = scmp.eq.s32.totalorder %s24, 0
      %p92 = por %p90, %p91
      %p93 = scmp.ne.s32.totalorder %s81, %s82
      %p94 = scmp.eq.s32.totalorder %s25, 1
      %p95 = por %p93, %p94
      %p97 = scmp.ne.s32.totalorder %s82, %s96
      %p98 = scmp.eq.s32.totalorder %s25, 0
      %p99 = por %p97, %p98
      %s101 = sadd.s32 %s100, 1
      %p104 = scmp.eq.s32.totalorder %s19, 1
      %p105 = scmp.ne.s32.totalorder %s100, %s102
      %p106 = scmp.eq.s32.totalorder %s19, 0
      %p107 = por %p105, %p106
      %p108 = scmp.ne.s32.totalorder %s100, %s102
      %p109 = scmp.eq.s32.totalorder %s24, 1
      %p110 = por %p108, %p109
      %p111 = scmp.ne.s32.totalorder %s102, %s103
      %p112 = scmp.eq.s32.totalorder %s24, 0
      %p113 = por %p111, %p112
      %p114 = scmp.ne.s32.totalorder %s102, %s103
      %p115 = scmp.eq.s32.totalorder %s25, 1
      %p116 = por %p114, %p115
      %p118 = scmp.ne.s32.totalorder %s103, %s117
      %p119 = scmp.eq.s32.totalorder %s25, 0
      %p120 = por %p118, %p119
      %s122 = sadd.s32 %s121, 1
      %p125 = scmp.eq.s32.totalorder %s19, 1
      %p126 = scmp.ne.s32.totalorder %s121, %s123
      %p127 = scmp.eq.s32.totalorder %s19, 0
      %p128 = por %p126, %p127
      %p129 = scmp.ne.s32.totalorder %s121, %s123
      %p130 = scmp.eq.s32.totalorder %s24, 1
      %p131 = por %p129, %p130
      %p132 = scmp.ne.s32.totalorder %s123, %s124
      %p133 = scmp.eq.s32.totalorder %s24, 0
      %p134 = por %p132, %p133
      %p135 = scmp.ne.s32.totalorder %s123, %s124
      %p136 = scmp.eq.s32.totalorder %s25, 1
      %p137 = por %p135, %p136
      %p139 = scmp.ne.s32.totalorder %s124, %s138
      %p140 = scmp.eq.s32.totalorder %s25, 0
      %p141 = por %p139, %p140
      %s143 = sadd.s32 %s142, 1
      %p146 = scmp.eq.s32.totalorder %s19, 1
      %p147 = scmp.ne.s32.totalorder %s142, %s144
      %p148 = scmp.eq.s32.totalorder %s19, 0
      %p149 = por %p147, %p148
      %p150 = scmp.ne.s32.totalorder %s142, %s144
      %p151 = scmp.eq.s32.totalorder %s24, 1
      %p152 = por %p150, %p151
      %p153 = scmp.ne.s32.totalorder %s144, %s145
      %p154 = scmp.eq.s32.totalorder %s24, 0
      %p155 = por %p153, %p154
      %p156 = scmp.ne.s32.totalorder %s144, %s145
      %p157 = scmp.eq.s32.totalorder %s25, 1
      %p158 = por %p156, %p157
      %p160 = scmp.ne.s32.totalorder %s145, %s159
      %p161 = scmp.eq.s32.totalorder %s25, 0
      %p162 = por %p160, %p161
      %s163 = ssub.s32 %s19, %s26
      %p164 = scmp.eq.s32.totalorder %s163, 0
      %s166 = sadd.s32 %s165, 1
      %s167 = scalar_select %p164, %s165, %s166
      %p170 = pneg %p164
      %p171 = scmp.eq.s32.totalorder %s19, 1
      %p172 = por %p170, %p171
      %p173 = scmp.ne.s32.totalorder %s165, %s168
      %p174 = scmp.eq.s32.totalorder %s19, 0
      %p175 = por %p173, %p174
      %p176 = scmp.ne.s32.totalorder %s165, %s168
      %p177 = scmp.eq.s32.totalorder %s24, 1
      %p178 = por %p176, %p177
      %p179 = scmp.ne.s32.totalorder %s168, %s169
      %p180 = scmp.eq.s32.totalorder %s24, 0
      %p181 = por %p179, %p180
      %p182 = scmp.ne.s32.totalorder %s168, %s169
      %p183 = scmp.eq.s32.totalorder %s25, 1
      %p184 = por %p182, %p183
      %p186 = scmp.ne.s32.totalorder %s169, %s185
      %p187 = scmp.eq.s32.totalorder %s25, 0
      %p188 = por %p186, %p187
      %p189 = scmp.le.s32.totalorder 1, %s19
      %p190 = scmp.lt.s32.totalorder %s19, 3
      %p191 = pnand %p189, %p190
      %p192 = pneg %p191
      // Predicated region
      $region9: #{tpu_custom_call.1} parent=5 // pred_check
        _
      $region10: #{tpu_custom_call.1} parent=5 // pred_check_branch
        %194 = sbr.rel (%p191) target = $region12
      $region11: #{tpu_custom_call.1} parent=5 // pred_region
        %s195 = ssub.s32 %s19, 1
        // Predicated region
        $region13: #{tpu_custom_call.1} parent=11 // pred_check
          %p196 = pneg %p92
        $region14: #{tpu_custom_call.1} parent=11 // pred_check_branch
          %198 = sbr.rel (%p196) target = $region16
        $region15: #{tpu_custom_call.1} parent=11 // pred_region
          _
        $region16: #{tpu_custom_call.1} parent=11 // pred_fallthru
          _
        // Predicated region
        $region17: #{tpu_custom_call.1} parent=11 // pred_check
          %p199 = pneg %p113
        $region18: #{tpu_custom_call.1} parent=11 // pred_check_branch
          %201 = sbr.rel (%p199) target = $region20
        $region19: #{tpu_custom_call.1} parent=11 // pred_region
          %s203 = ssub.s32 256, 256
          %204 = vsyncadd [#allocation11], %s203
          %s205 = sshll.u32 [#allocation10], 4
          %s206 = int_to_ptr.vmem [resolvable:$true] %s205
          %211 = dma.hbm_to_vmem [thread:$0]  %s3, 256, %s206, [#allocation11], 128, 128, 8
        $region20: #{tpu_custom_call.1} parent=11 // pred_fallthru
          _
        // Predicated region
        $region21: #{tpu_custom_call.1} parent=11 // pred_check
          %p212 = pneg %p134
        $region22: #{tpu_custom_call.1} parent=11 // pred_check_branch
          %214 = sbr.rel (%p212) target = $region24
        $region23: #{tpu_custom_call.1} parent=11 // pred_region
          _
        $region24: #{tpu_custom_call.1} parent=11 // pred_fallthru
          _
        // Predicated region
        $region25: #{tpu_custom_call.1} parent=11 // pred_check
          %p215 = pneg %p155
        $region26: #{tpu_custom_call.1} parent=11 // pred_check_branch
          %217 = sbr.rel (%p215) target = $region28
        $region27: #{tpu_custom_call.1} parent=11 // pred_region
          _
        $region28: #{tpu_custom_call.1} parent=11 // pred_fallthru
          _
      $region12: #{tpu_custom_call.1} parent=5 // pred_fallthru
        _
      %p218 = scmp.lt.s32.totalorder %s19, 2
      // Predicated region
      $region29: #{tpu_custom_call.1} parent=5 // pred_check
        %p219 = pneg %p218
      $region30: #{tpu_custom_call.1} parent=5 // pred_check_branch
        %221 = sbr.rel (%p219) target = $region32
      $region31: #{tpu_custom_call.1} parent=5 // pred_region
        // Predicated region
        $region33: #{tpu_custom_call.1} parent=31 // pred_check
          %p222 = pneg %p39
        $region34: #{tpu_custom_call.1} parent=31 // pred_check_branch
          %224 = sbr.rel (%p222) target = $region36
        $region35: #{tpu_custom_call.1} parent=31 // pred_region
          %p225 = scmp.lt.s32.totalorder %s19, 1
          %s226 = scalar_select %p225, %s19, 1
          %s227 = smul.addr %s226, 8
          %s228 = scalar_lea.vmem %s0, %s227
        $region36: #{tpu_custom_call.1} parent=31 // pred_fallthru
          _
        // Predicated region
        $region37: #{tpu_custom_call.1} parent=31 // pred_check
          %p229 = pneg %p65
        $region38: #{tpu_custom_call.1} parent=31 // pred_check_branch
          %231 = sbr.rel (%p229) target = $region40
        $region39: #{tpu_custom_call.1} parent=31 // pred_region
          %s232 = sand.u32 %s55, 1
          %s233 = scalar_lea.sflag [#allocation8], %s232
          %s234 = sand.u32 %s55, 1
          %s235 = smul.addr %s234, 8
          %s236 = scalar_lea.vmem [#allocation7], %s235
          %s238 = ssub.s32 128, 128
          %239 = vsyncadd %s233, %s238
          %s240 = smul.addr %s19, 128
          %s241 = scalar_lea.hbm %s1, %s240
          %s243 = sshll.u32 %s236, 4
          %s244 = int_to_ptr.vmem [resolvable:$true] %s243
          %246 = dma.hbm_to_vmem [thread:$0]  %s241, 128, %s244, %s233
        $region40: #{tpu_custom_call.1} parent=31 // pred_fallthru
          _
      $region32: #{tpu_custom_call.1} parent=5 // pred_fallthru
        _
      %p247 = scmp.le.s32.totalorder 1, %s19
      %p248 = scmp.lt.s32.totalorder %s19, 3
      %p249 = pnand %p247, %p248
      %p250 = pneg %p249
      // Predicated region
      $region41: #{tpu_custom_call.1} parent=5 // pred_check
        _
      $region42: #{tpu_custom_call.1} parent=5 // pred_check_branch
        %252 = sbr.rel (%p249) target = $region44
      $region43: #{tpu_custom_call.1} parent=5 // pred_region
        %s253 = ssub.s32 %s19, 1
        %s254 = sand.u32 %s58, 1
        %s255 = scalar_lea.sflag [#allocation8], %s254
        %s256 = sand.u32 %s58, 1
        %s257 = smul.addr %s256, 8
        %s258 = scalar_lea.vmem [#allocation7], %s257
        // Predicated region
        $region45: #{tpu_custom_call.1} parent=43 // pred_check
          %p259 = pneg %p71
        $region46: #{tpu_custom_call.1} parent=43 // pred_check_branch
          %261 = sbr.rel (%p259) target = $region48
        $region47: #{tpu_custom_call.1} parent=43 // pred_region
          %262 = dma.done %s255, 128
        $region48: #{tpu_custom_call.1} parent=43 // pred_fallthru
          _
        // Predicated region
        $region49: #{tpu_custom_call.1} parent=43 // pred_check
          %p263 = pneg %p113
        $region50: #{tpu_custom_call.1} parent=43 // pred_check_branch
          %265 = sbr.rel (%p263) target = $region52
        $region51: #{tpu_custom_call.1} parent=43 // pred_region
          %266 = dma.done [#allocation11], 256
        $region52: #{tpu_custom_call.1} parent=43 // pred_fallthru
          _
        %p267 = scmp.lt.s32.totalorder %s24, 1
        %s268 = scalar_select %p267, %s24, 1
        %s269 = smul.addr %s268, 8
        %s270 = scalar_lea.vmem %s0, %s269
        %p271 = pneg %p45
        %p272 = pneg %p42
        %s273 = sand.u32 %s58, 1
        %s274 = scalar_lea.sflag [#allocation8], %s273
        %s275 = sand.u32 %s58, 1
        %s276 = smul.addr %s275, 8
        %s277 = scalar_lea.vmem [#allocation7], %s276
        %p278 = pneg %p71
        %p279 = pneg %p68
        %p280 = pneg %p92
        %p281 = pneg %p89
        %p282 = pneg %p113
        %p283 = pneg %p110
        %p284 = pneg %p134
        %p285 = pneg %p131
        %p286 = pneg %p155
        %p287 = pneg %p152
        %p288 = pneg %p181
        %p289 = pneg %p178
        %s290 = sand.u32 %s168, 1
        %s291 = scalar_lea.sflag [#allocation9], %s290
        %s292 = sand.u32 %s168, 1
        %s293 = smul.addr %s292, 16
        %s294 = scalar_lea.vmem [#allocation12], %s293
        %p295 = scmp.lt.s32.totalorder %s24, 1
        %s296 = scalar_select %p295, %s24, 1
        %s297 = smul.addr %s296, 8
        %s298 = scalar_lea.vmem %s0, %s297
        %v299 = vld [vmem:[%s2] sm:$0xff]
        %v300 = vld [vmem:[%s298] sm:$0xff]
        %302 = vset.pattern.permute.xlu0 0
        %303 = vperm.xlu0 %302, %v299
        %v304 = vpop.permute.xlu0 %303
        %v306 = vmul.f32 %v300, %v304
        %307 = vset.pattern.permute.xlu0 1
        %308 = vperm.xlu0 %307, %v299
        %v309 = vpop.permute.xlu0 %308
        %v311 = vadd.f32 %v306, %v309
        %v312 = vmax.f32 %v311, 0.0
        %v313 = vld [vmem:[%s258] sm:$0xff]
        %v314 = vmul.f32 %v313, %v304
        %v315 = vadd.f32 %v314, %v309
        %v316 = vmax.f32 %v315, 0.0
        %vm317 = vcmask 31744
        %318 = vst.msk [vmem:[#allocation2] sm:$0xff] %vm317, 0.0
        %320 = vrot.lane.b32.xlu0 %v316, 4
        %v321 = vpop.permute.xlu0 %320
        %vm323 = vcmask 162848
        %324 = vst.msk [vmem:[#allocation2] sm:$0xff] %vm323, %v321
        %vm325 = vcmask 187552
        %326 = vst.msk [vmem:[#allocation2] sm:$0xff] %vm325, 0.0
        %vm327 = vcmask 23552
        %328 = vst.msk [vmem:[#allocation3] sm:$0xff] %vm327, 0.0
        %330 = vrot.lane.b32.xlu0 %v312, 3
        %v331 = vpop.permute.xlu0 %330
        %vm333 = vcmask 154648
        %334 = vst.msk [vmem:[#allocation3] sm:$0xff] %vm333, %v331
        %vm335 = vcmask 187544
        %336 = vst.msk [vmem:[#allocation3] sm:$0xff] %vm335, 0.0
        %v337 = vld [vmem:[#allocation2] sm:$0xff]
        %vm338 = vcmask 130048
        %339 = vst.msk [vmem:[#allocation5] sm:$0xff] %vm338, %v337
        %v340 = vld [vmem:[#allocation3] sm:$0xff]
        %341 = vst.msk [vmem:[#allocation5 + $0x8] sm:$0xff] %vm338, %v340
        %v342 = vld [vmem:[#allocation2] sm:$0xff]
        %344 = vrot.lane.b32.xlu0 %v342, 127
        %v345 = vpop.permute.xlu0 %344
        %347 = vst.msk [vmem:[#allocation5 + $0x10] sm:$0xff] %vm338, %v345
        %v348 = vld [vmem:[#allocation3] sm:$0xff]
        %350 = vrot.lane.b32.xlu0 %v348, 127
        %v351 = vpop.permute.xlu0 %350
        %353 = vst.msk [vmem:[#allocation5 + $0x18] sm:$0xff] %vm338, %v351
        %v354 = vld [vmem:[#allocation2] sm:$0xff]
        %356 = vrot.lane.b32.xlu0 %v354, 126
        %v357 = vpop.permute.xlu0 %356
        %359 = vst.msk [vmem:[#allocation5 + $0x20] sm:$0xff] %vm338, %v357
        %v360 = vld [vmem:[#allocation3] sm:$0xff]
        %362 = vrot.lane.b32.xlu0 %v360, 126
        %v363 = vpop.permute.xlu0 %362
        %365 = vst.msk [vmem:[#allocation5 + $0x28] sm:$0xff] %vm338, %v363
        %v366 = vld [vmem:[#allocation2] sm:$0xff]
        %368 = vrot.lane.b32.xlu0 %v366, 125
        %v369 = vpop.permute.xlu0 %368
        %371 = vst.msk [vmem:[#allocation5 + $0x30] sm:$0xff] %vm338, %v369
        %v372 = vld [vmem:[#allocation3] sm:$0xff]
        %374 = vrot.lane.b32.xlu0 %v372, 125
        %v375 = vpop.permute.xlu0 %374
        %377 = vst.msk [vmem:[#allocation5 + $0x38] sm:$0xff] %vm338, %v375
        %v378 = vld [vmem:[#allocation2] sm:$0xff]
        %380 = vrot.lane.b32.xlu0 %v378, 124
        %v381 = vpop.permute.xlu0 %380
        %383 = vst.msk [vmem:[#allocation5 + $0x40] sm:$0xff] %vm338, %v381
        %v384 = vld [vmem:[#allocation3] sm:$0xff]
        %386 = vrot.lane.b32.xlu0 %v384, 124
        %v387 = vpop.permute.xlu0 %386
        %389 = vst.msk [vmem:[#allocation5 + $0x48] sm:$0xff] %vm338, %v387
        %v390 = vld [vmem:[#allocation2] sm:$0xff]
        %392 = vrot.lane.b32.xlu0 %v390, 123
        %v393 = vpop.permute.xlu0 %392
        %395 = vst.msk [vmem:[#allocation5 + $0x50] sm:$0xff] %vm338, %v393
        %v396 = vld [vmem:[#allocation3] sm:$0xff]
        %398 = vrot.lane.b32.xlu0 %v396, 123
        %v399 = vpop.permute.xlu0 %398
        %401 = vst.msk [vmem:[#allocation5 + $0x58] sm:$0xff] %vm338, %v399
        %v402 = vld [vmem:[#allocation2] sm:$0xff]
        %404 = vrot.lane.b32.xlu0 %v402, 122
        %v405 = vpop.permute.xlu0 %404
        %407 = vst.msk [vmem:[#allocation5 + $0x60] sm:$0xff] %vm338, %v405
        %v408 = vld [vmem:[#allocation3] sm:$0xff]
        %410 = vrot.lane.b32.xlu0 %v408, 122
        %v411 = vpop.permute.xlu0 %410
        %413 = vst.msk [vmem:[#allocation5 + $0x68] sm:$0xff] %vm338, %v411
        %v414 = vld [vmem:[#allocation2] sm:$0xff]
        %416 = vrot.lane.b32.xlu0 %v414, 121
        %v417 = vpop.permute.xlu0 %416
        %419 = vst.msk [vmem:[#allocation5 + $0x70] sm:$0xff] %vm338, %v417
        %v420 = vld [vmem:[#allocation10] sm:$0xff]
        %v421 = vld [vmem:[#allocation10 + $0x8] sm:$0xff]
        %v422 = vld [vmem:[#allocation5] sm:$0xff]
        %v423 = vld [vmem:[#allocation5 + $0x8] sm:$0xff]
        %v424 = vld [vmem:[#allocation5 + $0x10] sm:$0xff]
        %v425 = vld [vmem:[#allocation5 + $0x18] sm:$0xff]
        %v426 = vld [vmem:[#allocation5 + $0x20] sm:$0xff]
        %v427 = vld [vmem:[#allocation5 + $0x28] sm:$0xff]
        %v428 = vld [vmem:[#allocation5 + $0x30] sm:$0xff]
        %v429 = vld [vmem:[#allocation5 + $0x38] sm:$0xff]
        %v430 = vld [vmem:[#allocation5 + $0x40] sm:$0xff]
        %v431 = vld [vmem:[#allocation5 + $0x48] sm:$0xff]
        %v432 = vld [vmem:[#allocation5 + $0x50] sm:$0xff]
        %v433 = vld [vmem:[#allocation5 + $0x58] sm:$0xff]
        %v434 = vld [vmem:[#allocation5 + $0x60] sm:$0xff]
        %v435 = vld [vmem:[#allocation5 + $0x68] sm:$0xff]
        %v436 = vld [vmem:[#allocation5 + $0x70] sm:$0xff]
        %v437 = vld [vmem:[%s2] sm:$0xff]
        %v438 = vld [vmem:[%s2 + $0x8] sm:$0xff]
        %440 = vset.pattern.permute.xlu0 2
        %441 = vperm.xlu0 %440, %v437
        %v442 = vpop.permute.xlu0 %441
        %445 = vset.pattern.permute.xlu0 2
        %446 = vperm.xlu0 %445, %v438
        %v447 = vpop.permute.xlu0 %446
        %vm449 = vcmask 982016
        %v451 = vsel %vm449, %v420, 0
        %v454 = vsel %vm449, %v421, 0
        %456 = vmatprep.subr.mxu0 0.0
        %v457 = vand.u32 %v422, 4294901760
        %458 = vmatpush1.msra.mxu0 %v457
        %459 = vmatprep.subr.mxu0 0.0
        %v460 = vand.u32 %v423, 4294901760
        %461 = vmatpush1.msra.mxu0 %v460
        %462 = vmatprep.subr.mxu0 0.0
        %v463 = vand.u32 %v424, 4294901760
        %464 = vmatpush1.msra.mxu0 %v463
        %465 = vmatprep.subr.mxu0 0.0
        %v466 = vand.u32 %v425, 4294901760
        %467 = vmatpush1.msra.mxu0 %v466
        %468 = vmatprep.subr.mxu0 0.0
        %v469 = vand.u32 %v426, 4294901760
        %470 = vmatpush1.msra.mxu0 %v469
        %471 = vmatprep.subr.mxu0 0.0
        %v472 = vand.u32 %v427, 4294901760
        %473 = vmatpush1.msra.mxu0 %v472
        %474 = vmatprep.subr.mxu0 0.0
        %v475 = vand.u32 %v428, 4294901760
        %476 = vmatpush1.msra.mxu0 %v475
        %477 = vmatprep.subr.mxu0 0.0
        %v478 = vand.u32 %v429, 4294901760
        %479 = vmatpush1.msra.mxu0 %v478
        %480 = vmatprep.subr.mxu0 0.0
        %v481 = vand.u32 %v430, 4294901760
        %482 = vmatpush1.msra.mxu0 %v481
        %483 = vmatprep.subr.mxu0 0.0
        %v484 = vand.u32 %v431, 4294901760
        %485 = vmatpush1.msra.mxu0 %v484
        %486 = vmatprep.subr.mxu0 0.0
        %v487 = vand.u32 %v432, 4294901760
        %488 = vmatpush1.msra.mxu0 %v487
        %489 = vmatprep.subr.mxu0 0.0
        %v490 = vand.u32 %v433, 4294901760
        %491 = vmatpush1.msra.mxu0 %v490
        %492 = vmatprep.subr.mxu0 0.0
        %v493 = vand.u32 %v434, 4294901760
        %494 = vmatpush1.msra.mxu0 %v493
        %495 = vmatprep.subr.mxu0 0.0
        %v496 = vand.u32 %v435, 4294901760
        %497 = vmatpush1.msra.mxu0 %v496
        %498 = vmatprep.subr.mxu0 0.0
        %v499 = vand.u32 %v436, 4294901760
        %500 = vmatpush1.msra.mxu0 %v499
        %501 = vmatprep.subr.mxu0 0.0
        %502 = vmatpush1.msra.mxu0 0.0
        %503 = vmatprep.subr.mxu0 0.0
        %504 = vmatpush1.msra.mxu0 0.0
        %505 = vmatprep.subr.mxu0 0.0
        %506 = vmatpush1.msra.mxu0 0.0
        %507 = vmatprep.subr.mxu0 0.0
        %508 = vmatpush1.msra.mxu0 0.0
        %509 = vmatprep.subr.mxu0 0.0
        %510 = vmatpush1.msra.mxu0 0.0
        %511 = vmatprep.subr.mxu0 0.0
        %512 = vmatpush1.msra.mxu0 0.0
        %513 = vmatprep.subr.mxu0 0.0
        %514 = vmatpush1.msra.mxu0 0.0
        %515 = vmatprep.subr.mxu0 0.0
        %516 = vmatpush1.msra.mxu0 0.0
        %517 = vmatprep.subr.mxu0 0.0
        %518 = vmatpush1.msra.mxu0 0.0
        %519 = vmatprep.subr.mxu0 0.0
        %520 = vmatpush1.msra.mxu0 0.0
        %521 = vmatprep.subr.mxu0 0.0
        %522 = vmatpush1.msra.mxu0 0.0
        %523 = vmatprep.subr.mxu0 0.0
        %524 = vmatpush1.msra.mxu0 0.0
        %525 = vmatprep.subr.mxu0 0.0
        %526 = vmatpush1.msra.mxu0 0.0
        %527 = vmatprep.subr.mxu0 0.0
        %528 = vmatpush1.msra.mxu0 0.0
        %529 = vmatprep.subr.mxu0 0.0
        %530 = vmatpush1.msra.mxu0 0.0
        %531 = vmatprep.subr.mxu0 0.0
        %532 = vmatpush1.msra.mxu0 0.0
        %533 = vmatprep.subr.mxu0 0.0
        %534 = vmatpush1.msra.mxu0 0.0
        %535 = vmatprep.mubr.f32.mxu0 0.0
        %v536 = vand.u32 %v451, 4294901760
        %v537 = vsub.f32 %v451, %v536
        %v538 = vand.u32 %v537, 4294901760
        %v539 = vsub.f32 %v537, %v538
        %v540 = vand.u32 %v539, 4294901760
        %541 = vmatmul.mubr.f32.gmra.mrb[0].mxu0 %v540
        %v542 = vpop.f32.mrb[0].mxu0
        %v543 = vadd.f32 %v442, %v542
        %v544 = vpop.f32.mrb[0].mxu0
        %545 = vmatprep.mubr.f32.mxu0 0.0
        %v546 = vand.u32 %v454, 4294901760
        %v547 = vsub.f32 %v454, %v546
        %v548 = vand.u32 %v547, 4294901760
        %v549 = vsub.f32 %v547, %v548
        %v550 = vand.u32 %v549, 4294901760
        %551 = vmatmul.mubr.f32.gmra.mrb[0].mxu0 %v550
        %v552 = vpop.f32.mrb[0].mxu0
        %v553 = vadd.f32 %v447, %v552
        %v554 = vpop.f32.mrb[0].mxu0
        %555 = vdwg.mxu0
        %556 = vmatprep.subr.mxu0 0.0
        %v557 = vand.u32 %v422, 4294901760
        %v558 = vsub.f32 %v422, %v557
        %v559 = vand.u32 %v558, 4294901760
        %v560 = vsub.f32 %v558, %v559
        %v561 = vand.u32 %v560, 4294901760
        %562 = vmatpush1.msra.mxu0 %v561
        %563 = vmatprep.subr.mxu0 0.0
        %v564 = vand.u32 %v423, 4294901760
        %v565 = vsub.f32 %v423, %v564
        %v566 = vand.u32 %v565, 4294901760
        %v567 = vsub.f32 %v565, %v566
        %v568 = vand.u32 %v567, 4294901760
        %569 = vmatpush1.msra.mxu0 %v568
        %570 = vmatprep.subr.mxu0 0.0
        %v571 = vand.u32 %v424, 4294901760
        %v572 = vsub.f32 %v424, %v571
        %v573 = vand.u32 %v572, 4294901760
        %v574 = vsub.f32 %v572, %v573
        %v575 = vand.u32 %v574, 4294901760
        %576 = vmatpush1.msra.mxu0 %v575
        %577 = vmatprep.subr.mxu0 0.0
        %v578 = vand.u32 %v425, 4294901760
        %v579 = vsub.f32 %v425, %v578
        %v580 = vand.u32 %v579, 4294901760
        %v581 = vsub.f32 %v579, %v580
        %v582 = vand.u32 %v581, 4294901760
        %583 = vmatpush1.msra.mxu0 %v582
        %584 = vmatprep.subr.mxu0 0.0
        %v585 = vand.u32 %v426, 4294901760
        %v586 = vsub.f32 %v426, %v585
        %v587 = vand.u32 %v586, 4294901760
        %v588 = vsub.f32 %v586, %v587
        %v589 = vand.u32 %v588, 4294901760
        %590 = vmatpush1.msra.mxu0 %v589
        %591 = vmatprep.subr.mxu0 0.0
        %v592 = vand.u32 %v427, 4294901760
        %v593 = vsub.f32 %v427, %v592
        %v594 = vand.u32 %v593, 4294901760
        %v595 = vsub.f32 %v593, %v594
        %v596 = vand.u32 %v595, 4294901760
        %597 = vmatpush1.msra.mxu0 %v596
        %598 = vmatprep.subr.mxu0 0.0
        %v599 = vand.u32 %v428, 4294901760
        %v600 = vsub.f32 %v428, %v599
        %v601 = vand.u32 %v600, 4294901760
        %v602 = vsub.f32 %v600, %v601
        %v603 = vand.u32 %v602, 4294901760
        %604 = vmatpush1.msra.mxu0 %v603
        %605 = vmatprep.subr.mxu0 0.0
        %v606 = vand.u32 %v429, 4294901760
        %v607 = vsub.f32 %v429, %v606
        %v608 = vand.u32 %v607, 4294901760
        %v609 = vsub.f32 %v607, %v608
        %v610 = vand.u32 %v609, 4294901760
        %611 = vmatpush1.msra.mxu0 %v610
        %612 = vmatprep.subr.mxu0 0.0
        %v613 = vand.u32 %v430, 4294901760
        %v614 = vsub.f32 %v430, %v613
        %v615 = vand.u32 %v614, 4294901760
        %v616 = vsub.f32 %v614, %v615
        %v617 = vand.u32 %v616, 4294901760
        %618 = vmatpush1.msra.mxu0 %v617
        %619 = vmatprep.subr.mxu0 0.0
        %v620 = vand.u32 %v431, 4294901760
        %v621 = vsub.f32 %v431, %v620
        %v622 = vand.u32 %v621, 4294901760
        %v623 = vsub.f32 %v621, %v622
        %v624 = vand.u32 %v623, 4294901760
        %625 = vmatpush1.msra.mxu0 %v624
        %626 = vmatprep.subr.mxu0 0.0
        %v627 = vand.u32 %v432, 4294901760
        %v628 = vsub.f32 %v432, %v627
        %v629 = vand.u32 %v628, 4294901760
        %v630 = vsub.f32 %v628, %v629
        %v631 = vand.u32 %v630, 4294901760
        %632 = vmatpush1.msra.mxu0 %v631
        %633 = vmatprep.subr.mxu0 0.0
        %v634 = vand.u32 %v433, 4294901760
        %v635 = vsub.f32 %v433, %v634
        %v636 = vand.u32 %v635, 4294901760
        %v637 = vsub.f32 %v635, %v636
        %v638 = vand.u32 %v637, 4294901760
        %639 = vmatpush1.msra.mxu0 %v638
        %640 = vmatprep.subr.mxu0 0.0
        %v641 = vand.u32 %v434, 4294901760
        %v642 = vsub.f32 %v434, %v641
        %v643 = vand.u32 %v642, 4294901760
        %v644 = vsub.f32 %v642, %v643
        %v645 = vand.u32 %v644, 4294901760
        %646 = vmatpush1.msra.mxu0 %v645
        %647 = vmatprep.subr.mxu0 0.0
        %v648 = vand.u32 %v435, 4294901760
        %v649 = vsub.f32 %v435, %v648
        %v650 = vand.u32 %v649, 4294901760
        %v651 = vsub.f32 %v649, %v650
        %v652 = vand.u32 %v651, 4294901760
        %653 = vmatpush1.msra.mxu0 %v652
        %654 = vmatprep.subr.mxu0 0.0
        %v655 = vand.u32 %v436, 4294901760
        %v656 = vsub.f32 %v436, %v655
        %v657 = vand.u32 %v656, 4294901760
        %v658 = vsub.f32 %v656, %v657
        %v659 = vand.u32 %v658, 4294901760
        %660 = vmatpush1.msra.mxu0 %v659
        %661 = vmatprep.subr.mxu0 0.0
        %662 = vmatpush1.msra.mxu0 0.0
        %663 = vmatprep.subr.mxu0 0.0
        %664 = vmatpush1.msra.mxu0 0.0
        %665 = vmatprep.subr.mxu0 0.0
        %666 = vmatpush1.msra.mxu0 0.0
        %667 = vmatprep.subr.mxu0 0.0
        %668 = vmatpush1.msra.mxu0 0.0
        %669 = vmatprep.subr.mxu0 0.0
        %670 = vmatpush1.msra.mxu0 0.0
        %671 = vmatprep.subr.mxu0 0.0
        %672 = vmatpush1.msra.mxu0 0.0
        %673 = vmatprep.subr.mxu0 0.0
        %674 = vmatpush1.msra.mxu0 0.0
        %675 = vmatprep.subr.mxu0 0.0
        %676 = vmatpush1.msra.mxu0 0.0
        %677 = vmatprep.subr.mxu0 0.0
        %678 = vmatpush1.msra.mxu0 0.0
        %679 = vmatprep.subr.mxu0 0.0
        %680 = vmatpush1.msra.mxu0 0.0
        %681 = vmatprep.subr.mxu0 0.0
        %682 = vmatpush1.msra.mxu0 0.0
        %683 = vmatprep.subr.mxu0 0.0
        %684 = vmatpush1.msra.mxu0 0.0
        %685 = vmatprep.subr.mxu0 0.0
        %686 = vmatpush1.msra.mxu0 0.0
        %687 = vmatprep.subr.mxu0 0.0
        %688 = vmatpush1.msra.mxu0 0.0
        %689 = vmatprep.subr.mxu0 0.0
        %690 = vmatpush1.msra.mxu0 0.0
        %691 = vmatprep.subr.mxu0 0.0
        %692 = vmatpush1.msra.mxu0 0.0
        %693 = vmatprep.subr.mxu0 0.0
        %694 = vmatpush1.msra.mxu0 0.0
        %695 = vmatprep.mubr.f32.mxu0 0.0
        %v696 = vand.u32 %v451, 4294901760
        %697 = vmatmul.mubr.f32.gmra.mrb[0].mxu0 %v696
        %v698 = vpop.f32.mrb[0].mxu0
        %v699 = vadd.f32 %v543, %v698
        %v700 = vpop.f32.mrb[0].mxu0
        %701 = vmatprep.mubr.f32.mxu0 0.0
        %v702 = vand.u32 %v454, 4294901760
        %703 = vmatmul.mubr.f32.gmra.mrb[0].mxu0 %v702
        %v704 = vpop.f32.mrb[0].mxu0
        %v705 = vadd.f32 %v553, %v704
        %v706 = vpop.f32.mrb[0].mxu0
        %707 = vdwg.mxu0
        %708 = vmatprep.subr.mxu0 0.0
        %v709 = vand.u32 %v422, 4294901760
        %v710 = vsub.f32 %v422, %v709
        %711 = vmatpush1.msra.mxu0 %v710
        %712 = vmatprep.subr.mxu0 0.0
        %v713 = vand.u32 %v423, 4294901760
        %v714 = vsub.f32 %v423, %v713
        %715 = vmatpush1.msra.mxu0 %v714
        %716 = vmatprep.subr.mxu0 0.0
        %v717 = vand.u32 %v424, 4294901760
        %v718 = vsub.f32 %v424, %v717
        %719 = vmatpush1.msra.mxu0 %v718
        %720 = vmatprep.subr.mxu0 0.0
        %v721 = vand.u32 %v425, 4294901760
        %v722 = vsub.f32 %v425, %v721
        %723 = vmatpush1.msra.mxu0 %v722
        %724 = vmatprep.subr.mxu0 0.0
        %v725 = vand.u32 %v426, 4294901760
        %v726 = vsub.f32 %v426, %v725
        %727 = vmatpush1.msra.mxu0 %v726
        %728 = vmatprep.subr.mxu0 0.0
        %v729 = vand.u32 %v427, 4294901760
        %v730 = vsub.f32 %v427, %v729
        %731 = vmatpush1.msra.mxu0 %v730
        %732 = vmatprep.subr.mxu0 0.0
        %v733 = vand.u32 %v428, 4294901760
        %v734 = vsub.f32 %v428, %v733
        %735 = vmatpush1.msra.mxu0 %v734
        %736 = vmatprep.subr.mxu0 0.0
        %v737 = vand.u32 %v429, 4294901760
        %v738 = vsub.f32 %v429, %v737
        %739 = vmatpush1.msra.mxu0 %v738
        %740 = vmatprep.subr.mxu0 0.0
        %v741 = vand.u32 %v430, 4294901760
        %v742 = vsub.f32 %v430, %v741
        %743 = vmatpush1.msra.mxu0 %v742
        %744 = vmatprep.subr.mxu0 0.0
        %v745 = vand.u32 %v431, 4294901760
        %v746 = vsub.f32 %v431, %v745
        %747 = vmatpush1.msra.mxu0 %v746
        %748 = vmatprep.subr.mxu0 0.0
        %v749 = vand.u32 %v432, 4294901760
        %v750 = vsub.f32 %v432, %v749
        %751 = vmatpush1.msra.mxu0 %v750
        %752 = vmatprep.subr.mxu0 0.0
        %v753 = vand.u32 %v433, 4294901760
        %v754 = vsub.f32 %v433, %v753
        %755 = vmatpush1.msra.mxu0 %v754
        %756 = vmatprep.subr.mxu0 0.0
        %v757 = vand.u32 %v434, 4294901760
        %v758 = vsub.f32 %v434, %v757
        %759 = vmatpush1.msra.mxu0 %v758
        %760 = vmatprep.subr.mxu0 0.0
        %v761 = vand.u32 %v435, 4294901760
        %v762 = vsub.f32 %v435, %v761
        %763 = vmatpush1.msra.mxu0 %v762
        %764 = vmatprep.subr.mxu0 0.0
        %v765 = vand.u32 %v436, 4294901760
        %v766 = vsub.f32 %v436, %v765
        %767 = vmatpush1.msra.mxu0 %v766
        %768 = vmatprep.subr.mxu0 0.0
        %769 = vmatpush1.msra.mxu0 0.0
        %770 = vmatprep.subr.mxu0 0.0
        %771 = vmatpush1.msra.mxu0 0.0
        %772 = vmatprep.subr.mxu0 0.0
        %773 = vmatpush1.msra.mxu0 0.0
        %774 = vmatprep.subr.mxu0 0.0
        %775 = vmatpush1.msra.mxu0 0.0
        %776 = vmatprep.subr.mxu0 0.0
        %777 = vmatpush1.msra.mxu0 0.0
        %778 = vmatprep.subr.mxu0 0.0
        %779 = vmatpush1.msra.mxu0 0.0
        %780 = vmatprep.subr.mxu0 0.0
        %781 = vmatpush1.msra.mxu0 0.0
        %782 = vmatprep.subr.mxu0 0.0
        %783 = vmatpush1.msra.mxu0 0.0
        %784 = vmatprep.subr.mxu0 0.0
        %785 = vmatpush1.msra.mxu0 0.0
        %786 = vmatprep.subr.mxu0 0.0
        %787 = vmatpush1.msra.mxu0 0.0
        %788 = vmatprep.subr.mxu0 0.0
        %789 = vmatpush1.msra.mxu0 0.0
        %790 = vmatprep.subr.mxu0 0.0
        %791 = vmatpush1.msra.mxu0 0.0
        %792 = vmatprep.subr.mxu0 0.0
        %793 = vmatpush1.msra.mxu0 0.0
        %794 = vmatprep.subr.mxu0 0.0
        %795 = vmatpush1.msra.mxu0 0.0
        %796 = vmatprep.subr.mxu0 0.0
        %797 = vmatpush1.msra.mxu0 0.0
        %798 = vmatprep.subr.mxu0 0.0
        %799 = vmatpush1.msra.mxu0 0.0
        %800 = vmatprep.subr.mxu0 0.0
        %801 = vmatpush1.msra.mxu0 0.0
        %802 = vmatprep.mubr.f32.mxu0 0.0
        %v803 = vand.u32 %v451, 4294901760
        %v804 = vsub.f32 %v451, %v803
        %805 = vmatmul.mubr.f32.gmra.mrb[0].mxu0 %v804
        %v806 = vpop.f32.mrb[0].mxu0
        %v807 = vadd.f32 %v699, %v806
        %v808 = vpop.f32.mrb[0].mxu0
        %809 = vmatprep.mubr.f32.mxu0 0.0
        %v810 = vand.u32 %v454, 4294901760
        %v811 = vsub.f32 %v454, %v810
        %812 = vmatmul.mubr.f32.gmra.mrb[0].mxu0 %v811
        %v813 = vpop.f32.mrb[0].mxu0
        %v814 = vadd.f32 %v705, %v813
        %v815 = vpop.f32.mrb[0].mxu0
        %816 = vdwg.mxu0
        %817 = vmatprep.subr.mxu0 0.0
        %v818 = vand.u32 %v422, 4294901760
        %819 = vmatpush1.msra.mxu0 %v818
        %820 = vmatprep.subr.mxu0 0.0
        %v821 = vand.u32 %v423, 4294901760
        %822 = vmatpush1.msra.mxu0 %v821
        %823 = vmatprep.subr.mxu0 0.0
        %v824 = vand.u32 %v424, 4294901760
        %825 = vmatpush1.msra.mxu0 %v824
        %826 = vmatprep.subr.mxu0 0.0
        %v827 = vand.u32 %v425, 4294901760
        %828 = vmatpush1.msra.mxu0 %v827
        %829 = vmatprep.subr.mxu0 0.0
        %v830 = vand.u32 %v426, 4294901760
        %831 = vmatpush1.msra.mxu0 %v830
        %832 = vmatprep.subr.mxu0 0.0
        %v833 = vand.u32 %v427, 4294901760
        %834 = vmatpush1.msra.mxu0 %v833
        %835 = vmatprep.subr.mxu0 0.0
        %v836 = vand.u32 %v428, 4294901760
        %837 = vmatpush1.msra.mxu0 %v836
        %838 = vmatprep.subr.mxu0 0.0
        %v839 = vand.u32 %v429, 4294901760
        %840 = vmatpush1.msra.mxu0 %v839
        %841 = vmatprep.subr.mxu0 0.0
        %v842 = vand.u32 %v430, 4294901760
        %843 = vmatpush1.msra.mxu0 %v842
        %844 = vmatprep.subr.mxu0 0.0
        %v845 = vand.u32 %v431, 4294901760
        %846 = vmatpush1.msra.mxu0 %v845
        %847 = vmatprep.subr.mxu0 0.0
        %v848 = vand.u32 %v432, 4294901760
        %849 = vmatpush1.msra.mxu0 %v848
        %850 = vmatprep.subr.mxu0 0.0
        %v851 = vand.u32 %v433, 4294901760
        %852 = vmatpush1.msra.mxu0 %v851
        %853 = vmatprep.subr.mxu0 0.0
        %v854 = vand.u32 %v434, 4294901760
        %855 = vmatpush1.msra.mxu0 %v854
        %856 = vmatprep.subr.mxu0 0.0
        %v857 = vand.u32 %v435, 4294901760
        %858 = vmatpush1.msra.mxu0 %v857
        %859 = vmatprep.subr.mxu0 0.0
        %v860 = vand.u32 %v436, 4294901760
        %861 = vmatpush1.msra.mxu0 %v860
        %862 = vmatprep.subr.mxu0 0.0
        %863 = vmatpush1.msra.mxu0 0.0
        %864 = vmatprep.subr.mxu0 0.0
        %865 = vmatpush1.msra.mxu0 0.0
        %866 = vmatprep.subr.mxu0 0.0
        %867 = vmatpush1.msra.mxu0 0.0
        %868 = vmatprep.subr.mxu0 0.0
        %869 = vmatpush1.msra.mxu0 0.0
        %870 = vmatprep.subr.mxu0 0.0
        %871 = vmatpush1.msra.mxu0 0.0
        %872 = vmatprep.subr.mxu0 0.0
        %873 = vmatpush1.msra.mxu0 0.0
        %874 = vmatprep.subr.mxu0 0.0
        %875 = vmatpush1.msra.mxu0 0.0
        %876 = vmatprep.subr.mxu0 0.0
        %877 = vmatpush1.msra.mxu0 0.0
        %878 = vmatprep.subr.mxu0 0.0
        %879 = vmatpush1.msra.mxu0 0.0
        %880 = vmatprep.subr.mxu0 0.0
        %881 = vmatpush1.msra.mxu0 0.0
        %882 = vmatprep.subr.mxu0 0.0
        %883 = vmatpush1.msra.mxu0 0.0
        %884 = vmatprep.subr.mxu0 0.0
        %885 = vmatpush1.msra.mxu0 0.0
        %886 = vmatprep.subr.mxu0 0.0
        %887 = vmatpush1.msra.mxu0 0.0
        %888 = vmatprep.subr.mxu0 0.0
        %889 = vmatpush1.msra.mxu0 0.0
        %890 = vmatprep.subr.mxu0 0.0
        %891 = vmatpush1.msra.mxu0 0.0
        %892 = vmatprep.subr.mxu0 0.0
        %893 = vmatpush1.msra.mxu0 0.0
        %894 = vmatprep.subr.mxu0 0.0
        %895 = vmatpush1.msra.mxu0 0.0
        %896 = vmatprep.mubr.f32.mxu0 0.0
        %v897 = vand.u32 %v451, 4294901760
        %v898 = vsub.f32 %v451, %v897
        %v899 = vand.u32 %v898, 4294901760
        %900 = vmatmul.mubr.f32.gmra.mrb[0].mxu0 %v899
        %v901 = vpop.f32.mrb[0].mxu0
        %v902 = vadd.f32 %v807, %v901
        %v903 = vpop.f32.mrb[0].mxu0
        %904 = vmatprep.mubr.f32.mxu0 0.0
        %v905 = vand.u32 %v454, 4294901760
        %v906 = vsub.f32 %v454, %v905
        %v907 = vand.u32 %v906, 4294901760
        %908 = vmatmul.mubr.f32.gmra.mrb[0].mxu0 %v907
        %v909 = vpop.f32.mrb[0].mxu0
        %v910 = vadd.f32 %v814, %v909
        %v911 = vpop.f32.mrb[0].mxu0
        %912 = vdwg.mxu0
        %913 = vmatprep.subr.mxu0 0.0
        %v914 = vand.u32 %v422, 4294901760
        %v915 = vsub.f32 %v422, %v914
        %v916 = vand.u32 %v915, 4294901760
        %917 = vmatpush1.msra.mxu0 %v916
        %918 = vmatprep.subr.mxu0 0.0
        %v919 = vand.u32 %v423, 4294901760
        %v920 = vsub.f32 %v423, %v919
        %v921 = vand.u32 %v920, 4294901760
        %922 = vmatpush1.msra.mxu0 %v921
        %923 = vmatprep.subr.mxu0 0.0
        %v924 = vand.u32 %v424, 4294901760
        %v925 = vsub.f32 %v424, %v924
        %v926 = vand.u32 %v925, 4294901760
        %927 = vmatpush1.msra.mxu0 %v926
        %928 = vmatprep.subr.mxu0 0.0
        %v929 = vand.u32 %v425, 4294901760
        %v930 = vsub.f32 %v425, %v929
        %v931 = vand.u32 %v930, 4294901760
        %932 = vmatpush1.msra.mxu0 %v931
        %933 = vmatprep.subr.mxu0 0.0
        %v934 = vand.u32 %v426, 4294901760
        %v935 = vsub.f32 %v426, %v934
        %v936 = vand.u32 %v935, 4294901760
        %937 = vmatpush1.msra.mxu0 %v936
        %938 = vmatprep.subr.mxu0 0.0
        %v939 = vand.u32 %v427, 4294901760
        %v940 = vsub.f32 %v427, %v939
        %v941 = vand.u32 %v940, 4294901760
        %942 = vmatpush1.msra.mxu0 %v941
        %943 = vmatprep.subr.mxu0 0.0
        %v944 = vand.u32 %v428, 4294901760
        %v945 = vsub.f32 %v428, %v944
        %v946 = vand.u32 %v945, 4294901760
        %947 = vmatpush1.msra.mxu0 %v946
        %948 = vmatprep.subr.mxu0 0.0
        %v949 = vand.u32 %v429, 4294901760
        %v950 = vsub.f32 %v429, %v949
        %v951 = vand.u32 %v950, 4294901760
        %952 = vmatpush1.msra.mxu0 %v951
        %953 = vmatprep.subr.mxu0 0.0
        %v954 = vand.u32 %v430, 4294901760
        %v955 = vsub.f32 %v430, %v954
        %v956 = vand.u32 %v955, 4294901760
        %957 = vmatpush1.msra.mxu0 %v956
        %958 = vmatprep.subr.mxu0 0.0
        %v959 = vand.u32 %v431, 4294901760
        %v960 = vsub.f32 %v431, %v959
        %v961 = vand.u32 %v960, 4294901760
        %962 = vmatpush1.msra.mxu0 %v961
        %963 = vmatprep.subr.mxu0 0.0
        %v964 = vand.u32 %v432, 4294901760
        %v965 = vsub.f32 %v432, %v964
        %v966 = vand.u32 %v965, 4294901760
        %967 = vmatpush1.msra.mxu0 %v966
        %968 = vmatprep.subr.mxu0 0.0
        %v969 = vand.u32 %v433, 4294901760
        %v970 = vsub.f32 %v433, %v969
        %v971 = vand.u32 %v970, 4294901760
        %972 = vmatpush1.msra.mxu0 %v971
        %973 = vmatprep.subr.mxu0 0.0
        %v974 = vand.u32 %v434, 4294901760
        %v975 = vsub.f32 %v434, %v974
        %v976 = vand.u32 %v975, 4294901760
        %977 = vmatpush1.msra.mxu0 %v976
        %978 = vmatprep.subr.mxu0 0.0
        %v979 = vand.u32 %v435, 4294901760
        %v980 = vsub.f32 %v435, %v979
        %v981 = vand.u32 %v980, 4294901760
        %982 = vmatpush1.msra.mxu0 %v981
        %983 = vmatprep.subr.mxu0 0.0
        %v984 = vand.u32 %v436, 4294901760
        %v985 = vsub.f32 %v436, %v984
        %v986 = vand.u32 %v985, 4294901760
        %987 = vmatpush1.msra.mxu0 %v986
        %988 = vmatprep.subr.mxu0 0.0
        %989 = vmatpush1.msra.mxu0 0.0
        %990 = vmatprep.subr.mxu0 0.0
        %991 = vmatpush1.msra.mxu0 0.0
        %992 = vmatprep.subr.mxu0 0.0
        %993 = vmatpush1.msra.mxu0 0.0
        %994 = vmatprep.subr.mxu0 0.0
        %995 = vmatpush1.msra.mxu0 0.0
        %996 = vmatprep.subr.mxu0 0.0
        %997 = vmatpush1.msra.mxu0 0.0
        %998 = vmatprep.subr.mxu0 0.0
        %999 = vmatpush1.msra.mxu0 0.0
        %1000 = vmatprep.subr.mxu0 0.0
        %1001 = vmatpush1.msra.mxu0 0.0
        %1002 = vmatprep.subr.mxu0 0.0
        %1003 = vmatpush1.msra.mxu0 0.0
        %1004 = vmatprep.subr.mxu0 0.0
        %1005 = vmatpush1.msra.mxu0 0.0
        %1006 = vmatprep.subr.mxu0 0.0
        %1007 = vmatpush1.msra.mxu0 0.0
        %1008 = vmatprep.subr.mxu0 0.0
        %1009 = vmatpush1.msra.mxu0 0.0
        %1010 = vmatprep.subr.mxu0 0.0
        %1011 = vmatpush1.msra.mxu0 0.0
        %1012 = vmatprep.subr.mxu0 0.0
        %1013 = vmatpush1.msra.mxu0 0.0
        %1014 = vmatprep.subr.mxu0 0.0
        %1015 = vmatpush1.msra.mxu0 0.0
        %1016 = vmatprep.subr.mxu0 0.0
        %1017 = vmatpush1.msra.mxu0 0.0
        %1018 = vmatprep.subr.mxu0 0.0
        %1019 = vmatpush1.msra.mxu0 0.0
        %1020 = vmatprep.subr.mxu0 0.0
        %1021 = vmatpush1.msra.mxu0 0.0
        %1022 = vmatprep.mubr.f32.mxu0 0.0
        %v1023 = vand.u32 %v451, 4294901760
        %1024 = vmatmul.mubr.f32.gmra.mrb[0].mxu0 %v1023
        %v1025 = vpop.f32.mrb[0].mxu0
        %v1026 = vadd.f32 %v902, %v1025
        %v1027 = vpop.f32.mrb[0].mxu0
        %1028 = vmatprep.mubr.f32.mxu0 0.0
        %v1029 = vand.u32 %v454, 4294901760
        %1030 = vmatmul.mubr.f32.gmra.mrb[0].mxu0 %v1029
        %v1031 = vpop.f32.mrb[0].mxu0
        %v1032 = vadd.f32 %v910, %v1031
        %v1033 = vpop.f32.mrb[0].mxu0
        %1034 = vdwg.mxu0
        %1035 = vmatprep.subr.mxu0 0.0
        %v1036 = vand.u32 %v422, 4294901760
        %1037 = vmatpush1.msra.mxu0 %v1036
        %1038 = vmatprep.subr.mxu0 0.0
        %v1039 = vand.u32 %v423, 4294901760
        %1040 = vmatpush1.msra.mxu0 %v1039
        %1041 = vmatprep.subr.mxu0 0.0
        %v1042 = vand.u32 %v424, 4294901760
        %1043 = vmatpush1.msra.mxu0 %v1042
        %1044 = vmatprep.subr.mxu0 0.0
        %v1045 = vand.u32 %v425, 4294901760
        %1046 = vmatpush1.msra.mxu0 %v1045
        %1047 = vmatprep.subr.mxu0 0.0
        %v1048 = vand.u32 %v426, 4294901760
        %1049 = vmatpush1.msra.mxu0 %v1048
        %1050 = vmatprep.subr.mxu0 0.0
        %v1051 = vand.u32 %v427, 4294901760
        %1052 = vmatpush1.msra.mxu0 %v1051
        %1053 = vmatprep.subr.mxu0 0.0
        %v1054 = vand.u32 %v428, 4294901760
        %1055 = vmatpush1.msra.mxu0 %v1054
        %1056 = vmatprep.subr.mxu0 0.0
        %v1057 = vand.u32 %v429, 4294901760
        %1058 = vmatpush1.msra.mxu0 %v1057
        %1059 = vmatprep.subr.mxu0 0.0
        %v1060 = vand.u32 %v430, 4294901760
        %1061 = vmatpush1.msra.mxu0 %v1060
        %1062 = vmatprep.subr.mxu0 0.0
        %v1063 = vand.u32 %v431, 4294901760
        %1064 = vmatpush1.msra.mxu0 %v1063
        %1065 = vmatprep.subr.mxu0 0.0
        %v1066 = vand.u32 %v432, 4294901760
        %1067 = vmatpush1.msra.mxu0 %v1066
        %1068 = vmatprep.subr.mxu0 0.0
        %v1069 = vand.u32 %v433, 4294901760
        %1070 = vmatpush1.msra.mxu0 %v1069
        %1071 = vmatprep.subr.mxu0 0.0
        %v1072 = vand.u32 %v434, 4294901760
        %1073 = vmatpush1.msra.mxu0 %v1072
        %1074 = vmatprep.subr.mxu0 0.0
        %v1075 = vand.u32 %v435, 4294901760
        %1076 = vmatpush1.msra.mxu0 %v1075
        %1077 = vmatprep.subr.mxu0 0.0
        %v1078 = vand.u32 %v436, 4294901760
        %1079 = vmatpush1.msra.mxu0 %v1078
        %1080 = vmatprep.subr.mxu0 0.0
        %1081 = vmatpush1.msra.mxu0 0.0
        %1082 = vmatprep.subr.mxu0 0.0
        %1083 = vmatpush1.msra.mxu0 0.0
        %1084 = vmatprep.subr.mxu0 0.0
        %1085 = vmatpush1.msra.mxu0 0.0
        %1086 = vmatprep.subr.mxu0 0.0
        %1087 = vmatpush1.msra.mxu0 0.0
        %1088 = vmatprep.subr.mxu0 0.0
        %1089 = vmatpush1.msra.mxu0 0.0
        %1090 = vmatprep.subr.mxu0 0.0
        %1091 = vmatpush1.msra.mxu0 0.0
        %1092 = vmatprep.subr.mxu0 0.0
        %1093 = vmatpush1.msra.mxu0 0.0
        %1094 = vmatprep.subr.mxu0 0.0
        %1095 = vmatpush1.msra.mxu0 0.0
        %1096 = vmatprep.subr.mxu0 0.0
        %1097 = vmatpush1.msra.mxu0 0.0
        %1098 = vmatprep.subr.mxu0 0.0
        %1099 = vmatpush1.msra.mxu0 0.0
        %1100 = vmatprep.subr.mxu0 0.0
        %1101 = vmatpush1.msra.mxu0 0.0
        %1102 = vmatprep.subr.mxu0 0.0
        %1103 = vmatpush1.msra.mxu0 0.0
        %1104 = vmatprep.subr.mxu0 0.0
        %1105 = vmatpush1.msra.mxu0 0.0
        %1106 = vmatprep.subr.mxu0 0.0
        %1107 = vmatpush1.msra.mxu0 0.0
        %1108 = vmatprep.subr.mxu0 0.0
        %1109 = vmatpush1.msra.mxu0 0.0
        %1110 = vmatprep.subr.mxu0 0.0
        %1111 = vmatpush1.msra.mxu0 0.0
        %1112 = vmatprep.subr.mxu0 0.0
        %1113 = vmatpush1.msra.mxu0 0.0
        %1114 = vmatprep.mubr.f32.mxu0 0.0
        %v1115 = vand.u32 %v451, 4294901760
        %1116 = vmatmul.mubr.f32.gmra.mrb[0].mxu0 %v1115
        %v1117 = vpop.f32.mrb[0].mxu0
        %v1118 = vadd.f32 %v1026, %v1117
        %v1119 = vpop.f32.mrb[0].mxu0
        %1120 = vmatprep.mubr.f32.mxu0 0.0
        %v1121 = vand.u32 %v454, 4294901760
        %1122 = vmatmul.mubr.f32.gmra.mrb[0].mxu0 %v1121
        %v1123 = vpop.f32.mrb[0].mxu0
        %v1124 = vadd.f32 %v1032, %v1123
        %v1125 = vpop.f32.mrb[0].mxu0
        %1126 = vdwg.mxu0
        %v1127 = vmax.f32 %v1118, 0.0
        %v1128 = vmax.f32 %v1124, 0.0
        %vm1129 = vcmask 56320
        %1130 = vst.msk [vmem:[#allocation4] sm:$0xff] %vm1129, 0.0
        %1131 = vst.msk [vmem:[#allocation4 + $0x8] sm:$0xff] %vm1129, 0.0
        %1134 = vrot.lane.b32.xlu0 %v1127, 7
        %v1135 = vpop.permute.xlu0 %1134
        %1136 = vrot.lane.b32.xlu0 %v1128, 7
        %v1137 = vpop.permute.xlu0 %1136
        %vm1140 = vcmask 187448
        %1141 = vst.msk [vmem:[#allocation4] sm:$0xff] %vm1140, %v1135
        %1142 = vst.msk [vmem:[#allocation4 + $0x8] sm:$0xff] %vm1140, %v1137
        %vm1143 = vcmask 244920
        %1144 = vst.msk [vmem:[#allocation4] sm:$0xff] %vm1143, 0.0
        %1145 = vst.msk [vmem:[#allocation4 + $0x8] sm:$0xff] %vm1143, 0.0
        %v1146 = vld [vmem:[#allocation4] sm:$0xff]
        %v1147 = vld [vmem:[#allocation4 + $0x8] sm:$0xff]
        %1148 = vst.msk [vmem:[#allocation6] sm:$0xff] %vm338, %v1146
        %1149 = vst.msk [vmem:[#allocation6 + $0x8] sm:$0xff] %vm338, %v1147
        %v1150 = vld [vmem:[#allocation4] sm:$0xff]
        %v1151 = vld [vmem:[#allocation4 + $0x8] sm:$0xff]
        %1154 = vrot.lane.b32.xlu0 %v1150, 127
        %v1155 = vpop.permute.xlu0 %1154
        %1156 = vrot.lane.b32.xlu0 %v1151, 127
        %v1157 = vpop.permute.xlu0 %1156
        %1160 = vst.msk [vmem:[#allocation6 + $0x10] sm:$0xff] %vm338, %v1155
        %1161 = vst.msk [vmem:[#allocation6 + $0x18] sm:$0xff] %vm338, %v1157
        %v1162 = vld [vmem:[#allocation4] sm:$0xff]
        %v1163 = vld [vmem:[#allocation4 + $0x8] sm:$0xff]
        %1166 = vrot.lane.b32.xlu0 %v1162, 126
        %v1167 = vpop.permute.xlu0 %1166
        %1168 = vrot.lane.b32.xlu0 %v1163, 126
        %v1169 = vpop.permute.xlu0 %1168
        %1172 = vst.msk [vmem:[#allocation6 + $0x20] sm:$0xff] %vm338, %v1167
        %1173 = vst.msk [vmem:[#allocation6 + $0x28] sm:$0xff] %vm338, %v1169
        %v1174 = vld [vmem:[#allocation4] sm:$0xff]
        %v1175 = vld [vmem:[#allocation4 + $0x8] sm:$0xff]
        %1178 = vrot.lane.b32.xlu0 %v1174, 125
        %v1179 = vpop.permute.xlu0 %1178
        %1180 = vrot.lane.b32.xlu0 %v1175, 125
        %v1181 = vpop.permute.xlu0 %1180
        %1184 = vst.msk [vmem:[#allocation6 + $0x30] sm:$0xff] %vm338, %v1179
        %1185 = vst.msk [vmem:[#allocation6 + $0x38] sm:$0xff] %vm338, %v1181
        %v1186 = vld [vmem:[#allocation4] sm:$0xff]
        %v1187 = vld [vmem:[#allocation4 + $0x8] sm:$0xff]
        %1190 = vrot.lane.b32.xlu0 %v1186, 124
        %v1191 = vpop.permute.xlu0 %1190
        %1192 = vrot.lane.b32.xlu0 %v1187, 124
        %v1193 = vpop.permute.xlu0 %1192
        %1196 = vst.msk [vmem:[#allocation6 + $0x40] sm:$0xff] %vm338, %v1191
        %1197 = vst.msk [vmem:[#allocation6 + $0x48] sm:$0xff] %vm338, %v1193
        %v1198 = vld [vmem:[#allocation4] sm:$0xff]
        %v1199 = vld [vmem:[#allocation4 + $0x8] sm:$0xff]
        %1202 = vrot.lane.b32.xlu0 %v1198, 123
        %v1203 = vpop.permute.xlu0 %1202
        %1204 = vrot.lane.b32.xlu0 %v1199, 123
        %v1205 = vpop.permute.xlu0 %1204
        %1208 = vst.msk [vmem:[#allocation6 + $0x50] sm:$0xff] %vm338, %v1203
        %1209 = vst.msk [vmem:[#allocation6 + $0x58] sm:$0xff] %vm338, %v1205
        %v1210 = vld [vmem:[#allocation4] sm:$0xff]
        %v1211 = vld [vmem:[#allocation4 + $0x8] sm:$0xff]
        %1214 = vrot.lane.b32.xlu0 %v1210, 122
        %v1215 = vpop.permute.xlu0 %1214
        %1216 = vrot.lane.b32.xlu0 %v1211, 122
        %v1217 = vpop.permute.xlu0 %1216
        %1220 = vst.msk [vmem:[#allocation6 + $0x60] sm:$0xff] %vm338, %v1215
        %1221 = vst.msk [vmem:[#allocation6 + $0x68] sm:$0xff] %vm338, %v1217
        %v1222 = vld [vmem:[#allocation4] sm:$0xff]
        %v1223 = vld [vmem:[#allocation4 + $0x8] sm:$0xff]
        %1226 = vrot.lane.b32.xlu0 %v1222, 121
        %v1227 = vpop.permute.xlu0 %1226
        %1228 = vrot.lane.b32.xlu0 %v1223, 121
        %v1229 = vpop.permute.xlu0 %1228
        %1232 = vst.msk [vmem:[#allocation6 + $0x70] sm:$0xff] %vm338, %v1227
        %1233 = vst.msk [vmem:[#allocation6 + $0x78] sm:$0xff] %vm338, %v1229
        %v1234 = vld [vmem:[#allocation4] sm:$0xff]
        %v1235 = vld [vmem:[#allocation4 + $0x8] sm:$0xff]
        %1238 = vrot.lane.b32.xlu0 %v1234, 120
        %v1239 = vpop.permute.xlu0 %1238
        %1240 = vrot.lane.b32.xlu0 %v1235, 120
        %v1241 = vpop.permute.xlu0 %1240
        %1244 = vst.msk [vmem:[#allocation6 + $0x80] sm:$0xff] %vm338, %v1239
        %1245 = vst.msk [vmem:[#allocation6 + $0x88] sm:$0xff] %vm338, %v1241
        %v1246 = vld [vmem:[#allocation4] sm:$0xff]
        %v1247 = vld [vmem:[#allocation4 + $0x8] sm:$0xff]
        %1250 = vrot.lane.b32.xlu0 %v1246, 119
        %v1251 = vpop.permute.xlu0 %1250
        %1252 = vrot.lane.b32.xlu0 %v1247, 119
        %v1253 = vpop.permute.xlu0 %1252
        %1256 = vst.msk [vmem:[#allocation6 + $0x90] sm:$0xff] %vm338, %v1251
        %1257 = vst.msk [vmem:[#allocation6 + $0x98] sm:$0xff] %vm338, %v1253
        %v1258 = vld [vmem:[#allocation4] sm:$0xff]
        %v1259 = vld [vmem:[#allocation4 + $0x8] sm:$0xff]
        %1262 = vrot.lane.b32.xlu0 %v1258, 118
        %v1263 = vpop.permute.xlu0 %1262
        %1264 = vrot.lane.b32.xlu0 %v1259, 118
        %v1265 = vpop.permute.xlu0 %1264
        %1268 = vst.msk [vmem:[#allocation6 + $0xa0] sm:$0xff] %vm338, %v1263
        %1269 = vst.msk [vmem:[#allocation6 + $0xa8] sm:$0xff] %vm338, %v1265
        %v1270 = vld [vmem:[#allocation4] sm:$0xff]
        %v1271 = vld [vmem:[#allocation4 + $0x8] sm:$0xff]
        %1274 = vrot.lane.b32.xlu0 %v1270, 117
        %v1275 = vpop.permute.xlu0 %1274
        %1276 = vrot.lane.b32.xlu0 %v1271, 117
        %v1277 = vpop.permute.xlu0 %1276
        %1280 = vst.msk [vmem:[#allocation6 + $0xb0] sm:$0xff] %vm338, %v1275
        %1281 = vst.msk [vmem:[#allocation6 + $0xb8] sm:$0xff] %vm338, %v1277
        %v1282 = vld [vmem:[#allocation4] sm:$0xff]
        %v1283 = vld [vmem:[#allocation4 + $0x8] sm:$0xff]
        %1286 = vrot.lane.b32.xlu0 %v1282, 116
        %v1287 = vpop.permute.xlu0 %1286
        %1288 = vrot.lane.b32.xlu0 %v1283, 116
        %v1289 = vpop.permute.xlu0 %1288
        %1292 = vst.msk [vmem:[#allocation6 + $0xc0] sm:$0xff] %vm338, %v1287
        %1293 = vst.msk [vmem:[#allocation6 + $0xc8] sm:$0xff] %vm338, %v1289
        %v1294 = vld [vmem:[#allocation4] sm:$0xff]
        %v1295 = vld [vmem:[#allocation4 + $0x8] sm:$0xff]
        %1298 = vrot.lane.b32.xlu0 %v1294, 115
        %v1299 = vpop.permute.xlu0 %1298
        %1300 = vrot.lane.b32.xlu0 %v1295, 115
        %v1301 = vpop.permute.xlu0 %1300
        %1304 = vst.msk [vmem:[#allocation6 + $0xd0] sm:$0xff] %vm338, %v1299
        %1305 = vst.msk [vmem:[#allocation6 + $0xd8] sm:$0xff] %vm338, %v1301
        %v1306 = vld [vmem:[#allocation4] sm:$0xff]
        %v1307 = vld [vmem:[#allocation4 + $0x8] sm:$0xff]
        %1310 = vrot.lane.b32.xlu0 %v1306, 114
        %v1311 = vpop.permute.xlu0 %1310
        %1312 = vrot.lane.b32.xlu0 %v1307, 114
        %v1313 = vpop.permute.xlu0 %1312
        %1316 = vst.msk [vmem:[#allocation6 + $0xe0] sm:$0xff] %vm338, %v1311
        %1317 = vst.msk [vmem:[#allocation6 + $0xe8] sm:$0xff] %vm338, %v1313
        %v1318 = vld [vmem:[%s4] sm:$0xff]
        %v1319 = vld [vmem:[%s4 + $0x8] sm:$0xff]
        %v1320 = vld [vmem:[%s4 + $0x10] sm:$0xff]
        %v1321 = vld [vmem:[%s4 + $0x18] sm:$0xff]
        %v1322 = vld [vmem:[#allocation6] sm:$0xff]
        %v1323 = vld [vmem:[#allocation6 + $0x8] sm:$0xff]
        %v1324 = vld [vmem:[#allocation6 + $0x10] sm:$0xff]
        %v1325 = vld [vmem:[#allocation6 + $0x18] sm:$0xff]
        %v1326 = vld [vmem:[#allocation6 + $0x20] sm:$0xff]
        %v1327 = vld [vmem:[#allocation6 + $0x28] sm:$0xff]
        %v1328 = vld [vmem:[#allocation6 + $0x30] sm:$0xff]
        %v1329 = vld [vmem:[#allocation6 + $0x38] sm:$0xff]
        %v1330 = vld [vmem:[#allocation6 + $0x40] sm:$0xff]
        %v1331 = vld [vmem:[#allocation6 + $0x48] sm:$0xff]
        %v1332 = vld [vmem:[#allocation6 + $0x50] sm:$0xff]
        %v1333 = vld [vmem:[#allocation6 + $0x58] sm:$0xff]
        %v1334 = vld [vmem:[#allocation6 + $0x60] sm:$0xff]
        %v1335 = vld [vmem:[#allocation6 + $0x68] sm:$0xff]
        %v1336 = vld [vmem:[#allocation6 + $0x70] sm:$0xff]
        %v1337 = vld [vmem:[#allocation6 + $0x78] sm:$0xff]
        %v1338 = vld [vmem:[#allocation6 + $0x80] sm:$0xff]
        %v1339 = vld [vmem:[#allocation6 + $0x88] sm:$0xff]
        %v1340 = vld [vmem:[#allocation6 + $0x90] sm:$0xff]
        %v1341 = vld [vmem:[#allocation6 + $0x98] sm:$0xff]
        %v1342 = vld [vmem:[#allocation6 + $0xa0] sm:$0xff]
        %v1343 = vld [vmem:[#allocation6 + $0xa8] sm:$0xff]
        %v1344 = vld [vmem:[#allocation6 + $0xb0] sm:$0xff]
        %v1345 = vld [vmem:[#allocation6 + $0xb8] sm:$0xff]
        %v1346 = vld [vmem:[#allocation6 + $0xc0] sm:$0xff]
        %v1347 = vld [vmem:[#allocation6 + $0xc8] sm:$0xff]
        %v1348 = vld [vmem:[#allocation6 + $0xd0] sm:$0xff]
        %v1349 = vld [vmem:[#allocation6 + $0xd8] sm:$0xff]
        %v1350 = vld [vmem:[#allocation6 + $0xe0] sm:$0xff]
        %v1351 = vld [vmem:[#allocation6 + $0xe8] sm:$0xff]
        %v1352 = vld [vmem:[%s2] sm:$0xff]
        %v1353 = vld [vmem:[%s2 + $0x8] sm:$0xff]
        %1355 = vset.pattern.permute.xlu0 3
        %1356 = vperm.xlu0 %1355, %v1352
        %v1357 = vpop.permute.xlu0 %1356
        %1360 = vset.pattern.permute.xlu0 3
        %1361 = vperm.xlu0 %1360, %v1353
        %v1362 = vpop.permute.xlu0 %1361
        %vm1364 = vcmask 916480
        %v1366 = vsel %vm1364, %v1319, 0
        %v1369 = vsel %vm1364, %v1321, 0
        %1371 = vmatprep.subr.mxu0 0.0
        %v1372 = vand.u32 %v1322, 4294901760
        %1373 = vmatpush1.msra.mxu0 %v1372
        %1374 = vmatprep.subr.mxu0 0.0
        %v1375 = vand.u32 %v1323, 4294901760
        %1376 = vmatpush1.msra.mxu0 %v1375
        %1377 = vmatprep.subr.mxu0 0.0
        %v1378 = vand.u32 %v1324, 4294901760
        %1379 = vmatpush1.msra.mxu0 %v1378
        %1380 = vmatprep.subr.mxu0 0.0
        %v1381 = vand.u32 %v1325, 4294901760
        %1382 = vmatpush1.msra.mxu0 %v1381
        %1383 = vmatprep.subr.mxu0 0.0
        %v1384 = vand.u32 %v1326, 4294901760
        %1385 = vmatpush1.msra.mxu0 %v1384
        %1386 = vmatprep.subr.mxu0 0.0
        %v1387 = vand.u32 %v1327, 4294901760
        %1388 = vmatpush1.msra.mxu0 %v1387
        %1389 = vmatprep.subr.mxu0 0.0
        %v1390 = vand.u32 %v1328, 4294901760
        %1391 = vmatpush1.msra.mxu0 %v1390
        %1392 = vmatprep.subr.mxu0 0.0
        %v1393 = vand.u32 %v1329, 4294901760
        %1394 = vmatpush1.msra.mxu0 %v1393
        %1395 = vmatprep.subr.mxu0 0.0
        %v1396 = vand.u32 %v1330, 4294901760
        %1397 = vmatpush1.msra.mxu0 %v1396
        %1398 = vmatprep.subr.mxu0 0.0
        %v1399 = vand.u32 %v1331, 4294901760
        %1400 = vmatpush1.msra.mxu0 %v1399
        %1401 = vmatprep.subr.mxu0 0.0
        %v1402 = vand.u32 %v1332, 4294901760
        %1403 = vmatpush1.msra.mxu0 %v1402
        %1404 = vmatprep.subr.mxu0 0.0
        %v1405 = vand.u32 %v1333, 4294901760
        %1406 = vmatpush1.msra.mxu0 %v1405
        %1407 = vmatprep.subr.mxu0 0.0
        %v1408 = vand.u32 %v1334, 4294901760
        %1409 = vmatpush1.msra.mxu0 %v1408
        %1410 = vmatprep.subr.mxu0 0.0
        %v1411 = vand.u32 %v1335, 4294901760
        %1412 = vmatpush1.msra.mxu0 %v1411
        %1413 = vmatprep.subr.mxu0 0.0
        %v1414 = vand.u32 %v1336, 4294901760
        %1415 = vmatpush1.msra.mxu0 %v1414
        %1416 = vmatprep.subr.mxu0 0.0
        %v1417 = vand.u32 %v1337, 4294901760
        %1418 = vmatpush1.msra.mxu0 %v1417
        %1419 = vmatprep.subr.mxu0 0.0
        %v1420 = vand.u32 %v1338, 4294901760
        %1421 = vmatpush1.msra.mxu0 %v1420
        %1422 = vmatprep.subr.mxu0 0.0
        %v1423 = vand.u32 %v1339, 4294901760
        %1424 = vmatpush1.msra.mxu0 %v1423
        %1425 = vmatprep.subr.mxu0 0.0
        %v1426 = vand.u32 %v1340, 4294901760
        %1427 = vmatpush1.msra.mxu0 %v1426
        %1428 = vmatprep.subr.mxu0 0.0
        %v1429 = vand.u32 %v1341, 4294901760
        %1430 = vmatpush1.msra.mxu0 %v1429
        %1431 = vmatprep.subr.mxu0 0.0
        %v1432 = vand.u32 %v1342, 4294901760
        %1433 = vmatpush1.msra.mxu0 %v1432
        %1434 = vmatprep.subr.mxu0 0.0
        %v1435 = vand.u32 %v1343, 4294901760
        %1436 = vmatpush1.msra.mxu0 %v1435
        %1437 = vmatprep.subr.mxu0 0.0
        %v1438 = vand.u32 %v1344, 4294901760
        %1439 = vmatpush1.msra.mxu0 %v1438
        %1440 = vmatprep.subr.mxu0 0.0
        %v1441 = vand.u32 %v1345, 4294901760
        %1442 = vmatpush1.msra.mxu0 %v1441
        %1443 = vmatprep.subr.mxu0 0.0
        %v1444 = vand.u32 %v1346, 4294901760
        %1445 = vmatpush1.msra.mxu0 %v1444
        %1446 = vmatprep.subr.mxu0 0.0
        %v1447 = vand.u32 %v1347, 4294901760
        %1448 = vmatpush1.msra.mxu0 %v1447
        %1449 = vmatprep.subr.mxu0 0.0
        %v1450 = vand.u32 %v1348, 4294901760
        %1451 = vmatpush1.msra.mxu0 %v1450
        %1452 = vmatprep.subr.mxu0 0.0
        %v1453 = vand.u32 %v1349, 4294901760
        %1454 = vmatpush1.msra.mxu0 %v1453
        %1455 = vmatprep.subr.mxu0 0.0
        %v1456 = vand.u32 %v1350, 4294901760
        %1457 = vmatpush1.msra.mxu0 %v1456
        %1458 = vmatprep.subr.mxu0 0.0
        %v1459 = vand.u32 %v1351, 4294901760
        %1460 = vmatpush1.msra.mxu0 %v1459
        %1461 = vmatprep.subr.mxu0 0.0
        %1462 = vmatpush1.msra.mxu0 0.0
        %1463 = vmatprep.subr.mxu0 0.0
        %1464 = vmatpush1.msra.mxu0 0.0
        %v1465 = vand.u32 %v1366, 4294901760
        %v1466 = vsub.f32 %v1366, %v1465
        %v1467 = vand.u32 %v1466, 4294901760
        %v1468 = vsub.f32 %v1466, %v1467
        %v1469 = vand.u32 %v1468, 4294901760
        %1470 = vmatprep.mubr.f32.mxu0 %v1469
        %v1471 = vand.u32 %v1318, 4294901760
        %v1472 = vsub.f32 %v1318, %v1471
        %v1473 = vand.u32 %v1472, 4294901760
        %v1474 = vsub.f32 %v1472, %v1473
        %v1475 = vand.u32 %v1474, 4294901760
        %1476 = vmatmul.mubr.f32.gmra.mrb[0].mxu0 %v1475
        %v1477 = vpop.f32.mrb[0].mxu0
        %v1478 = vadd.f32 %v1357, %v1477
        %v1479 = vpop.f32.mrb[0].mxu0
        %v1480 = vand.u32 %v1369, 4294901760
        %v1481 = vsub.f32 %v1369, %v1480
        %v1482 = vand.u32 %v1481, 4294901760
        %v1483 = vsub.f32 %v1481, %v1482
        %v1484 = vand.u32 %v1483, 4294901760
        %1485 = vmatprep.mubr.f32.mxu0 %v1484
        %v1486 = vand.u32 %v1320, 4294901760
        %v1487 = vsub.f32 %v1320, %v1486
        %v1488 = vand.u32 %v1487, 4294901760
        %v1489 = vsub.f32 %v1487, %v1488
        %v1490 = vand.u32 %v1489, 4294901760
        %1491 = vmatmul.mubr.f32.gmra.mrb[0].mxu0 %v1490
        %v1492 = vpop.f32.mrb[0].mxu0
        %v1493 = vadd.f32 %v1362, %v1492
        %v1494 = vpop.f32.mrb[0].mxu0
        %1495 = vdwg.mxu0
        %1496 = vmatprep.subr.mxu0 0.0
        %v1497 = vand.u32 %v1322, 4294901760
        %v1498 = vsub.f32 %v1322, %v1497
        %v1499 = vand.u32 %v1498, 4294901760
        %v1500 = vsub.f32 %v1498, %v1499
        %v1501 = vand.u32 %v1500, 4294901760
        %1502 = vmatpush1.msra.mxu0 %v1501
        %1503 = vmatprep.subr.mxu0 0.0
        %v1504 = vand.u32 %v1323, 4294901760
        %v1505 = vsub.f32 %v1323, %v1504
        %v1506 = vand.u32 %v1505, 4294901760
        %v1507 = vsub.f32 %v1505, %v1506
        %v1508 = vand.u32 %v1507, 4294901760
        %1509 = vmatpush1.msra.mxu0 %v1508
        %1510 = vmatprep.subr.mxu0 0.0
        %v1511 = vand.u32 %v1324, 4294901760
        %v1512 = vsub.f32 %v1324, %v1511
        %v1513 = vand.u32 %v1512, 4294901760
        %v1514 = vsub.f32 %v1512, %v1513
        %v1515 = vand.u32 %v1514, 4294901760
        %1516 = vmatpush1.msra.mxu0 %v1515
        %1517 = vmatprep.subr.mxu0 0.0
        %v1518 = vand.u32 %v1325, 4294901760
        %v1519 = vsub.f32 %v1325, %v1518
        %v1520 = vand.u32 %v1519, 4294901760
        %v1521 = vsub.f32 %v1519, %v1520
        %v1522 = vand.u32 %v1521, 4294901760
        %1523 = vmatpush1.msra.mxu0 %v1522
        %1524 = vmatprep.subr.mxu0 0.0
        %v1525 = vand.u32 %v1326, 4294901760
        %v1526 = vsub.f32 %v1326, %v1525
        %v1527 = vand.u32 %v1526, 4294901760
        %v1528 = vsub.f32 %v1526, %v1527
        %v1529 = vand.u32 %v1528, 4294901760
        %1530 = vmatpush1.msra.mxu0 %v1529
        %1531 = vmatprep.subr.mxu0 0.0
        %v1532 = vand.u32 %v1327, 4294901760
        %v1533 = vsub.f32 %v1327, %v1532
        %v1534 = vand.u32 %v1533, 4294901760
        %v1535 = vsub.f32 %v1533, %v1534
        %v1536 = vand.u32 %v1535, 4294901760
        %1537 = vmatpush1.msra.mxu0 %v1536
        %1538 = vmatprep.subr.mxu0 0.0
        %v1539 = vand.u32 %v1328, 4294901760
        %v1540 = vsub.f32 %v1328, %v1539
        %v1541 = vand.u32 %v1540, 4294901760
        %v1542 = vsub.f32 %v1540, %v1541
        %v1543 = vand.u32 %v1542, 4294901760
        %1544 = vmatpush1.msra.mxu0 %v1543
        %1545 = vmatprep.subr.mxu0 0.0
        %v1546 = vand.u32 %v1329, 4294901760
        %v1547 = vsub.f32 %v1329, %v1546
        %v1548 = vand.u32 %v1547, 4294901760
        %v1549 = vsub.f32 %v1547, %v1548
        %v1550 = vand.u32 %v1549, 4294901760
        %1551 = vmatpush1.msra.mxu0 %v1550
        %1552 = vmatprep.subr.mxu0 0.0
        %v1553 = vand.u32 %v1330, 4294901760
        %v1554 = vsub.f32 %v1330, %v1553
        %v1555 = vand.u32 %v1554, 4294901760
        %v1556 = vsub.f32 %v1554, %v1555
        %v1557 = vand.u32 %v1556, 4294901760
        %1558 = vmatpush1.msra.mxu0 %v1557
        %1559 = vmatprep.subr.mxu0 0.0
        %v1560 = vand.u32 %v1331, 4294901760
        %v1561 = vsub.f32 %v1331, %v1560
        %v1562 = vand.u32 %v1561, 4294901760
        %v1563 = vsub.f32 %v1561, %v1562
        %v1564 = vand.u32 %v1563, 4294901760
        %1565 = vmatpush1.msra.mxu0 %v1564
        %1566 = vmatprep.subr.mxu0 0.0
        %v1567 = vand.u32 %v1332, 4294901760
        %v1568 = vsub.f32 %v1332, %v1567
        %v1569 = vand.u32 %v1568, 4294901760
        %v1570 = vsub.f32 %v1568, %v1569
        %v1571 = vand.u32 %v1570, 4294901760
        %1572 = vmatpush1.msra.mxu0 %v1571
        %1573 = vmatprep.subr.mxu0 0.0
        %v1574 = vand.u32 %v1333, 4294901760
        %v1575 = vsub.f32 %v1333, %v1574
        %v1576 = vand.u32 %v1575, 4294901760
        %v1577 = vsub.f32 %v1575, %v1576
        %v1578 = vand.u32 %v1577, 4294901760
        %1579 = vmatpush1.msra.mxu0 %v1578
        %1580 = vmatprep.subr.mxu0 0.0
        %v1581 = vand.u32 %v1334, 4294901760
        %v1582 = vsub.f32 %v1334, %v1581
        %v1583 = vand.u32 %v1582, 4294901760
        %v1584 = vsub.f32 %v1582, %v1583
        %v1585 = vand.u32 %v1584, 4294901760
        %1586 = vmatpush1.msra.mxu0 %v1585
        %1587 = vmatprep.subr.mxu0 0.0
        %v1588 = vand.u32 %v1335, 4294901760
        %v1589 = vsub.f32 %v1335, %v1588
        %v1590 = vand.u32 %v1589, 4294901760
        %v1591 = vsub.f32 %v1589, %v1590
        %v1592 = vand.u32 %v1591, 4294901760
        %1593 = vmatpush1.msra.mxu0 %v1592
        %1594 = vmatprep.subr.mxu0 0.0
        %v1595 = vand.u32 %v1336, 4294901760
        %v1596 = vsub.f32 %v1336, %v1595
        %v1597 = vand.u32 %v1596, 4294901760
        %v1598 = vsub.f32 %v1596, %v1597
        %v1599 = vand.u32 %v1598, 4294901760
        %1600 = vmatpush1.msra.mxu0 %v1599
        %1601 = vmatprep.subr.mxu0 0.0
        %v1602 = vand.u32 %v1337, 4294901760
        %v1603 = vsub.f32 %v1337, %v1602
        %v1604 = vand.u32 %v1603, 4294901760
        %v1605 = vsub.f32 %v1603, %v1604
        %v1606 = vand.u32 %v1605, 4294901760
        %1607 = vmatpush1.msra.mxu0 %v1606
        %1608 = vmatprep.subr.mxu0 0.0
        %v1609 = vand.u32 %v1338, 4294901760
        %v1610 = vsub.f32 %v1338, %v1609
        %v1611 = vand.u32 %v1610, 4294901760
        %v1612 = vsub.f32 %v1610, %v1611
        %v1613 = vand.u32 %v1612, 4294901760
        %1614 = vmatpush1.msra.mxu0 %v1613
        %1615 = vmatprep.subr.mxu0 0.0
        %v1616 = vand.u32 %v1339, 4294901760
        %v1617 = vsub.f32 %v1339, %v1616
        %v1618 = vand.u32 %v1617, 4294901760
        %v1619 = vsub.f32 %v1617, %v1618
        %v1620 = vand.u32 %v1619, 4294901760
        %1621 = vmatpush1.msra.mxu0 %v1620
        %1622 = vmatprep.subr.mxu0 0.0
        %v1623 = vand.u32 %v1340, 4294901760
        %v1624 = vsub.f32 %v1340, %v1623
        %v1625 = vand.u32 %v1624, 4294901760
        %v1626 = vsub.f32 %v1624, %v1625
        %v1627 = vand.u32 %v1626, 4294901760
        %1628 = vmatpush1.msra.mxu0 %v1627
        %1629 = vmatprep.subr.mxu0 0.0
        %v1630 = vand.u32 %v1341, 4294901760
        %v1631 = vsub.f32 %v1341, %v1630
        %v1632 = vand.u32 %v1631, 4294901760
        %v1633 = vsub.f32 %v1631, %v1632
        %v1634 = vand.u32 %v1633, 4294901760
        %1635 = vmatpush1.msra.mxu0 %v1634
        %1636 = vmatprep.subr.mxu0 0.0
        %v1637 = vand.u32 %v1342, 4294901760
        %v1638 = vsub.f32 %v1342, %v1637
        %v1639 = vand.u32 %v1638, 4294901760
        %v1640 = vsub.f32 %v1638, %v1639
        %v1641 = vand.u32 %v1640, 4294901760
        %1642 = vmatpush1.msra.mxu0 %v1641
        %1643 = vmatprep.subr.mxu0 0.0
        %v1644 = vand.u32 %v1343, 4294901760
        %v1645 = vsub.f32 %v1343, %v1644
        %v1646 = vand.u32 %v1645, 4294901760
        %v1647 = vsub.f32 %v1645, %v1646
        %v1648 = vand.u32 %v1647, 4294901760
        %1649 = vmatpush1.msra.mxu0 %v1648
        %1650 = vmatprep.subr.mxu0 0.0
        %v1651 = vand.u32 %v1344, 4294901760
        %v1652 = vsub.f32 %v1344, %v1651
        %v1653 = vand.u32 %v1652, 4294901760
        %v1654 = vsub.f32 %v1652, %v1653
        %v1655 = vand.u32 %v1654, 4294901760
        %1656 = vmatpush1.msra.mxu0 %v1655
        %1657 = vmatprep.subr.mxu0 0.0
        %v1658 = vand.u32 %v1345, 4294901760
        %v1659 = vsub.f32 %v1345, %v1658
        %v1660 = vand.u32 %v1659, 4294901760
        %v1661 = vsub.f32 %v1659, %v1660
        %v1662 = vand.u32 %v1661, 4294901760
        %1663 = vmatpush1.msra.mxu0 %v1662
        %1664 = vmatprep.subr.mxu0 0.0
        %v1665 = vand.u32 %v1346, 4294901760
        %v1666 = vsub.f32 %v1346, %v1665
        %v1667 = vand.u32 %v1666, 4294901760
        %v1668 = vsub.f32 %v1666, %v1667
        %v1669 = vand.u32 %v1668, 4294901760
        %1670 = vmatpush1.msra.mxu0 %v1669
        %1671 = vmatprep.subr.mxu0 0.0
        %v1672 = vand.u32 %v1347, 4294901760
        %v1673 = vsub.f32 %v1347, %v1672
        %v1674 = vand.u32 %v1673, 4294901760
        %v1675 = vsub.f32 %v1673, %v1674
        %v1676 = vand.u32 %v1675, 4294901760
        %1677 = vmatpush1.msra.mxu0 %v1676
        %1678 = vmatprep.subr.mxu0 0.0
        %v1679 = vand.u32 %v1348, 4294901760
        %v1680 = vsub.f32 %v1348, %v1679
        %v1681 = vand.u32 %v1680, 4294901760
        %v1682 = vsub.f32 %v1680, %v1681
        %v1683 = vand.u32 %v1682, 4294901760
        %1684 = vmatpush1.msra.mxu0 %v1683
        %1685 = vmatprep.subr.mxu0 0.0
        %v1686 = vand.u32 %v1349, 4294901760
        %v1687 = vsub.f32 %v1349, %v1686
        %v1688 = vand.u32 %v1687, 4294901760
        %v1689 = vsub.f32 %v1687, %v1688
        %v1690 = vand.u32 %v1689, 4294901760
        %1691 = vmatpush1.msra.mxu0 %v1690
        %1692 = vmatprep.subr.mxu0 0.0
        %v1693 = vand.u32 %v1350, 4294901760
        %v1694 = vsub.f32 %v1350, %v1693
        %v1695 = vand.u32 %v1694, 4294901760
        %v1696 = vsub.f32 %v1694, %v1695
        %v1697 = vand.u32 %v1696, 4294901760
        %1698 = vmatpush1.msra.mxu0 %v1697
        %1699 = vmatprep.subr.mxu0 0.0
        %v1700 = vand.u32 %v1351, 4294901760
        %v1701 = vsub.f32 %v1351, %v1700
        %v1702 = vand.u32 %v1701, 4294901760
        %v1703 = vsub.f32 %v1701, %v1702
        %v1704 = vand.u32 %v1703, 4294901760
        %1705 = vmatpush1.msra.mxu0 %v1704
        %1706 = vmatprep.subr.mxu0 0.0
        %1707 = vmatpush1.msra.mxu0 0.0
        %1708 = vmatprep.subr.mxu0 0.0
        %1709 = vmatpush1.msra.mxu0 0.0
        %v1710 = vand.u32 %v1366, 4294901760
        %1711 = vmatprep.mubr.f32.mxu0 %v1710
        %v1712 = vand.u32 %v1318, 4294901760
        %1713 = vmatmul.mubr.f32.gmra.mrb[0].mxu0 %v1712
        %v1714 = vpop.f32.mrb[0].mxu0
        %v1715 = vadd.f32 %v1478, %v1714
        %v1716 = vpop.f32.mrb[0].mxu0
        %v1717 = vand.u32 %v1369, 4294901760
        %1718 = vmatprep.mubr.f32.mxu0 %v1717
        %v1719 = vand.u32 %v1320, 4294901760
        %1720 = vmatmul.mubr.f32.gmra.mrb[0].mxu0 %v1719
        %v1721 = vpop.f32.mrb[0].mxu0
        %v1722 = vadd.f32 %v1493, %v1721
        %v1723 = vpop.f32.mrb[0].mxu0
        %1724 = vdwg.mxu0
        %1725 = vmatprep.subr.mxu0 0.0
        %v1726 = vand.u32 %v1322, 4294901760
        %v1727 = vsub.f32 %v1322, %v1726
        %1728 = vmatpush1.msra.mxu0 %v1727
        %1729 = vmatprep.subr.mxu0 0.0
        %v1730 = vand.u32 %v1323, 4294901760
        %v1731 = vsub.f32 %v1323, %v1730
        %1732 = vmatpush1.msra.mxu0 %v1731
        %1733 = vmatprep.subr.mxu0 0.0
        %v1734 = vand.u32 %v1324, 4294901760
        %v1735 = vsub.f32 %v1324, %v1734
        %1736 = vmatpush1.msra.mxu0 %v1735
        %1737 = vmatprep.subr.mxu0 0.0
        %v1738 = vand.u32 %v1325, 4294901760
        %v1739 = vsub.f32 %v1325, %v1738
        %1740 = vmatpush1.msra.mxu0 %v1739
        %1741 = vmatprep.subr.mxu0 0.0
        %v1742 = vand.u32 %v1326, 4294901760
        %v1743 = vsub.f32 %v1326, %v1742
        %1744 = vmatpush1.msra.mxu0 %v1743
        %1745 = vmatprep.subr.mxu0 0.0
        %v1746 = vand.u32 %v1327, 4294901760
        %v1747 = vsub.f32 %v1327, %v1746
        %1748 = vmatpush1.msra.mxu0 %v1747
        %1749 = vmatprep.subr.mxu0 0.0
        %v1750 = vand.u32 %v1328, 4294901760
        %v1751 = vsub.f32 %v1328, %v1750
        %1752 = vmatpush1.msra.mxu0 %v1751
        %1753 = vmatprep.subr.mxu0 0.0
        %v1754 = vand.u32 %v1329, 4294901760
        %v1755 = vsub.f32 %v1329, %v1754
        %1756 = vmatpush1.msra.mxu0 %v1755
        %1757 = vmatprep.subr.mxu0 0.0
        %v1758 = vand.u32 %v1330, 4294901760
        %v1759 = vsub.f32 %v1330, %v1758
        %1760 = vmatpush1.msra.mxu0 %v1759
        %1761 = vmatprep.subr.mxu0 0.0
        %v1762 = vand.u32 %v1331, 4294901760
        %v1763 = vsub.f32 %v1331, %v1762
        %1764 = vmatpush1.msra.mxu0 %v1763
        %1765 = vmatprep.subr.mxu0 0.0
        %v1766 = vand.u32 %v1332, 4294901760
        %v1767 = vsub.f32 %v1332, %v1766
        %1768 = vmatpush1.msra.mxu0 %v1767
        %1769 = vmatprep.subr.mxu0 0.0
        %v1770 = vand.u32 %v1333, 4294901760
        %v1771 = vsub.f32 %v1333, %v1770
        %1772 = vmatpush1.msra.mxu0 %v1771
        %1773 = vmatprep.subr.mxu0 0.0
        %v1774 = vand.u32 %v1334, 4294901760
        %v1775 = vsub.f32 %v1334, %v1774
        %1776 = vmatpush1.msra.mxu0 %v1775
        %1777 = vmatprep.subr.mxu0 0.0
        %v1778 = vand.u32 %v1335, 4294901760
        %v1779 = vsub.f32 %v1335, %v1778
        %1780 = vmatpush1.msra.mxu0 %v1779
        %1781 = vmatprep.subr.mxu0 0.0
        %v1782 = vand.u32 %v1336, 4294901760
        %v1783 = vsub.f32 %v1336, %v1782
        %1784 = vmatpush1.msra.mxu0 %v1783
        %1785 = vmatprep.subr.mxu0 0.0
        %v1786 = vand.u32 %v1337, 4294901760
        %v1787 = vsub.f32 %v1337, %v1786
        %1788 = vmatpush1.msra.mxu0 %v1787
        %1789 = vmatprep.subr.mxu0 0.0
        %v1790 = vand.u32 %v1338, 4294901760
        %v1791 = vsub.f32 %v1338, %v1790
        %1792 = vmatpush1.msra.mxu0 %v1791
        %1793 = vmatprep.subr.mxu0 0.0
        %v1794 = vand.u32 %v1339, 4294901760
        %v1795 = vsub.f32 %v1339, %v1794
        %1796 = vmatpush1.msra.mxu0 %v1795
        %1797 = vmatprep.subr.mxu0 0.0
        %v1798 = vand.u32 %v1340, 4294901760
        %v1799 = vsub.f32 %v1340, %v1798
        %1800 = vmatpush1.msra.mxu0 %v1799
        %1801 = vmatprep.subr.mxu0 0.0
        %v1802 = vand.u32 %v1341, 4294901760
        %v1803 = vsub.f32 %v1341, %v1802
        %1804 = vmatpush1.msra.mxu0 %v1803
        %1805 = vmatprep.subr.mxu0 0.0
        %v1806 = vand.u32 %v1342, 4294901760
        %v1807 = vsub.f32 %v1342, %v1806
        %1808 = vmatpush1.msra.mxu0 %v1807
        %1809 = vmatprep.subr.mxu0 0.0
        %v1810 = vand.u32 %v1343, 4294901760
        %v1811 = vsub.f32 %v1343, %v1810
        %1812 = vmatpush1.msra.mxu0 %v1811
        %1813 = vmatprep.subr.mxu0 0.0
        %v1814 = vand.u32 %v1344, 4294901760
        %v1815 = vsub.f32 %v1344, %v1814
        %1816 = vmatpush1.msra.mxu0 %v1815
        %1817 = vmatprep.subr.mxu0 0.0
        %v1818 = vand.u32 %v1345, 4294901760
        %v1819 = vsub.f32 %v1345, %v1818
        %1820 = vmatpush1.msra.mxu0 %v1819
        %1821 = vmatprep.subr.mxu0 0.0
        %v1822 = vand.u32 %v1346, 4294901760
        %v1823 = vsub.f32 %v1346, %v1822
        %1824 = vmatpush1.msra.mxu0 %v1823
        %1825 = vmatprep.subr.mxu0 0.0
        %v1826 = vand.u32 %v1347, 4294901760
        %v1827 = vsub.f32 %v1347, %v1826
        %1828 = vmatpush1.msra.mxu0 %v1827
        %1829 = vmatprep.subr.mxu0 0.0
        %v1830 = vand.u32 %v1348, 4294901760
        %v1831 = vsub.f32 %v1348, %v1830
        %1832 = vmatpush1.msra.mxu0 %v1831
        %1833 = vmatprep.subr.mxu0 0.0
        %v1834 = vand.u32 %v1349, 4294901760
        %v1835 = vsub.f32 %v1349, %v1834
        %1836 = vmatpush1.msra.mxu0 %v1835
        %1837 = vmatprep.subr.mxu0 0.0
        %v1838 = vand.u32 %v1350, 4294901760
        %v1839 = vsub.f32 %v1350, %v1838
        %1840 = vmatpush1.msra.mxu0 %v1839
        %1841 = vmatprep.subr.mxu0 0.0
        %v1842 = vand.u32 %v1351, 4294901760
        %v1843 = vsub.f32 %v1351, %v1842
        %1844 = vmatpush1.msra.mxu0 %v1843
        %1845 = vmatprep.subr.mxu0 0.0
        %1846 = vmatpush1.msra.mxu0 0.0
        %1847 = vmatprep.subr.mxu0 0.0
        %1848 = vmatpush1.msra.mxu0 0.0
        %v1849 = vand.u32 %v1366, 4294901760
        %v1850 = vsub.f32 %v1366, %v1849
        %1851 = vmatprep.mubr.f32.mxu0 %v1850
        %v1852 = vand.u32 %v1318, 4294901760
        %v1853 = vsub.f32 %v1318, %v1852
        %1854 = vmatmul.mubr.f32.gmra.mrb[0].mxu0 %v1853
        %v1855 = vpop.f32.mrb[0].mxu0
        %v1856 = vadd.f32 %v1715, %v1855
        %v1857 = vpop.f32.mrb[0].mxu0
        %v1858 = vand.u32 %v1369, 4294901760
        %v1859 = vsub.f32 %v1369, %v1858
        %1860 = vmatprep.mubr.f32.mxu0 %v1859
        %v1861 = vand.u32 %v1320, 4294901760
        %v1862 = vsub.f32 %v1320, %v1861
        %1863 = vmatmul.mubr.f32.gmra.mrb[0].mxu0 %v1862
        %v1864 = vpop.f32.mrb[0].mxu0
        %v1865 = vadd.f32 %v1722, %v1864
        %v1866 = vpop.f32.mrb[0].mxu0
        %1867 = vdwg.mxu0
        %1868 = vmatprep.subr.mxu0 0.0
        %v1869 = vand.u32 %v1322, 4294901760
        %1870 = vmatpush1.msra.mxu0 %v1869
        %1871 = vmatprep.subr.mxu0 0.0
        %v1872 = vand.u32 %v1323, 4294901760
        %1873 = vmatpush1.msra.mxu0 %v1872
        %1874 = vmatprep.subr.mxu0 0.0
        %v1875 = vand.u32 %v1324, 4294901760
        %1876 = vmatpush1.msra.mxu0 %v1875
        %1877 = vmatprep.subr.mxu0 0.0
        %v1878 = vand.u32 %v1325, 4294901760
        %1879 = vmatpush1.msra.mxu0 %v1878
        %1880 = vmatprep.subr.mxu0 0.0
        %v1881 = vand.u32 %v1326, 4294901760
        %1882 = vmatpush1.msra.mxu0 %v1881
        %1883 = vmatprep.subr.mxu0 0.0
        %v1884 = vand.u32 %v1327, 4294901760
        %1885 = vmatpush1.msra.mxu0 %v1884
        %1886 = vmatprep.subr.mxu0 0.0
        %v1887 = vand.u32 %v1328, 4294901760
        %1888 = vmatpush1.msra.mxu0 %v1887
        %1889 = vmatprep.subr.mxu0 0.0
        %v1890 = vand.u32 %v1329, 4294901760
        %1891 = vmatpush1.msra.mxu0 %v1890
        %1892 = vmatprep.subr.mxu0 0.0
        %v1893 = vand.u32 %v1330, 4294901760
        %1894 = vmatpush1.msra.mxu0 %v1893
        %1895 = vmatprep.subr.mxu0 0.0
        %v1896 = vand.u32 %v1331, 4294901760
        %1897 = vmatpush1.msra.mxu0 %v1896
        %1898 = vmatprep.subr.mxu0 0.0
        %v1899 = vand.u32 %v1332, 4294901760
        %1900 = vmatpush1.msra.mxu0 %v1899
        %1901 = vmatprep.subr.mxu0 0.0
        %v1902 = vand.u32 %v1333, 4294901760
        %1903 = vmatpush1.msra.mxu0 %v1902
        %1904 = vmatprep.subr.mxu0 0.0
        %v1905 = vand.u32 %v1334, 4294901760
        %1906 = vmatpush1.msra.mxu0 %v1905
        %1907 = vmatprep.subr.mxu0 0.0
        %v1908 = vand.u32 %v1335, 4294901760
        %1909 = vmatpush1.msra.mxu0 %v1908
        %1910 = vmatprep.subr.mxu0 0.0
        %v1911 = vand.u32 %v1336, 4294901760
        %1912 = vmatpush1.msra.mxu0 %v1911
        %1913 = vmatprep.subr.mxu0 0.0
        %v1914 = vand.u32 %v1337, 4294901760
        %1915 = vmatpush1.msra.mxu0 %v1914
        %1916 = vmatprep.subr.mxu0 0.0
        %v1917 = vand.u32 %v1338, 4294901760
        %1918 = vmatpush1.msra.mxu0 %v1917
        %1919 = vmatprep.subr.mxu0 0.0
        %v1920 = vand.u32 %v1339, 4294901760
        %1921 = vmatpush1.msra.mxu0 %v1920
        %1922 = vmatprep.subr.mxu0 0.0
        %v1923 = vand.u32 %v1340, 4294901760
        %1924 = vmatpush1.msra.mxu0 %v1923
        %1925 = vmatprep.subr.mxu0 0.0
        %v1926 = vand.u32 %v1341, 4294901760
        %1927 = vmatpush1.msra.mxu0 %v1926
        %1928 = vmatprep.subr.mxu0 0.0
        %v1929 = vand.u32 %v1342, 4294901760
        %1930 = vmatpush1.msra.mxu0 %v1929
        %1931 = vmatprep.subr.mxu0 0.0
        %v1932 = vand.u32 %v1343, 4294901760
        %1933 = vmatpush1.msra.mxu0 %v1932
        %1934 = vmatprep.subr.mxu0 0.0
        %v1935 = vand.u32 %v1344, 4294901760
        %1936 = vmatpush1.msra.mxu0 %v1935
        %1937 = vmatprep.subr.mxu0 0.0
        %v1938 = vand.u32 %v1345, 4294901760
        %1939 = vmatpush1.msra.mxu0 %v1938
        %1940 = vmatprep.subr.mxu0 0.0
        %v1941 = vand.u32 %v1346, 4294901760
        %1942 = vmatpush1.msra.mxu0 %v1941
        %1943 = vmatprep.subr.mxu0 0.0
        %v1944 = vand.u32 %v1347, 4294901760
        %1945 = vmatpush1.msra.mxu0 %v1944
        %1946 = vmatprep.subr.mxu0 0.0
        %v1947 = vand.u32 %v1348, 4294901760
        %1948 = vmatpush1.msra.mxu0 %v1947
        %1949 = vmatprep.subr.mxu0 0.0
        %v1950 = vand.u32 %v1349, 4294901760
        %1951 = vmatpush1.msra.mxu0 %v1950
        %1952 = vmatprep.subr.mxu0 0.0
        %v1953 = vand.u32 %v1350, 4294901760
        %1954 = vmatpush1.msra.mxu0 %v1953
        %1955 = vmatprep.subr.mxu0 0.0
        %v1956 = vand.u32 %v1351, 4294901760
        %1957 = vmatpush1.msra.mxu0 %v1956
        %1958 = vmatprep.subr.mxu0 0.0
        %1959 = vmatpush1.msra.mxu0 0.0
        %1960 = vmatprep.subr.mxu0 0.0
        %1961 = vmatpush1.msra.mxu0 0.0
        %v1962 = vand.u32 %v1366, 4294901760
        %v1963 = vsub.f32 %v1366, %v1962
        %v1964 = vand.u32 %v1963, 4294901760
        %1965 = vmatprep.mubr.f32.mxu0 %v1964
        %v1966 = vand.u32 %v1318, 4294901760
        %v1967 = vsub.f32 %v1318, %v1966
        %v1968 = vand.u32 %v1967, 4294901760
        %1969 = vmatmul.mubr.f32.gmra.mrb[0].mxu0 %v1968
        %v1970 = vpop.f32.mrb[0].mxu0
        %v1971 = vadd.f32 %v1856, %v1970
        %v1972 = vpop.f32.mrb[0].mxu0
        %v1973 = vand.u32 %v1369, 4294901760
        %v1974 = vsub.f32 %v1369, %v1973
        %v1975 = vand.u32 %v1974, 4294901760
        %1976 = vmatprep.mubr.f32.mxu0 %v1975
        %v1977 = vand.u32 %v1320, 4294901760
        %v1978 = vsub.f32 %v1320, %v1977
        %v1979 = vand.u32 %v1978, 4294901760
        %1980 = vmatmul.mubr.f32.gmra.mrb[0].mxu0 %v1979
        %v1981 = vpop.f32.mrb[0].mxu0
        %v1982 = vadd.f32 %v1865, %v1981
        %v1983 = vpop.f32.mrb[0].mxu0
        %1984 = vdwg.mxu0
        %1985 = vmatprep.subr.mxu0 0.0
        %v1986 = vand.u32 %v1322, 4294901760
        %v1987 = vsub.f32 %v1322, %v1986
        %v1988 = vand.u32 %v1987, 4294901760
        %1989 = vmatpush1.msra.mxu0 %v1988
        %1990 = vmatprep.subr.mxu0 0.0
        %v1991 = vand.u32 %v1323, 4294901760
        %v1992 = vsub.f32 %v1323, %v1991
        %v1993 = vand.u32 %v1992, 4294901760
        %1994 = vmatpush1.msra.mxu0 %v1993
        %1995 = vmatprep.subr.mxu0 0.0
        %v1996 = vand.u32 %v1324, 4294901760
        %v1997 = vsub.f32 %v1324, %v1996
        %v1998 = vand.u32 %v1997, 4294901760
        %1999 = vmatpush1.msra.mxu0 %v1998
        %2000 = vmatprep.subr.mxu0 0.0
        %v2001 = vand.u32 %v1325, 4294901760
        %v2002 = vsub.f32 %v1325, %v2001
        %v2003 = vand.u32 %v2002, 4294901760
        %2004 = vmatpush1.msra.mxu0 %v2003
        %2005 = vmatprep.subr.mxu0 0.0
        %v2006 = vand.u32 %v1326, 4294901760
        %v2007 = vsub.f32 %v1326, %v2006
        %v2008 = vand.u32 %v2007, 4294901760
        %2009 = vmatpush1.msra.mxu0 %v2008
        %2010 = vmatprep.subr.mxu0 0.0
        %v2011 = vand.u32 %v1327, 4294901760
        %v2012 = vsub.f32 %v1327, %v2011
        %v2013 = vand.u32 %v2012, 4294901760
        %2014 = vmatpush1.msra.mxu0 %v2013
        %2015 = vmatprep.subr.mxu0 0.0
        %v2016 = vand.u32 %v1328, 4294901760
        %v2017 = vsub.f32 %v1328, %v2016
        %v2018 = vand.u32 %v2017, 4294901760
        %2019 = vmatpush1.msra.mxu0 %v2018
        %2020 = vmatprep.subr.mxu0 0.0
        %v2021 = vand.u32 %v1329, 4294901760
        %v2022 = vsub.f32 %v1329, %v2021
        %v2023 = vand.u32 %v2022, 4294901760
        %2024 = vmatpush1.msra.mxu0 %v2023
        %2025 = vmatprep.subr.mxu0 0.0
        %v2026 = vand.u32 %v1330, 4294901760
        %v2027 = vsub.f32 %v1330, %v2026
        %v2028 = vand.u32 %v2027, 4294901760
        %2029 = vmatpush1.msra.mxu0 %v2028
        %2030 = vmatprep.subr.mxu0 0.0
        %v2031 = vand.u32 %v1331, 4294901760
        %v2032 = vsub.f32 %v1331, %v2031
        %v2033 = vand.u32 %v2032, 4294901760
        %2034 = vmatpush1.msra.mxu0 %v2033
        %2035 = vmatprep.subr.mxu0 0.0
        %v2036 = vand.u32 %v1332, 4294901760
        %v2037 = vsub.f32 %v1332, %v2036
        %v2038 = vand.u32 %v2037, 4294901760
        %2039 = vmatpush1.msra.mxu0 %v2038
        %2040 = vmatprep.subr.mxu0 0.0
        %v2041 = vand.u32 %v1333, 4294901760
        %v2042 = vsub.f32 %v1333, %v2041
        %v2043 = vand.u32 %v2042, 4294901760
        %2044 = vmatpush1.msra.mxu0 %v2043
        %2045 = vmatprep.subr.mxu0 0.0
        %v2046 = vand.u32 %v1334, 4294901760
        %v2047 = vsub.f32 %v1334, %v2046
        %v2048 = vand.u32 %v2047, 4294901760
        %2049 = vmatpush1.msra.mxu0 %v2048
        %2050 = vmatprep.subr.mxu0 0.0
        %v2051 = vand.u32 %v1335, 4294901760
        %v2052 = vsub.f32 %v1335, %v2051
        %v2053 = vand.u32 %v2052, 4294901760
        %2054 = vmatpush1.msra.mxu0 %v2053
        %2055 = vmatprep.subr.mxu0 0.0
        %v2056 = vand.u32 %v1336, 4294901760
        %v2057 = vsub.f32 %v1336, %v2056
        %v2058 = vand.u32 %v2057, 4294901760
        %2059 = vmatpush1.msra.mxu0 %v2058
        %2060 = vmatprep.subr.mxu0 0.0
        %v2061 = vand.u32 %v1337, 4294901760
        %v2062 = vsub.f32 %v1337, %v2061
        %v2063 = vand.u32 %v2062, 4294901760
        %2064 = vmatpush1.msra.mxu0 %v2063
        %2065 = vmatprep.subr.mxu0 0.0
        %v2066 = vand.u32 %v1338, 4294901760
        %v2067 = vsub.f32 %v1338, %v2066
        %v2068 = vand.u32 %v2067, 4294901760
        %2069 = vmatpush1.msra.mxu0 %v2068
        %2070 = vmatprep.subr.mxu0 0.0
        %v2071 = vand.u32 %v1339, 4294901760
        %v2072 = vsub.f32 %v1339, %v2071
        %v2073 = vand.u32 %v2072, 4294901760
        %2074 = vmatpush1.msra.mxu0 %v2073
        %2075 = vmatprep.subr.mxu0 0.0
        %v2076 = vand.u32 %v1340, 4294901760
        %v2077 = vsub.f32 %v1340, %v2076
        %v2078 = vand.u32 %v2077, 4294901760
        %2079 = vmatpush1.msra.mxu0 %v2078
        %2080 = vmatprep.subr.mxu0 0.0
        %v2081 = vand.u32 %v1341, 4294901760
        %v2082 = vsub.f32 %v1341, %v2081
        %v2083 = vand.u32 %v2082, 4294901760
        %2084 = vmatpush1.msra.mxu0 %v2083
        %2085 = vmatprep.subr.mxu0 0.0
        %v2086 = vand.u32 %v1342, 4294901760
        %v2087 = vsub.f32 %v1342, %v2086
        %v2088 = vand.u32 %v2087, 4294901760
        %2089 = vmatpush1.msra.mxu0 %v2088
        %2090 = vmatprep.subr.mxu0 0.0
        %v2091 = vand.u32 %v1343, 4294901760
        %v2092 = vsub.f32 %v1343, %v2091
        %v2093 = vand.u32 %v2092, 4294901760
        %2094 = vmatpush1.msra.mxu0 %v2093
        %2095 = vmatprep.subr.mxu0 0.0
        %v2096 = vand.u32 %v1344, 4294901760
        %v2097 = vsub.f32 %v1344, %v2096
        %v2098 = vand.u32 %v2097, 4294901760
        %2099 = vmatpush1.msra.mxu0 %v2098
        %2100 = vmatprep.subr.mxu0 0.0
        %v2101 = vand.u32 %v1345, 4294901760
        %v2102 = vsub.f32 %v1345, %v2101
        %v2103 = vand.u32 %v2102, 4294901760
        %2104 = vmatpush1.msra.mxu0 %v2103
        %2105 = vmatprep.subr.mxu0 0.0
        %v2106 = vand.u32 %v1346, 4294901760
        %v2107 = vsub.f32 %v1346, %v2106
        %v2108 = vand.u32 %v2107, 4294901760
        %2109 = vmatpush1.msra.mxu0 %v2108
        %2110 = vmatprep.subr.mxu0 0.0
        %v2111 = vand.u32 %v1347, 4294901760
        %v2112 = vsub.f32 %v1347, %v2111
        %v2113 = vand.u32 %v2112, 4294901760
        %2114 = vmatpush1.msra.mxu0 %v2113
        %2115 = vmatprep.subr.mxu0 0.0
        %v2116 = vand.u32 %v1348, 4294901760
        %v2117 = vsub.f32 %v1348, %v2116
        %v2118 = vand.u32 %v2117, 4294901760
        %2119 = vmatpush1.msra.mxu0 %v2118
        %2120 = vmatprep.subr.mxu0 0.0
        %v2121 = vand.u32 %v1349, 4294901760
        %v2122 = vsub.f32 %v1349, %v2121
        %v2123 = vand.u32 %v2122, 4294901760
        %2124 = vmatpush1.msra.mxu0 %v2123
        %2125 = vmatprep.subr.mxu0 0.0
        %v2126 = vand.u32 %v1350, 4294901760
        %v2127 = vsub.f32 %v1350, %v2126
        %v2128 = vand.u32 %v2127, 4294901760
        %2129 = vmatpush1.msra.mxu0 %v2128
        %2130 = vmatprep.subr.mxu0 0.0
        %v2131 = vand.u32 %v1351, 4294901760
        %v2132 = vsub.f32 %v1351, %v2131
        %v2133 = vand.u32 %v2132, 4294901760
        %2134 = vmatpush1.msra.mxu0 %v2133
        %2135 = vmatprep.subr.mxu0 0.0
        %2136 = vmatpush1.msra.mxu0 0.0
        %2137 = vmatprep.subr.mxu0 0.0
        %2138 = vmatpush1.msra.mxu0 0.0
        %v2139 = vand.u32 %v1366, 4294901760
        %2140 = vmatprep.mubr.f32.mxu0 %v2139
        %v2141 = vand.u32 %v1318, 4294901760
        %2142 = vmatmul.mubr.f32.gmra.mrb[0].mxu0 %v2141
        %v2143 = vpop.f32.mrb[0].mxu0
        %v2144 = vadd.f32 %v1971, %v2143
        %v2145 = vpop.f32.mrb[0].mxu0
        %v2146 = vand.u32 %v1369, 4294901760
        %2147 = vmatprep.mubr.f32.mxu0 %v2146
        %v2148 = vand.u32 %v1320, 4294901760
        %2149 = vmatmul.mubr.f32.gmra.mrb[0].mxu0 %v2148
        %v2150 = vpop.f32.mrb[0].mxu0
        %v2151 = vadd.f32 %v1982, %v2150
        %v2152 = vpop.f32.mrb[0].mxu0
        %2153 = vdwg.mxu0
        %2154 = vmatprep.subr.mxu0 0.0
        %v2155 = vand.u32 %v1322, 4294901760
        %2156 = vmatpush1.msra.mxu0 %v2155
        %2157 = vmatprep.subr.mxu0 0.0
        %v2158 = vand.u32 %v1323, 4294901760
        %2159 = vmatpush1.msra.mxu0 %v2158
        %2160 = vmatprep.subr.mxu0 0.0
        %v2161 = vand.u32 %v1324, 4294901760
        %2162 = vmatpush1.msra.mxu0 %v2161
        %2163 = vmatprep.subr.mxu0 0.0
        %v2164 = vand.u32 %v1325, 4294901760
        %2165 = vmatpush1.msra.mxu0 %v2164
        %2166 = vmatprep.subr.mxu0 0.0
        %v2167 = vand.u32 %v1326, 4294901760
        %2168 = vmatpush1.msra.mxu0 %v2167
        %2169 = vmatprep.subr.mxu0 0.0
        %v2170 = vand.u32 %v1327, 4294901760
        %2171 = vmatpush1.msra.mxu0 %v2170
        %2172 = vmatprep.subr.mxu0 0.0
        %v2173 = vand.u32 %v1328, 4294901760
        %2174 = vmatpush1.msra.mxu0 %v2173
        %2175 = vmatprep.subr.mxu0 0.0
        %v2176 = vand.u32 %v1329, 4294901760
        %2177 = vmatpush1.msra.mxu0 %v2176
        %2178 = vmatprep.subr.mxu0 0.0
        %v2179 = vand.u32 %v1330, 4294901760
        %2180 = vmatpush1.msra.mxu0 %v2179
        %2181 = vmatprep.subr.mxu0 0.0
        %v2182 = vand.u32 %v1331, 4294901760
        %2183 = vmatpush1.msra.mxu0 %v2182
        %2184 = vmatprep.subr.mxu0 0.0
        %v2185 = vand.u32 %v1332, 4294901760
        %2186 = vmatpush1.msra.mxu0 %v2185
        %2187 = vmatprep.subr.mxu0 0.0
        %v2188 = vand.u32 %v1333, 4294901760
        %2189 = vmatpush1.msra.mxu0 %v2188
        %2190 = vmatprep.subr.mxu0 0.0
        %v2191 = vand.u32 %v1334, 4294901760
        %2192 = vmatpush1.msra.mxu0 %v2191
        %2193 = vmatprep.subr.mxu0 0.0
        %v2194 = vand.u32 %v1335, 4294901760
        %2195 = vmatpush1.msra.mxu0 %v2194
        %2196 = vmatprep.subr.mxu0 0.0
        %v2197 = vand.u32 %v1336, 4294901760
        %2198 = vmatpush1.msra.mxu0 %v2197
        %2199 = vmatprep.subr.mxu0 0.0
        %v2200 = vand.u32 %v1337, 4294901760
        %2201 = vmatpush1.msra.mxu0 %v2200
        %2202 = vmatprep.subr.mxu0 0.0
        %v2203 = vand.u32 %v1338, 4294901760
        %2204 = vmatpush1.msra.mxu0 %v2203
        %2205 = vmatprep.subr.mxu0 0.0
        %v2206 = vand.u32 %v1339, 4294901760
        %2207 = vmatpush1.msra.mxu0 %v2206
        %2208 = vmatprep.subr.mxu0 0.0
        %v2209 = vand.u32 %v1340, 4294901760
        %2210 = vmatpush1.msra.mxu0 %v2209
        %2211 = vmatprep.subr.mxu0 0.0
        %v2212 = vand.u32 %v1341, 4294901760
        %2213 = vmatpush1.msra.mxu0 %v2212
        %2214 = vmatprep.subr.mxu0 0.0
        %v2215 = vand.u32 %v1342, 4294901760
        %2216 = vmatpush1.msra.mxu0 %v2215
        %2217 = vmatprep.subr.mxu0 0.0
        %v2218 = vand.u32 %v1343, 4294901760
        %2219 = vmatpush1.msra.mxu0 %v2218
        %2220 = vmatprep.subr.mxu0 0.0
        %v2221 = vand.u32 %v1344, 4294901760
        %2222 = vmatpush1.msra.mxu0 %v2221
        %2223 = vmatprep.subr.mxu0 0.0
        %v2224 = vand.u32 %v1345, 4294901760
        %2225 = vmatpush1.msra.mxu0 %v2224
        %2226 = vmatprep.subr.mxu0 0.0
        %v2227 = vand.u32 %v1346, 4294901760
        %2228 = vmatpush1.msra.mxu0 %v2227
        %2229 = vmatprep.subr.mxu0 0.0
        %v2230 = vand.u32 %v1347, 4294901760
        %2231 = vmatpush1.msra.mxu0 %v2230
        %2232 = vmatprep.subr.mxu0 0.0
        %v2233 = vand.u32 %v1348, 4294901760
        %2234 = vmatpush1.msra.mxu0 %v2233
        %2235 = vmatprep.subr.mxu0 0.0
        %v2236 = vand.u32 %v1349, 4294901760
        %2237 = vmatpush1.msra.mxu0 %v2236
        %2238 = vmatprep.subr.mxu0 0.0
        %v2239 = vand.u32 %v1350, 4294901760
        %2240 = vmatpush1.msra.mxu0 %v2239
        %2241 = vmatprep.subr.mxu0 0.0
        %v2242 = vand.u32 %v1351, 4294901760
        %2243 = vmatpush1.msra.mxu0 %v2242
        %2244 = vmatprep.subr.mxu0 0.0
        %2245 = vmatpush1.msra.mxu0 0.0
        %2246 = vmatprep.subr.mxu0 0.0
        %2247 = vmatpush1.msra.mxu0 0.0
        %v2248 = vand.u32 %v1366, 4294901760
        %2249 = vmatprep.mubr.f32.mxu0 %v2248
        %v2250 = vand.u32 %v1318, 4294901760
        %2251 = vmatmul.mubr.f32.gmra.mrb[0].mxu0 %v2250
        %v2252 = vpop.f32.mrb[0].mxu0
        %v2253 = vadd.f32 %v2144, %v2252
        %v2254 = vpop.f32.mrb[0].mxu0
        %v2255 = vand.u32 %v1369, 4294901760
        %2256 = vmatprep.mubr.f32.mxu0 %v2255
        %v2257 = vand.u32 %v1320, 4294901760
        %2258 = vmatmul.mubr.f32.gmra.mrb[0].mxu0 %v2257
        %v2259 = vpop.f32.mrb[0].mxu0
        %v2260 = vadd.f32 %v2151, %v2259
        %v2261 = vpop.f32.mrb[0].mxu0
        %2262 = vdwg.mxu0
        %v2263 = vld [vmem:[%s298] sm:$0xff]
        %v2264 = vld [vmem:[%s258] sm:$0xff]
        %v2265 = vmax.f32 %v2263, %v2264
        %v2266 = vld [vmem:[%s5] sm:$0xff]
        %v2267 = vld [vmem:[%s5 + $0x8] sm:$0xff]
        %vm2268 = vcmask 64512
        %v2270 = vsel %vm2268, %v2266, 0
        %v2273 = vsel %vm2268, %v2267, 0
        %2275 = vmatprep.subr.mxu0 0.0
        %v2276 = vand.u32 %v2265, 4294901760
        %2277 = vmatpush1.msra.mxu0 %v2276
        %2278 = vmatprep.subr.mxu0 0.0
        %2279 = vmatpush1.msra.mxu0 0.0
        %2280 = vmatprep.subr.mxu0 0.0
        %2281 = vmatpush1.msra.mxu0 0.0
        %2282 = vmatprep.subr.mxu0 0.0
        %2283 = vmatpush1.msra.mxu0 0.0
        %2284 = vmatprep.subr.mxu0 0.0
        %2285 = vmatpush1.msra.mxu0 0.0
        %2286 = vmatprep.subr.mxu0 0.0
        %2287 = vmatpush1.msra.mxu0 0.0
        %2288 = vmatprep.subr.mxu0 0.0
        %2289 = vmatpush1.msra.mxu0 0.0
        %2290 = vmatprep.subr.mxu0 0.0
        %2291 = vmatpush1.msra.mxu0 0.0
        %2292 = vmatprep.subr.mxu0 0.0
        %2293 = vmatpush1.msra.mxu0 0.0
        %2294 = vmatprep.subr.mxu0 0.0
        %2295 = vmatpush1.msra.mxu0 0.0
        %2296 = vmatprep.subr.mxu0 0.0
        %2297 = vmatpush1.msra.mxu0 0.0
        %2298 = vmatprep.subr.mxu0 0.0
        %2299 = vmatpush1.msra.mxu0 0.0
        %2300 = vmatprep.subr.mxu0 0.0
        %2301 = vmatpush1.msra.mxu0 0.0
        %2302 = vmatprep.subr.mxu0 0.0
        %2303 = vmatpush1.msra.mxu0 0.0
        %2304 = vmatprep.subr.mxu0 0.0
        %2305 = vmatpush1.msra.mxu0 0.0
        %2306 = vmatprep.subr.mxu0 0.0
        %2307 = vmatpush1.msra.mxu0 0.0
        %2308 = vmatprep.subr.mxu0 0.0
        %2309 = vmatpush1.msra.mxu0 0.0
        %2310 = vmatprep.subr.mxu0 0.0
        %2311 = vmatpush1.msra.mxu0 0.0
        %2312 = vmatprep.subr.mxu0 0.0
        %2313 = vmatpush1.msra.mxu0 0.0
        %2314 = vmatprep.subr.mxu0 0.0
        %2315 = vmatpush1.msra.mxu0 0.0
        %2316 = vmatprep.subr.mxu0 0.0
        %2317 = vmatpush1.msra.mxu0 0.0
        %2318 = vmatprep.subr.mxu0 0.0
        %2319 = vmatpush1.msra.mxu0 0.0
        %2320 = vmatprep.subr.mxu0 0.0
        %2321 = vmatpush1.msra.mxu0 0.0
        %2322 = vmatprep.subr.mxu0 0.0
        %2323 = vmatpush1.msra.mxu0 0.0
        %2324 = vmatprep.subr.mxu0 0.0
        %2325 = vmatpush1.msra.mxu0 0.0
        %2326 = vmatprep.subr.mxu0 0.0
        %2327 = vmatpush1.msra.mxu0 0.0
        %2328 = vmatprep.subr.mxu0 0.0
        %2329 = vmatpush1.msra.mxu0 0.0
        %2330 = vmatprep.subr.mxu0 0.0
        %2331 = vmatpush1.msra.mxu0 0.0
        %2332 = vmatprep.subr.mxu0 0.0
        %2333 = vmatpush1.msra.mxu0 0.0
        %2334 = vmatprep.subr.mxu0 0.0
        %2335 = vmatpush1.msra.mxu0 0.0
        %2336 = vmatprep.subr.mxu0 0.0
        %2337 = vmatpush1.msra.mxu0 0.0
        %2338 = vmatprep.subr.mxu0 0.0
        %2339 = vmatpush1.msra.mxu0 0.0
        %2340 = vmatprep.mubr.f32.mxu0 0.0
        %v2341 = vand.u32 %v2270, 4294901760
        %v2342 = vsub.f32 %v2270, %v2341
        %v2343 = vand.u32 %v2342, 4294901760
        %v2344 = vsub.f32 %v2342, %v2343
        %v2345 = vand.u32 %v2344, 4294901760
        %2346 = vmatmul.mubr.f32.gmra.mrb[0].mxu0 %v2345
        %v2347 = vpop.f32.mrb[0].mxu0
        %v2348 = vadd.f32 0.0, %v2347
        %v2349 = vpop.f32.mrb[0].mxu0
        %2350 = vmatprep.mubr.f32.mxu0 0.0
        %v2351 = vand.u32 %v2273, 4294901760
        %v2352 = vsub.f32 %v2273, %v2351
        %v2353 = vand.u32 %v2352, 4294901760
        %v2354 = vsub.f32 %v2352, %v2353
        %v2355 = vand.u32 %v2354, 4294901760
        %2356 = vmatmul.mubr.f32.gmra.mrb[0].mxu0 %v2355
        %v2357 = vpop.f32.mrb[0].mxu0
        %v2358 = vadd.f32 0.0, %v2357
        %v2359 = vpop.f32.mrb[0].mxu0
        %2360 = vdwg.mxu0
        %2361 = vmatprep.subr.mxu0 0.0
        %v2362 = vand.u32 %v2265, 4294901760
        %v2363 = vsub.f32 %v2265, %v2362
        %v2364 = vand.u32 %v2363, 4294901760
        %v2365 = vsub.f32 %v2363, %v2364
        %v2366 = vand.u32 %v2365, 4294901760
        %2367 = vmatpush1.msra.mxu0 %v2366
        %2368 = vmatprep.subr.mxu0 0.0
        %2369 = vmatpush1.msra.mxu0 0.0
        %2370 = vmatprep.subr.mxu0 0.0
        %2371 = vmatpush1.msra.mxu0 0.0
        %2372 = vmatprep.subr.mxu0 0.0
        %2373 = vmatpush1.msra.mxu0 0.0
        %2374 = vmatprep.subr.mxu0 0.0
        %2375 = vmatpush1.msra.mxu0 0.0
        %2376 = vmatprep.subr.mxu0 0.0
        %2377 = vmatpush1.msra.mxu0 0.0
        %2378 = vmatprep.subr.mxu0 0.0
        %2379 = vmatpush1.msra.mxu0 0.0
        %2380 = vmatprep.subr.mxu0 0.0
        %2381 = vmatpush1.msra.mxu0 0.0
        %2382 = vmatprep.subr.mxu0 0.0
        %2383 = vmatpush1.msra.mxu0 0.0
        %2384 = vmatprep.subr.mxu0 0.0
        %2385 = vmatpush1.msra.mxu0 0.0
        %2386 = vmatprep.subr.mxu0 0.0
        %2387 = vmatpush1.msra.mxu0 0.0
        %2388 = vmatprep.subr.mxu0 0.0
        %2389 = vmatpush1.msra.mxu0 0.0
        %2390 = vmatprep.subr.mxu0 0.0
        %2391 = vmatpush1.msra.mxu0 0.0
        %2392 = vmatprep.subr.mxu0 0.0
        %2393 = vmatpush1.msra.mxu0 0.0
        %2394 = vmatprep.subr.mxu0 0.0
        %2395 = vmatpush1.msra.mxu0 0.0
        %2396 = vmatprep.subr.mxu0 0.0
        %2397 = vmatpush1.msra.mxu0 0.0
        %2398 = vmatprep.subr.mxu0 0.0
        %2399 = vmatpush1.msra.mxu0 0.0
        %2400 = vmatprep.subr.mxu0 0.0
        %2401 = vmatpush1.msra.mxu0 0.0
        %2402 = vmatprep.subr.mxu0 0.0
        %2403 = vmatpush1.msra.mxu0 0.0
        %2404 = vmatprep.subr.mxu0 0.0
        %2405 = vmatpush1.msra.mxu0 0.0
        %2406 = vmatprep.subr.mxu0 0.0
        %2407 = vmatpush1.msra.mxu0 0.0
        %2408 = vmatprep.subr.mxu0 0.0
        %2409 = vmatpush1.msra.mxu0 0.0
        %2410 = vmatprep.subr.mxu0 0.0
        %2411 = vmatpush1.msra.mxu0 0.0
        %2412 = vmatprep.subr.mxu0 0.0
        %2413 = vmatpush1.msra.mxu0 0.0
        %2414 = vmatprep.subr.mxu0 0.0
        %2415 = vmatpush1.msra.mxu0 0.0
        %2416 = vmatprep.subr.mxu0 0.0
        %2417 = vmatpush1.msra.mxu0 0.0
        %2418 = vmatprep.subr.mxu0 0.0
        %2419 = vmatpush1.msra.mxu0 0.0
        %2420 = vmatprep.subr.mxu0 0.0
        %2421 = vmatpush1.msra.mxu0 0.0
        %2422 = vmatprep.subr.mxu0 0.0
        %2423 = vmatpush1.msra.mxu0 0.0
        %2424 = vmatprep.subr.mxu0 0.0
        %2425 = vmatpush1.msra.mxu0 0.0
        %2426 = vmatprep.subr.mxu0 0.0
        %2427 = vmatpush1.msra.mxu0 0.0
        %2428 = vmatprep.subr.mxu0 0.0
        %2429 = vmatpush1.msra.mxu0 0.0
        %2430 = vmatprep.mubr.f32.mxu0 0.0
        %v2431 = vand.u32 %v2270, 4294901760
        %2432 = vmatmul.mubr.f32.gmra.mrb[0].mxu0 %v2431
        %v2433 = vpop.f32.mrb[0].mxu0
        %v2434 = vadd.f32 %v2348, %v2433
        %v2435 = vpop.f32.mrb[0].mxu0
        %2436 = vmatprep.mubr.f32.mxu0 0.0
        %v2437 = vand.u32 %v2273, 4294901760
        %2438 = vmatmul.mubr.f32.gmra.mrb[0].mxu0 %v2437
        %v2439 = vpop.f32.mrb[0].mxu0
        %v2440 = vadd.f32 %v2358, %v2439
        %v2441 = vpop.f32.mrb[0].mxu0
        %2442 = vdwg.mxu0
        %2443 = vmatprep.subr.mxu0 0.0
        %v2444 = vand.u32 %v2265, 4294901760
        %v2445 = vsub.f32 %v2265, %v2444
        %2446 = vmatpush1.msra.mxu0 %v2445
        %2447 = vmatprep.subr.mxu0 0.0
        %2448 = vmatpush1.msra.mxu0 0.0
        %2449 = vmatprep.subr.mxu0 0.0
        %2450 = vmatpush1.msra.mxu0 0.0
        %2451 = vmatprep.subr.mxu0 0.0
        %2452 = vmatpush1.msra.mxu0 0.0
        %2453 = vmatprep.subr.mxu0 0.0
        %2454 = vmatpush1.msra.mxu0 0.0
        %2455 = vmatprep.subr.mxu0 0.0
        %2456 = vmatpush1.msra.mxu0 0.0
        %2457 = vmatprep.subr.mxu0 0.0
        %2458 = vmatpush1.msra.mxu0 0.0
        %2459 = vmatprep.subr.mxu0 0.0
        %2460 = vmatpush1.msra.mxu0 0.0
        %2461 = vmatprep.subr.mxu0 0.0
        %2462 = vmatpush1.msra.mxu0 0.0
        %2463 = vmatprep.subr.mxu0 0.0
        %2464 = vmatpush1.msra.mxu0 0.0
        %2465 = vmatprep.subr.mxu0 0.0
        %2466 = vmatpush1.msra.mxu0 0.0
        %2467 = vmatprep.subr.mxu0 0.0
        %2468 = vmatpush1.msra.mxu0 0.0
        %2469 = vmatprep.subr.mxu0 0.0
        %2470 = vmatpush1.msra.mxu0 0.0
        %2471 = vmatprep.subr.mxu0 0.0
        %2472 = vmatpush1.msra.mxu0 0.0
        %2473 = vmatprep.subr.mxu0 0.0
        %2474 = vmatpush1.msra.mxu0 0.0
        %2475 = vmatprep.subr.mxu0 0.0
        %2476 = vmatpush1.msra.mxu0 0.0
        %2477 = vmatprep.subr.mxu0 0.0
        %2478 = vmatpush1.msra.mxu0 0.0
        %2479 = vmatprep.subr.mxu0 0.0
        %2480 = vmatpush1.msra.mxu0 0.0
        %2481 = vmatprep.subr.mxu0 0.0
        %2482 = vmatpush1.msra.mxu0 0.0
        %2483 = vmatprep.subr.mxu0 0.0
        %2484 = vmatpush1.msra.mxu0 0.0
        %2485 = vmatprep.subr.mxu0 0.0
        %2486 = vmatpush1.msra.mxu0 0.0
        %2487 = vmatprep.subr.mxu0 0.0
        %2488 = vmatpush1.msra.mxu0 0.0
        %2489 = vmatprep.subr.mxu0 0.0
        %2490 = vmatpush1.msra.mxu0 0.0
        %2491 = vmatprep.subr.mxu0 0.0
        %2492 = vmatpush1.msra.mxu0 0.0
        %2493 = vmatprep.subr.mxu0 0.0
        %2494 = vmatpush1.msra.mxu0 0.0
        %2495 = vmatprep.subr.mxu0 0.0
        %2496 = vmatpush1.msra.mxu0 0.0
        %2497 = vmatprep.subr.mxu0 0.0
        %2498 = vmatpush1.msra.mxu0 0.0
        %2499 = vmatprep.subr.mxu0 0.0
        %2500 = vmatpush1.msra.mxu0 0.0
        %2501 = vmatprep.subr.mxu0 0.0
        %2502 = vmatpush1.msra.mxu0 0.0
        %2503 = vmatprep.subr.mxu0 0.0
        %2504 = vmatpush1.msra.mxu0 0.0
        %2505 = vmatprep.subr.mxu0 0.0
        %2506 = vmatpush1.msra.mxu0 0.0
        %2507 = vmatprep.subr.mxu0 0.0
        %2508 = vmatpush1.msra.mxu0 0.0
        %2509 = vmatprep.mubr.f32.mxu0 0.0
        %v2510 = vand.u32 %v2270, 4294901760
        %v2511 = vsub.f32 %v2270, %v2510
        %2512 = vmatmul.mubr.f32.gmra.mrb[0].mxu0 %v2511
        %v2513 = vpop.f32.mrb[0].mxu0
        %v2514 = vadd.f32 %v2434, %v2513
        %v2515 = vpop.f32.mrb[0].mxu0
        %2516 = vmatprep.mubr.f32.mxu0 0.0
        %v2517 = vand.u32 %v2273, 4294901760
        %v2518 = vsub.f32 %v2273, %v2517
        %2519 = vmatmul.mubr.f32.gmra.mrb[0].mxu0 %v2518
        %v2520 = vpop.f32.mrb[0].mxu0
        %v2521 = vadd.f32 %v2440, %v2520
        %v2522 = vpop.f32.mrb[0].mxu0
        %2523 = vdwg.mxu0
        %2524 = vmatprep.subr.mxu0 0.0
        %v2525 = vand.u32 %v2265, 4294901760
        %2526 = vmatpush1.msra.mxu0 %v2525
        %2527 = vmatprep.subr.mxu0 0.0
        %2528 = vmatpush1.msra.mxu0 0.0
        %2529 = vmatprep.subr.mxu0 0.0
        %2530 = vmatpush1.msra.mxu0 0.0
        %2531 = vmatprep.subr.mxu0 0.0
        %2532 = vmatpush1.msra.mxu0 0.0
        %2533 = vmatprep.subr.mxu0 0.0
        %2534 = vmatpush1.msra.mxu0 0.0
        %2535 = vmatprep.subr.mxu0 0.0
        %2536 = vmatpush1.msra.mxu0 0.0
        %2537 = vmatprep.subr.mxu0 0.0
        %2538 = vmatpush1.msra.mxu0 0.0
        %2539 = vmatprep.subr.mxu0 0.0
        %2540 = vmatpush1.msra.mxu0 0.0
        %2541 = vmatprep.subr.mxu0 0.0
        %2542 = vmatpush1.msra.mxu0 0.0
        %2543 = vmatprep.subr.mxu0 0.0
        %2544 = vmatpush1.msra.mxu0 0.0
        %2545 = vmatprep.subr.mxu0 0.0
        %2546 = vmatpush1.msra.mxu0 0.0
        %2547 = vmatprep.subr.mxu0 0.0
        %2548 = vmatpush1.msra.mxu0 0.0
        %2549 = vmatprep.subr.mxu0 0.0
        %2550 = vmatpush1.msra.mxu0 0.0
        %2551 = vmatprep.subr.mxu0 0.0
        %2552 = vmatpush1.msra.mxu0 0.0
        %2553 = vmatprep.subr.mxu0 0.0
        %2554 = vmatpush1.msra.mxu0 0.0
        %2555 = vmatprep.subr.mxu0 0.0
        %2556 = vmatpush1.msra.mxu0 0.0
        %2557 = vmatprep.subr.mxu0 0.0
        %2558 = vmatpush1.msra.mxu0 0.0
        %2559 = vmatprep.subr.mxu0 0.0
        %2560 = vmatpush1.msra.mxu0 0.0
        %2561 = vmatprep.subr.mxu0 0.0
        %2562 = vmatpush1.msra.mxu0 0.0
        %2563 = vmatprep.subr.mxu0 0.0
        %2564 = vmatpush1.msra.mxu0 0.0
        %2565 = vmatprep.subr.mxu0 0.0
        %2566 = vmatpush1.msra.mxu0 0.0
        %2567 = vmatprep.subr.mxu0 0.0
        %2568 = vmatpush1.msra.mxu0 0.0
        %2569 = vmatprep.subr.mxu0 0.0
        %2570 = vmatpush1.msra.mxu0 0.0
        %2571 = vmatprep.subr.mxu0 0.0
        %2572 = vmatpush1.msra.mxu0 0.0
        %2573 = vmatprep.subr.mxu0 0.0
        %2574 = vmatpush1.msra.mxu0 0.0
        %2575 = vmatprep.subr.mxu0 0.0
        %2576 = vmatpush1.msra.mxu0 0.0
        %2577 = vmatprep.subr.mxu0 0.0
        %2578 = vmatpush1.msra.mxu0 0.0
        %2579 = vmatprep.subr.mxu0 0.0
        %2580 = vmatpush1.msra.mxu0 0.0
        %2581 = vmatprep.subr.mxu0 0.0
        %2582 = vmatpush1.msra.mxu0 0.0
        %2583 = vmatprep.subr.mxu0 0.0
        %2584 = vmatpush1.msra.mxu0 0.0
        %2585 = vmatprep.subr.mxu0 0.0
        %2586 = vmatpush1.msra.mxu0 0.0
        %2587 = vmatprep.subr.mxu0 0.0
        %2588 = vmatpush1.msra.mxu0 0.0
        %2589 = vmatprep.mubr.f32.mxu0 0.0
        %v2590 = vand.u32 %v2270, 4294901760
        %v2591 = vsub.f32 %v2270, %v2590
        %v2592 = vand.u32 %v2591, 4294901760
        %2593 = vmatmul.mubr.f32.gmra.mrb[0].mxu0 %v2592
        %v2594 = vpop.f32.mrb[0].mxu0
        %v2595 = vadd.f32 %v2514, %v2594
        %v2596 = vpop.f32.mrb[0].mxu0
        %2597 = vmatprep.mubr.f32.mxu0 0.0
        %v2598 = vand.u32 %v2273, 4294901760
        %v2599 = vsub.f32 %v2273, %v2598
        %v2600 = vand.u32 %v2599, 4294901760
        %2601 = vmatmul.mubr.f32.gmra.mrb[0].mxu0 %v2600
        %v2602 = vpop.f32.mrb[0].mxu0
        %v2603 = vadd.f32 %v2521, %v2602
        %v2604 = vpop.f32.mrb[0].mxu0
        %2605 = vdwg.mxu0
        %2606 = vmatprep.subr.mxu0 0.0
        %v2607 = vand.u32 %v2265, 4294901760
        %v2608 = vsub.f32 %v2265, %v2607
        %v2609 = vand.u32 %v2608, 4294901760
        %2610 = vmatpush1.msra.mxu0 %v2609
        %2611 = vmatprep.subr.mxu0 0.0
        %2612 = vmatpush1.msra.mxu0 0.0
        %2613 = vmatprep.subr.mxu0 0.0
        %2614 = vmatpush1.msra.mxu0 0.0
        %2615 = vmatprep.subr.mxu0 0.0
        %2616 = vmatpush1.msra.mxu0 0.0
        %2617 = vmatprep.subr.mxu0 0.0
        %2618 = vmatpush1.msra.mxu0 0.0
        %2619 = vmatprep.subr.mxu0 0.0
        %2620 = vmatpush1.msra.mxu0 0.0
        %2621 = vmatprep.subr.mxu0 0.0
        %2622 = vmatpush1.msra.mxu0 0.0
        %2623 = vmatprep.subr.mxu0 0.0
        %2624 = vmatpush1.msra.mxu0 0.0
        %2625 = vmatprep.subr.mxu0 0.0
        %2626 = vmatpush1.msra.mxu0 0.0
        %2627 = vmatprep.subr.mxu0 0.0
        %2628 = vmatpush1.msra.mxu0 0.0
        %2629 = vmatprep.subr.mxu0 0.0
        %2630 = vmatpush1.msra.mxu0 0.0
        %2631 = vmatprep.subr.mxu0 0.0
        %2632 = vmatpush1.msra.mxu0 0.0
        %2633 = vmatprep.subr.mxu0 0.0
        %2634 = vmatpush1.msra.mxu0 0.0
        %2635 = vmatprep.subr.mxu0 0.0
        %2636 = vmatpush1.msra.mxu0 0.0
        %2637 = vmatprep.subr.mxu0 0.0
        %2638 = vmatpush1.msra.mxu0 0.0
        %2639 = vmatprep.subr.mxu0 0.0
        %2640 = vmatpush1.msra.mxu0 0.0
        %2641 = vmatprep.subr.mxu0 0.0
        %2642 = vmatpush1.msra.mxu0 0.0
        %2643 = vmatprep.subr.mxu0 0.0
        %2644 = vmatpush1.msra.mxu0 0.0
        %2645 = vmatprep.subr.mxu0 0.0
        %2646 = vmatpush1.msra.mxu0 0.0
        %2647 = vmatprep.subr.mxu0 0.0
        %2648 = vmatpush1.msra.mxu0 0.0
        %2649 = vmatprep.subr.mxu0 0.0
        %2650 = vmatpush1.msra.mxu0 0.0
        %2651 = vmatprep.subr.mxu0 0.0
        %2652 = vmatpush1.msra.mxu0 0.0
        %2653 = vmatprep.subr.mxu0 0.0
        %2654 = vmatpush1.msra.mxu0 0.0
        %2655 = vmatprep.subr.mxu0 0.0
        %2656 = vmatpush1.msra.mxu0 0.0
        %2657 = vmatprep.subr.mxu0 0.0
        %2658 = vmatpush1.msra.mxu0 0.0
        %2659 = vmatprep.subr.mxu0 0.0
        %2660 = vmatpush1.msra.mxu0 0.0
        %2661 = vmatprep.subr.mxu0 0.0
        %2662 = vmatpush1.msra.mxu0 0.0
        %2663 = vmatprep.subr.mxu0 0.0
        %2664 = vmatpush1.msra.mxu0 0.0
        %2665 = vmatprep.subr.mxu0 0.0
        %2666 = vmatpush1.msra.mxu0 0.0
        %2667 = vmatprep.subr.mxu0 0.0
        %2668 = vmatpush1.msra.mxu0 0.0
        %2669 = vmatprep.subr.mxu0 0.0
        %2670 = vmatpush1.msra.mxu0 0.0
        %2671 = vmatprep.subr.mxu0 0.0
        %2672 = vmatpush1.msra.mxu0 0.0
        %2673 = vmatprep.mubr.f32.mxu0 0.0
        %v2674 = vand.u32 %v2270, 4294901760
        %2675 = vmatmul.mubr.f32.gmra.mrb[0].mxu0 %v2674
        %v2676 = vpop.f32.mrb[0].mxu0
        %v2677 = vadd.f32 %v2595, %v2676
        %v2678 = vpop.f32.mrb[0].mxu0
        %2679 = vmatprep.mubr.f32.mxu0 0.0
        %v2680 = vand.u32 %v2273, 4294901760
        %2681 = vmatmul.mubr.f32.gmra.mrb[0].mxu0 %v2680
        %v2682 = vpop.f32.mrb[0].mxu0
        %v2683 = vadd.f32 %v2603, %v2682
        %v2684 = vpop.f32.mrb[0].mxu0
        %2685 = vdwg.mxu0
        %2686 = vmatprep.subr.mxu0 0.0
        %v2687 = vand.u32 %v2265, 4294901760
        %2688 = vmatpush1.msra.mxu0 %v2687
        %2689 = vmatprep.subr.mxu0 0.0
        %2690 = vmatpush1.msra.mxu0 0.0
        %2691 = vmatprep.subr.mxu0 0.0
        %2692 = vmatpush1.msra.mxu0 0.0
        %2693 = vmatprep.subr.mxu0 0.0
        %2694 = vmatpush1.msra.mxu0 0.0
        %2695 = vmatprep.subr.mxu0 0.0
        %2696 = vmatpush1.msra.mxu0 0.0
        %2697 = vmatprep.subr.mxu0 0.0
        %2698 = vmatpush1.msra.mxu0 0.0
        %2699 = vmatprep.subr.mxu0 0.0
        %2700 = vmatpush1.msra.mxu0 0.0
        %2701 = vmatprep.subr.mxu0 0.0
        %2702 = vmatpush1.msra.mxu0 0.0
        %2703 = vmatprep.subr.mxu0 0.0
        %2704 = vmatpush1.msra.mxu0 0.0
        %2705 = vmatprep.subr.mxu0 0.0
        %2706 = vmatpush1.msra.mxu0 0.0
        %2707 = vmatprep.subr.mxu0 0.0
        %2708 = vmatpush1.msra.mxu0 0.0
        %2709 = vmatprep.subr.mxu0 0.0
        %2710 = vmatpush1.msra.mxu0 0.0
        %2711 = vmatprep.subr.mxu0 0.0
        %2712 = vmatpush1.msra.mxu0 0.0
        %2713 = vmatprep.subr.mxu0 0.0
        %2714 = vmatpush1.msra.mxu0 0.0
        %2715 = vmatprep.subr.mxu0 0.0
        %2716 = vmatpush1.msra.mxu0 0.0
        %2717 = vmatprep.subr.mxu0 0.0
        %2718 = vmatpush1.msra.mxu0 0.0
        %2719 = vmatprep.subr.mxu0 0.0
        %2720 = vmatpush1.msra.mxu0 0.0
        %2721 = vmatprep.subr.mxu0 0.0
        %2722 = vmatpush1.msra.mxu0 0.0
        %2723 = vmatprep.subr.mxu0 0.0
        %2724 = vmatpush1.msra.mxu0 0.0
        %2725 = vmatprep.subr.mxu0 0.0
        %2726 = vmatpush1.msra.mxu0 0.0
        %2727 = vmatprep.subr.mxu0 0.0
        %2728 = vmatpush1.msra.mxu0 0.0
        %2729 = vmatprep.subr.mxu0 0.0
        %2730 = vmatpush1.msra.mxu0 0.0
        %2731 = vmatprep.subr.mxu0 0.0
        %2732 = vmatpush1.msra.mxu0 0.0
        %2733 = vmatprep.subr.mxu0 0.0
        %2734 = vmatpush1.msra.mxu0 0.0
        %2735 = vmatprep.subr.mxu0 0.0
        %2736 = vmatpush1.msra.mxu0 0.0
        %2737 = vmatprep.subr.mxu0 0.0
        %2738 = vmatpush1.msra.mxu0 0.0
        %2739 = vmatprep.subr.mxu0 0.0
        %2740 = vmatpush1.msra.mxu0 0.0
        %2741 = vmatprep.subr.mxu0 0.0
        %2742 = vmatpush1.msra.mxu0 0.0
        %2743 = vmatprep.subr.mxu0 0.0
        %2744 = vmatpush1.msra.mxu0 0.0
        %2745 = vmatprep.subr.mxu0 0.0
        %2746 = vmatpush1.msra.mxu0 0.0
        %2747 = vmatprep.subr.mxu0 0.0
        %2748 = vmatpush1.msra.mxu0 0.0
        %2749 = vmatprep.subr.mxu0 0.0
        %2750 = vmatpush1.msra.mxu0 0.0
        %2751 = vmatprep.mubr.f32.mxu0 0.0
        %v2752 = vand.u32 %v2270, 4294901760
        %2753 = vmatmul.mubr.f32.gmra.mrb[0].mxu0 %v2752
        %v2754 = vpop.f32.mrb[0].mxu0
        %v2755 = vadd.f32 %v2677, %v2754
        %v2756 = vpop.f32.mrb[0].mxu0
        %2757 = vmatprep.mubr.f32.mxu0 0.0
        %v2758 = vand.u32 %v2273, 4294901760
        %2759 = vmatmul.mubr.f32.gmra.mrb[0].mxu0 %v2758
        %v2760 = vpop.f32.mrb[0].mxu0
        %v2761 = vadd.f32 %v2683, %v2760
        %v2762 = vpop.f32.mrb[0].mxu0
        %2763 = vdwg.mxu0
        %v2764 = vadd.f32 %v2253, %v2755
        %v2765 = vadd.f32 %v2260, %v2761
        %2766 = vst.msk [vmem:[%s294] sm:$0xff] %vm338, %v2764
        %2767 = vst.msk [vmem:[%s294 + $0x8] sm:$0xff] %vm338, %v2765
        %s2768 = sand.u32 %s168, 1
        %s2769 = scalar_lea.sflag [#allocation9], %s2768
        %s2770 = sand.u32 %s168, 1
        %s2771 = smul.addr %s2770, 16
        %s2772 = scalar_lea.vmem [#allocation12], %s2771
        // Predicated region
        $region53: #{tpu_custom_call.1} parent=43 // pred_check
          %p2773 = pneg %p178
        $region54: #{tpu_custom_call.1} parent=43 // pred_check_branch
          %2775 = sbr.rel (%p2773) target = $region56
        $region55: #{tpu_custom_call.1} parent=43 // pred_region
          %s2777 = ssub.s32 256, 256
          %2778 = vsyncadd %s2769, %s2777
          %s2779 = smul.addr %s24, 2
          %s2780 = smul.addr %s2779, 128
          %s2781 = scalar_lea.hbm %s6, %s2780
          %s2782 = sshll.u32 %s2772, 4
          %s2783 = int_to_ptr.vmem [resolvable:$true] %s2782
          %2788 = dma.vmem_to_hbm [thread:$0]  %s2783, 256, %s2781, %s2769, 128, 128, 8
        $region56: #{tpu_custom_call.1} parent=43 // pred_fallthru
          _
      $region44: #{tpu_custom_call.1} parent=5 // pred_fallthru
        _
      %p2789 = scmp.le.s32.totalorder 2, %s19
      // Predicated region
      $region57: #{tpu_custom_call.1} parent=5 // pred_check
        %p2790 = pneg %p2789
      $region58: #{tpu_custom_call.1} parent=5 // pred_check_branch
        %2792 = sbr.rel (%p2790) target = $region60
      $region59: #{tpu_custom_call.1} parent=5 // pred_region
        %s2793 = ssub.s32 %s19, 2
        // Predicated region
        $region61: #{tpu_custom_call.1} parent=59 // pred_check
          %p2794 = pneg %p184
        $region62: #{tpu_custom_call.1} parent=59 // pred_check_branch
          %2796 = sbr.rel (%p2794) target = $region64
        $region63: #{tpu_custom_call.1} parent=59 // pred_region
          %s2797 = sand.u32 %s169, 1
          %s2798 = scalar_lea.sflag [#allocation9], %s2797
          %s2799 = sand.u32 %s169, 1
          %s2800 = smul.addr %s2799, 16
          %s2801 = scalar_lea.vmem [#allocation12], %s2800
          %2802 = dma.done %s2798, 256
        $region64: #{tpu_custom_call.1} parent=59 // pred_fallthru
          _
      $region60: #{tpu_custom_call.1} parent=5 // pred_fallthru
        _
    $region6: #{tpu_custom_call.1} parent=1 // loop_footer
      %s23 = sadd.s32 1, %s19
    $region7: #{tpu_custom_call.1} parent=1 // loop_footer_branch
      %18 = sbr.rel target = $region3
    $region8: #{tpu_custom_call.1} parent=1 // loop_exit
      _
    %2803 = vsyncpa [#allocation8], 1
    %s2804 = scalar_lea.sflag [#allocation8], 1
    %2805 = vsyncpa %s2804, 1
    %2806 = vsyncpa [#allocation11], 1
    %2807 = vsyncpa [#allocation9], 1
    %s2808 = scalar_lea.sflag [#allocation9], 1
    %2809 = vsyncpa %s2808, 1

</llo_original>
